<compile_context>
chip_gen: v7x
topology: tpu7x:2x2x1
jax: 0.10.0
libtpu: 0.0.40
codegen_flags: <defaults>
</compile_context>

<pallas_src>
import jax
import jax.numpy as jnp
from jax.experimental import pallas as pl
from jax.experimental.pallas import tpu as pltpu


IN_DIM = 784
HID1_DIM = 1024
HID2_DIM = 512
OUT_DIM = 10
OUT_PAD = 128      # lane-dense output; sliced back to 10 in the wrapper


def mlp_kernel(x_ref, w1_ref, b1_ref, w2_ref, b2_ref, w3_ref, b3_ref, o_ref):
    # Layer 1: Linear(784->1024) + ReLU   (Dropout is identity at inference)
    h1 = jnp.maximum(
        jnp.dot(x_ref[...], w1_ref[...], preferred_element_type=jnp.float32) + b1_ref[...],
        0.0,
    ).astype(jnp.bfloat16)

    # Layer 2: Linear(1024->512) + ReLU   (Dropout is identity at inference)
    h2 = jnp.maximum(
        jnp.dot(h1, w2_ref[...], preferred_element_type=jnp.float32) + b2_ref[...],
        0.0,
    ).astype(jnp.bfloat16)

    # Layer 3: Linear(512->10), output zero-padded to 128 lanes
    out = jnp.dot(h2, w3_ref[...], preferred_element_type=jnp.float32)
    o_ref[...] = out + b3_ref[...]


def prepare_params(params):
    """One-time packing: cast weights to bf16, pad N 10->128; biases stay f32."""
    w1, b1, w2, b2, w3, b3 = params
    w1p = w1.astype(jnp.bfloat16)                                  # (784, 1024)
    w2p = w2.astype(jnp.bfloat16)                                  # (1024, 512)
    w3p = (jnp.zeros((HID2_DIM, OUT_PAD), jnp.float32)
           .at[:, :OUT_DIM].set(w3)).astype(jnp.bfloat16)          # (512, 128)
    b1p = b1.reshape(1, HID1_DIM).astype(jnp.float32)
    b2p = b2.reshape(1, HID2_DIM).astype(jnp.float32)
    b3p = (jnp.zeros((1, OUT_PAD), jnp.float32)
           .at[:, :OUT_DIM].set(b3.reshape(1, OUT_DIM)))
    return (w1p, b1p, w2p, b2p, w3p, b3p)


def _round_up(n, m):
    return ((n + m - 1) // m) * m


def _tpu_caps():
    """(max batch tile, tensorcores per chip) by TPU generation; conservative fallback."""
    try:
        kind = jax.devices()[0].device_kind.lower()
    except Exception:
        return 256, 1
    if "v7" in kind:
        return 512, 2          # 64 MiB VMEM/TC; 2 TCs -> keep grid >= 2
    if "v6" in kind:
        return 512, 1          # 32 MiB default scoped VMEM -> bigger tiles pay off
    return 256, 1              # v5e (16 MiB default scoped VMEM) / unknown


def _choose_tm(batch):
    tm_max, n_cores = _tpu_caps()
    tm = min(tm_max, max(16, _round_up(batch, 16)))    # multiple of 16 (bf16 sublane pack)
    if n_cores > 1 and batch >= 32:
        # Ensure at least n_cores grid steps so the "parallel" axis feeds every TensorCore.
        per_core = _round_up(-(-batch // n_cores), 16)
        tm = max(16, min(tm, per_core))
    return tm


def _const_spec(shape):
    """BlockSpec for a grid-invariant (VMEM-resident) operand: single-buffered."""
    return pl.BlockSpec(shape, lambda i: (0,) * len(shape), pipeline_mode=pl.Buffered(1))


def mlp_forward(x, packed_params):
    """x: [..., 784] (or any shape whose trailing dims flatten to 784). Returns [batch, 10]."""
    w1p, b1p, w2p, b2p, w3p, b3p = packed_params
    x2d = x.reshape(-1, IN_DIM)
    batch = x2d.shape[0]

    tm = _choose_tm(batch)
    padded_batch = _round_up(batch, tm)

    # Stream x as bf16 (halves input DMA).  Only materialize a padded copy if the batch
    # is not already a multiple of the tile.
    xb = x2d.astype(jnp.bfloat16)
    if padded_batch != batch:
        xb = jnp.zeros((padded_batch, IN_DIM), jnp.bfloat16).at[:batch, :].set(xb)

    grid = (padded_batch // tm,)

    flops = 2 * padded_batch * (IN_DIM * HID1_DIM + HID1_DIM * HID2_DIM + HID2_DIM * OUT_DIM)
    bytes_accessed = (
        padded_batch * IN_DIM * 2                       # x (bf16)
        + (w1p.size + w2p.size + w3p.size) * 2          # weights (bf16)
        + (b1p.size + b2p.size + b3p.size) * 4          # biases (f32)
        + padded_batch * OUT_PAD * 4                    # output (f32)
    )

    out_padded = pl.pallas_call(
        mlp_kernel,
        out_shape=jax.ShapeDtypeStruct((padded_batch, OUT_PAD), jnp.float32),
        grid=grid,
        in_specs=[
            pl.BlockSpec((tm, IN_DIM), lambda i: (i, 0)),   # x tile (streamed, bf16)
            _const_spec((IN_DIM, HID1_DIM)),                # w1 (VMEM-resident, single buffer)
            _const_spec((1, HID1_DIM)),                     # b1
            _const_spec((HID1_DIM, HID2_DIM)),              # w2
            _const_spec((1, HID2_DIM)),                     # b2
            _const_spec((HID2_DIM, OUT_PAD)),               # w3 (lane-padded)
            _const_spec((1, OUT_PAD)),                      # b3 (lane-padded)
        ],
        out_specs=pl.BlockSpec((tm, OUT_PAD), lambda i: (i, 0)),
        compiler_params=pltpu.CompilerParams(
            dimension_semantics=("parallel",),
        ),
        cost_estimate=pl.CostEstimate(
            flops=flops, transcendentals=0, bytes_accessed=bytes_accessed),
    )(xb, w1p, b1p, w2p, b2p, w3p, b3p)

    return out_padded[:batch, :OUT_DIM]


def init_params(key):
    """Deterministic init mimicking nn.Linear's U(-1/sqrt(fan_in), 1/sqrt(fan_in))."""
    ks = jax.random.split(key, 6)

    def lin(kw, kb, fan_in, fan_out):
        bound = 1.0 / jnp.sqrt(jnp.float32(fan_in))
        w = jax.random.uniform(kw, (fan_in, fan_out), jnp.float32, -bound, bound)
        b = jax.random.uniform(kb, (1, fan_out), jnp.float32, -bound, bound)
        return w, b

    w1, b1 = lin(ks[0], ks[1], IN_DIM, HID1_DIM)
    w2, b2 = lin(ks[2], ks[3], HID1_DIM, HID2_DIM)
    w3, b3 = lin(ks[4], ks[5], HID2_DIM, OUT_DIM)
    return (w1, b1, w2, b2, w3, b3)


if __name__ == "__main__":
    key = jax.random.PRNGKey(0)
    k_param, k_x = jax.random.split(key)

    params = init_params(k_param)
    packed = prepare_params(params)

    # Small batch of MNIST-like inputs: (8, 1, 28, 28) -> flattened to (8, 784) by forward.
    x = jax.random.normal(k_x, (8, 1, 28, 28), jnp.float32)

    out = mlp_forward(x, packed)
    out = jax.block_until_ready(out)
    assert out.shape == (8, OUT_DIM)

    # Reference 1: bf16-matched (same rounding as the kernel) -> tight tolerance.
    w1, b1, w2, b2, w3, b3 = params
    bf = jnp.bfloat16
    xr = x.reshape(-1, IN_DIM)
    ref = jnp.maximum(
        jnp.dot(xr.astype(bf), w1.astype(bf), preferred_element_type=jnp.float32) + b1, 0.0)
    ref = jnp.maximum(
        jnp.dot(ref.astype(bf), w2.astype(bf), preferred_element_type=jnp.float32) + b2, 0.0)
    ref = jnp.dot(ref.astype(bf), w3.astype(bf), preferred_element_type=jnp.float32) + b3
    assert jnp.allclose(out, ref, atol=3e-3, rtol=3e-3), float(jnp.max(jnp.abs(out - ref)))

    # Reference 2: full-f32 (functional correctness of the module) -> loose tolerance for bf16.
    ref32 = jnp.maximum(xr @ w1 + b1, 0.0)
    ref32 = jnp.maximum(ref32 @ w2 + b2, 0.0)
    ref32 = ref32 @ w3 + b3
    assert jnp.allclose(out, ref32, atol=1e-1, rtol=1e-1), float(jnp.max(jnp.abs(out - ref32)))

    print("KERNEL_OK")
</pallas_src>

<mosaic_0001>
module attributes {stable_mosaic.version = 11 : i64} {
  func.func @mlp_kernel(%arg0: i32, %arg1: memref<16x784xbf16, #tpu.memory_space<vmem>>, %arg2: memref<784x1024xbf16, #tpu.memory_space<vmem>>, %arg3: memref<1x1024xf32, #tpu.memory_space<vmem>>, %arg4: memref<1024x512xbf16, #tpu.memory_space<vmem>>, %arg5: memref<1x512xf32, #tpu.memory_space<vmem>>, %arg6: memref<512x128xbf16, #tpu.memory_space<vmem>>, %arg7: memref<1x128xf32, #tpu.memory_space<vmem>>, %arg8: memref<16x128xf32, #tpu.memory_space<vmem>>) attributes {dimension_semantics = [#tpu.dimension_semantics<parallel>], iteration_bounds = array<i64: 1>, scalar_prefetch = 0 : i64, scratch_operands = 0 : i64, tpu.core_type = #tpu.core_type<tc>, window_params = [{transform_indices = @transform_0, window_bounds = array<i64: 16, 784>}, {pipeline_mode = #tpu.pipeline_mode<synchronous>, transform_indices = @transform_1, window_bounds = array<i64: 784, 1024>}, {pipeline_mode = #tpu.pipeline_mode<synchronous>, transform_indices = @transform_2, window_bounds = array<i64: 1, 1024>}, {pipeline_mode = #tpu.pipeline_mode<synchronous>, transform_indices = @transform_3, window_bounds = array<i64: 1024, 512>}, {pipeline_mode = #tpu.pipeline_mode<synchronous>, transform_indices = @transform_4, window_bounds = array<i64: 1, 512>}, {pipeline_mode = #tpu.pipeline_mode<synchronous>, transform_indices = @transform_5, window_bounds = array<i64: 512, 128>}, {pipeline_mode = #tpu.pipeline_mode<synchronous>, transform_indices = @transform_6, window_bounds = array<i64: 1, 128>}, {transform_indices = @transform_7, window_bounds = array<i64: 16, 128>}]} {
    %c0 = arith.constant 0 : index
    %c0_0 = arith.constant 0 : index
    %0 = vector.load %arg1[%c0, %c0_0] : memref<16x784xbf16, #tpu.memory_space<vmem>>, vector<16x784xbf16>
    %c0_1 = arith.constant 0 : index
    %c0_2 = arith.constant 0 : index
    %1 = vector.load %arg2[%c0_1, %c0_2] : memref<784x1024xbf16, #tpu.memory_space<vmem>>, vector<784x1024xbf16>
    %cst = arith.constant dense<0.000000e+00> : vector<16x1024xf32>
    %2 = tpu.matmul %0, %1, %cst {dimension_numbers = #tpu.dot_dimension_numbers<[1], [0], [0], [1], [0, 0, 1, 1], [], []>} : vector<16x784xbf16>, vector<784x1024xbf16>, vector<16x1024xf32> -> vector<16x1024xf32>
    %c0_3 = arith.constant 0 : index
    %c0_4 = arith.constant 0 : index
    %3 = vector.load %arg3[%c0_3, %c0_4] : memref<1x1024xf32, #tpu.memory_space<vmem>>, vector<1x1024xf32>
    %4 = vector.broadcast %3 : vector<1x1024xf32> to vector<16x1024xf32>
    %5 = arith.addf %2, %4 : vector<16x1024xf32>
    %cst_5 = arith.constant 0.000000e+00 : f32
    %6 = vector.broadcast %cst_5 : f32 to vector<16x1024xf32>
    %7 = arith.maximumf %5, %6 : vector<16x1024xf32>
    %8 = arith.truncf %7 : vector<16x1024xf32> to vector<16x1024xbf16>
    %c0_6 = arith.constant 0 : index
    %c0_7 = arith.constant 0 : index
    %9 = vector.load %arg4[%c0_6, %c0_7] : memref<1024x512xbf16, #tpu.memory_space<vmem>>, vector<1024x512xbf16>
    %cst_8 = arith.constant dense<0.000000e+00> : vector<16x512xf32>
    %10 = tpu.matmul %8, %9, %cst_8 {dimension_numbers = #tpu.dot_dimension_numbers<[1], [0], [0], [1], [0, 0, 1, 1], [], []>} : vector<16x1024xbf16>, vector<1024x512xbf16>, vector<16x512xf32> -> vector<16x512xf32>
    %c0_9 = arith.constant 0 : index
    %c0_10 = arith.constant 0 : index
    %11 = vector.load %arg5[%c0_9, %c0_10] : memref<1x512xf32, #tpu.memory_space<vmem>>, vector<1x512xf32>
    %12 = vector.broadcast %11 : vector<1x512xf32> to vector<16x512xf32>
    %13 = arith.addf %10, %12 : vector<16x512xf32>
    %cst_11 = arith.constant 0.000000e+00 : f32
    %14 = vector.broadcast %cst_11 : f32 to vector<16x512xf32>
    %15 = arith.maximumf %13, %14 : vector<16x512xf32>
    %16 = arith.truncf %15 : vector<16x512xf32> to vector<16x512xbf16>
    %c0_12 = arith.constant 0 : index
    %c0_13 = arith.constant 0 : index
    %17 = vector.load %arg6[%c0_12, %c0_13] : memref<512x128xbf16, #tpu.memory_space<vmem>>, vector<512x128xbf16>
    %cst_14 = arith.constant dense<0.000000e+00> : vector<16x128xf32>
    %18 = tpu.matmul %16, %17, %cst_14 {dimension_numbers = #tpu.dot_dimension_numbers<[1], [0], [0], [1], [0, 0, 1, 1], [], []>} : vector<16x512xbf16>, vector<512x128xbf16>, vector<16x128xf32> -> vector<16x128xf32>
    %c0_15 = arith.constant 0 : index
    %c0_16 = arith.constant 0 : index
    %19 = vector.load %arg7[%c0_15, %c0_16] : memref<1x128xf32, #tpu.memory_space<vmem>>, vector<1x128xf32>
    %20 = vector.broadcast %19 : vector<1x128xf32> to vector<16x128xf32>
    %21 = arith.addf %18, %20 : vector<16x128xf32>
    %c0_17 = arith.constant 0 : index
    %c0_18 = arith.constant 0 : index
    %22 = vector.load %arg8[%c0_17, %c0_18] : memref<16x128xf32, #tpu.memory_space<vmem>>, vector<16x128xf32>
    tpu.vector_store %arg8[%c0_17, %c0_18], %21 {strides = array<i32>} : memref<16x128xf32, #tpu.memory_space<vmem>>, vector<16x128xf32>,
    return
  }
  func.func @transform_0(%arg0: i32) -> (i32, i32) {
    %c0_i32 = arith.constant 0 : i32
    %c0_i32_0 = arith.constant 0 : i32
    return %arg0, %c0_i32 : i32, i32
  }
  func.func @transform_1(%arg0: i32) -> (i32, i32) {
    %c0_i32 = arith.constant 0 : i32
    %c0_i32_0 = arith.constant 0 : i32
    %c0_i32_1 = arith.constant 0 : i32
    return %c0_i32, %c0_i32_0 : i32, i32
  }
  func.func @transform_2(%arg0: i32) -> (i32, i32) {
    %c0_i32 = arith.constant 0 : i32
    %c0_i32_0 = arith.constant 0 : i32
    %c0_i32_1 = arith.constant 0 : i32
    return %c0_i32, %c0_i32_0 : i32, i32
  }
  func.func @transform_3(%arg0: i32) -> (i32, i32) {
    %c0_i32 = arith.constant 0 : i32
    %c0_i32_0 = arith.constant 0 : i32
    %c0_i32_1 = arith.constant 0 : i32
    return %c0_i32, %c0_i32_0 : i32, i32
  }
  func.func @transform_4(%arg0: i32) -> (i32, i32) {
    %c0_i32 = arith.constant 0 : i32
    %c0_i32_0 = arith.constant 0 : i32
    %c0_i32_1 = arith.constant 0 : i32
    return %c0_i32, %c0_i32_0 : i32, i32
  }
  func.func @transform_5(%arg0: i32) -> (i32, i32) {
    %c0_i32 = arith.constant 0 : i32
    %c0_i32_0 = arith.constant 0 : i32
    %c0_i32_1 = arith.constant 0 : i32
    return %c0_i32, %c0_i32_0 : i32, i32
  }
  func.func @transform_6(%arg0: i32) -> (i32, i32) {
    %c0_i32 = arith.constant 0 : i32
    %c0_i32_0 = arith.constant 0 : i32
    %c0_i32_1 = arith.constant 0 : i32
    return %c0_i32, %c0_i32_0 : i32, i32
  }
  func.func @transform_7(%arg0: i32) -> (i32, i32) {
    %c0_i32 = arith.constant 0 : i32
    %c0_i32_0 = arith.constant 0 : i32
    return %arg0, %c0_i32 : i32, i32
  }
}

</mosaic_0001>

<llo_original>
// kernel: tpu_custom_call.1
$region0: #{tpu_custom_call.1}
  #allocation0 [shape = 'u32[]', space=smem, size = 0x4, offset = 0x4, fixed_abs, tag = 'smem constant byte address 0x4 - core index']
  #allocation1 [shape = 'u32[144,128]{1,0:T(1,128)}', space=vmem, size = 0x12000, scoped, tag = 'internal scratch']
  %s0 = inlined_call_operand.hbm [shape: bf16[16,784], index: 0, kind: input, shape index: {}]
  %s1 = inlined_call_operand.hbm [shape: bf16[784,1024], index: 1, kind: input, shape index: {}]
  %s2 = inlined_call_operand.hbm [shape: f32[1,1024], index: 2, kind: input, shape index: {}]
  %s3 = inlined_call_operand.hbm [shape: bf16[1024,512], index: 3, kind: input, shape index: {}]
  %s4 = inlined_call_operand.hbm [shape: f32[1,512], index: 4, kind: input, shape index: {}]
  %s5 = inlined_call_operand.hbm [shape: bf16[512,128], index: 5, kind: input, shape index: {}]
  %s6 = inlined_call_operand.hbm [shape: f32[1,128], index: 6, kind: input, shape index: {}]
  %s7 = inlined_call_operand.hbm [shape: f32[16,128], index: 7, kind: output, shape index: {}]
  %s8 = sld [smem:[#allocation0]]
  $region66: #{tpu_custom_call.1} parent=0
    _
  %s10 = ssub.s32 1, %s8
  %s11 = scalar_select 0, %s10, %s8
  $region1: #{tpu_custom_call.1} parent=0
    #allocation2 [shape = 'u8[28672]{0}', space=vmem, size = 0x7000, scoped, tag = 'input window, operand 0, single buffered']
    #allocation3 [shape = 's32[1]{0}', space=sflag, size = 0x4, scoped, tag = 'scoped memory for tpu_custom_call.1']
    #allocation4 [shape = 's32[1]{0}', space=sflag, size = 0x4, scoped, tag = 'scoped memory for tpu_custom_call.1']
    #allocation5 [shape = 'u8[1605632]{0}', space=vmem, size = 0x188000, scoped, tag = 'input window, operand 1, single buffered']
    #allocation6 [shape = 's32[1]{0}', space=sflag, size = 0x4, scoped, tag = 'scoped memory for tpu_custom_call.1']
    #allocation7 [shape = 'u8[4096]{0}', space=vmem, size = 0x1000, scoped, tag = 'input window, operand 2, single buffered']
    #allocation8 [shape = 'u8[1048576]{0}', space=vmem, size = 0x100000, scoped, tag = 'input window, operand 3, single buffered']
    #allocation9 [shape = 's32[1]{0}', space=sflag, size = 0x4, scoped, tag = 'scoped memory for tpu_custom_call.1']
    #allocation10 [shape = 'u8[2048]{0}', space=vmem, size = 0x800, scoped, tag = 'input window, operand 4, single buffered']
    #allocation11 [shape = 'u8[131072]{0}', space=vmem, size = 0x20000, scoped, tag = 'input window, operand 5, single buffered']
    #allocation12 [shape = 's32[1]{0}', space=sflag, size = 0x4, scoped, tag = 'scoped memory for tpu_custom_call.1']
    #allocation13 [shape = 'u8[512]{0}', space=vmem, size = 0x400, scoped, tag = 'input window, operand 6, single buffered']
    #allocation14 [shape = 'u8[8192]{0}', space=vmem, size = 0x2000, scoped, tag = 'output window, operand 0, single buffered']
    %12 = vsyncpa [#allocation3], 0
    %13 = vsyncpa [#allocation6], 0
    %14 = vsyncpa [#allocation9], 0
    %15 = vsyncpa [#allocation12], 0
    %16 = vsyncpa [#allocation4], 0
    // Predicated region
    $region2: #{tpu_custom_call.1} parent=1 // pred_check
      _
    $region3: #{tpu_custom_call.1} parent=1 // pred_check_branch
      %18 = sbr.rel (0) target = $region5
    $region4: #{tpu_custom_call.1} parent=1 // pred_region
      %s20 = ssub.s32 896, 896
      %21 = vsyncadd [#allocation3], %s20
      %s22 = sshll.u32 [#allocation2], 4
      %s23 = int_to_ptr.vmem [resolvable:$true] %s22
      %28 = dma.hbm_to_vmem [thread:$0]  %s0, 896, %s23, [#allocation3], 448, 448, 28
    $region5: #{tpu_custom_call.1} parent=1 // pred_fallthru
      _
    // Predicated region
    $region6: #{tpu_custom_call.1} parent=1 // pred_check
      _
    $region7: #{tpu_custom_call.1} parent=1 // pred_check_branch
      %30 = sbr.rel (0) target = $region9
    $region8: #{tpu_custom_call.1} parent=1 // pred_region
      %s32 = ssub.s32 50176, 50176
      %33 = vsyncadd [#allocation6], %s32
      %s34 = sshll.u32 [#allocation5], 4
      %s35 = int_to_ptr.vmem [resolvable:$true] %s34
      %40 = dma.hbm_to_vmem [thread:$0]  %s1, 50176, %s35, [#allocation6], 512, 512, 32
    $region9: #{tpu_custom_call.1} parent=1 // pred_fallthru
      _
    // Predicated region
    $region10: #{tpu_custom_call.1} parent=1 // pred_check
      _
    $region11: #{tpu_custom_call.1} parent=1 // pred_check_branch
      %42 = sbr.rel (0) target = $region13
    $region12: #{tpu_custom_call.1} parent=1 // pred_region
      %s44 = ssub.s32 128, 128
      %45 = vsyncadd [#allocation6], %s44
      %s47 = sshll.u32 [#allocation7], 4
      %s48 = int_to_ptr.vmem [resolvable:$true] %s47
      %50 = dma.hbm_to_vmem [thread:$0]  %s2, 128, %s48, [#allocation6]
    $region13: #{tpu_custom_call.1} parent=1 // pred_fallthru
      _
    // Predicated region
    $region14: #{tpu_custom_call.1} parent=1 // pred_check
      _
    $region15: #{tpu_custom_call.1} parent=1 // pred_check_branch
      %52 = sbr.rel (0) target = $region17
    $region16: #{tpu_custom_call.1} parent=1 // pred_region
      %s54 = ssub.s32 32768, 32768
      %55 = vsyncadd [#allocation9], %s54
      %s56 = sshll.u32 [#allocation8], 4
      %s57 = int_to_ptr.vmem [resolvable:$true] %s56
      %62 = dma.hbm_to_vmem [thread:$0]  %s3, 32768, %s57, [#allocation9], 256, 256, 16
    $region17: #{tpu_custom_call.1} parent=1 // pred_fallthru
      _
    // Predicated region
    $region18: #{tpu_custom_call.1} parent=1 // pred_check
      _
    $region19: #{tpu_custom_call.1} parent=1 // pred_check_branch
      %64 = sbr.rel (0) target = $region21
    $region20: #{tpu_custom_call.1} parent=1 // pred_region
      %s66 = ssub.s32 64, 64
      %67 = vsyncadd [#allocation9], %s66
      %s69 = sshll.u32 [#allocation10], 4
      %s70 = int_to_ptr.vmem [resolvable:$true] %s69
      %72 = dma.hbm_to_vmem [thread:$0]  %s4, 64, %s70, [#allocation9]
    $region21: #{tpu_custom_call.1} parent=1 // pred_fallthru
      _
    // Predicated region
    $region22: #{tpu_custom_call.1} parent=1 // pred_check
      _
    $region23: #{tpu_custom_call.1} parent=1 // pred_check_branch
      %74 = sbr.rel (0) target = $region25
    $region24: #{tpu_custom_call.1} parent=1 // pred_region
      %s76 = ssub.s32 4096, 4096
      %77 = vsyncadd [#allocation12], %s76
      %s78 = sshll.u32 [#allocation11], 4
      %s79 = int_to_ptr.vmem [resolvable:$true] %s78
      %84 = dma.hbm_to_vmem [thread:$0]  %s5, 4096, %s79, [#allocation12], 64, 64, 4
    $region25: #{tpu_custom_call.1} parent=1 // pred_fallthru
      _
    // Predicated region
    $region26: #{tpu_custom_call.1} parent=1 // pred_check
      _
    $region27: #{tpu_custom_call.1} parent=1 // pred_check_branch
      %86 = sbr.rel (0) target = $region29
    $region28: #{tpu_custom_call.1} parent=1 // pred_region
      %s88 = ssub.s32 16, 16
      %89 = vsyncadd [#allocation12], %s88
      %s91 = sshll.u32 [#allocation13], 4
      %s92 = int_to_ptr.vmem [resolvable:$true] %s91
      %94 = dma.hbm_to_vmem [thread:$0]  %s6, 16, %s92, [#allocation12]
    $region29: #{tpu_custom_call.1} parent=1 // pred_fallthru
      _
    // Predicated region
    $region30: #{tpu_custom_call.1} parent=1 // pred_check
      _
    $region31: #{tpu_custom_call.1} parent=1 // pred_check_branch
      %96 = sbr.rel (0) target = $region33
    $region32: #{tpu_custom_call.1} parent=1 // pred_region
      %97 = dma.done [#allocation3], 896
    $region33: #{tpu_custom_call.1} parent=1 // pred_fallthru
      _
    // Predicated region
    $region34: #{tpu_custom_call.1} parent=1 // pred_check
      _
    $region35: #{tpu_custom_call.1} parent=1 // pred_check_branch
      %99 = sbr.rel (0) target = $region37
    $region36: #{tpu_custom_call.1} parent=1 // pred_region
      %100 = dma.done [#allocation6], 50176
    $region37: #{tpu_custom_call.1} parent=1 // pred_fallthru
      _
    // Predicated region
    $region38: #{tpu_custom_call.1} parent=1 // pred_check
      _
    $region39: #{tpu_custom_call.1} parent=1 // pred_check_branch
      %102 = sbr.rel (0) target = $region41
    $region40: #{tpu_custom_call.1} parent=1 // pred_region
      %103 = dma.done [#allocation6], 128
    $region41: #{tpu_custom_call.1} parent=1 // pred_fallthru
      _
    // Predicated region
    $region42: #{tpu_custom_call.1} parent=1 // pred_check
      _
    $region43: #{tpu_custom_call.1} parent=1 // pred_check_branch
      %105 = sbr.rel (0) target = $region45
    $region44: #{tpu_custom_call.1} parent=1 // pred_region
      %106 = dma.done [#allocation9], 32768
    $region45: #{tpu_custom_call.1} parent=1 // pred_fallthru
      _
    // Predicated region
    $region46: #{tpu_custom_call.1} parent=1 // pred_check
      _
    $region47: #{tpu_custom_call.1} parent=1 // pred_check_branch
      %108 = sbr.rel (0) target = $region49
    $region48: #{tpu_custom_call.1} parent=1 // pred_region
      %109 = dma.done [#allocation9], 64
    $region49: #{tpu_custom_call.1} parent=1 // pred_fallthru
      _
    // Predicated region
    $region50: #{tpu_custom_call.1} parent=1 // pred_check
      _
    $region51: #{tpu_custom_call.1} parent=1 // pred_check_branch
      %111 = sbr.rel (0) target = $region53
    $region52: #{tpu_custom_call.1} parent=1 // pred_region
      %112 = dma.done [#allocation12], 4096
    $region53: #{tpu_custom_call.1} parent=1 // pred_fallthru
      _
    // Predicated region
    $region54: #{tpu_custom_call.1} parent=1 // pred_check
      _
    $region55: #{tpu_custom_call.1} parent=1 // pred_check_branch
      %114 = sbr.rel (0) target = $region57
    $region56: #{tpu_custom_call.1} parent=1 // pred_region
      %115 = dma.done [#allocation12], 16
    $region57: #{tpu_custom_call.1} parent=1 // pred_fallthru
      _
    %v117 = vld [vmem:[#allocation2] sm:$0xff]
    %v118 = vld [vmem:[#allocation2 + $0x8] sm:$0xff]
    %v119 = vld [vmem:[#allocation2 + $0x10] sm:$0xff]
    %v120 = vld [vmem:[#allocation2 + $0x18] sm:$0xf]
    %v121 = vld [vmem:[#allocation2 + $0x1c] sm:$0xff]
    %v122 = vld [vmem:[#allocation2 + $0x24] sm:$0xff]
    %v123 = vld [vmem:[#allocation2 + $0x2c] sm:$0xff]
    %v124 = vld [vmem:[#allocation2 + $0x34] sm:$0xf]
    %v125 = vld [vmem:[#allocation5] sm:$0xff]
    %v126 = vld [vmem:[#allocation5 + $0x8] sm:$0xff]
    %v127 = vld [vmem:[#allocation5 + $0x10] sm:$0xff]
    %v128 = vld [vmem:[#allocation5 + $0x18] sm:$0xff]
    %v129 = vld [vmem:[#allocation5 + $0x20] sm:$0xff]
    %v130 = vld [vmem:[#allocation5 + $0x28] sm:$0xff]
    %v131 = vld [vmem:[#allocation5 + $0x30] sm:$0xff]
    %v132 = vld [vmem:[#allocation5 + $0x38] sm:$0xff]
    %v133 = vld [vmem:[#allocation5 + $0x40] sm:$0xff]
    %v134 = vld [vmem:[#allocation5 + $0x48] sm:$0xff]
    %v135 = vld [vmem:[#allocation5 + $0x50] sm:$0xff]
    %v136 = vld [vmem:[#allocation5 + $0x58] sm:$0xff]
    %v137 = vld [vmem:[#allocation5 + $0x60] sm:$0xff]
    %v138 = vld [vmem:[#allocation5 + $0x68] sm:$0xff]
    %v139 = vld [vmem:[#allocation5 + $0x70] sm:$0xff]
    %v140 = vld [vmem:[#allocation5 + $0x78] sm:$0xff]
    %v141 = vld [vmem:[#allocation5 + $0x80] sm:$0xff]
    %v142 = vld [vmem:[#allocation5 + $0x88] sm:$0xff]
    %v143 = vld [vmem:[#allocation5 + $0x90] sm:$0xff]
    %v144 = vld [vmem:[#allocation5 + $0x98] sm:$0xff]
    %v145 = vld [vmem:[#allocation5 + $0xa0] sm:$0xff]
    %v146 = vld [vmem:[#allocation5 + $0xa8] sm:$0xff]
    %v147 = vld [vmem:[#allocation5 + $0xb0] sm:$0xff]
    %v148 = vld [vmem:[#allocation5 + $0xb8] sm:$0xff]
    %v149 = vld [vmem:[#allocation5 + $0xc0] sm:$0xff]
    %v150 = vld [vmem:[#allocation5 + $0xc8] sm:$0xff]
    %v151 = vld [vmem:[#allocation5 + $0xd0] sm:$0xff]
    %v152 = vld [vmem:[#allocation5 + $0xd8] sm:$0xff]
    %v153 = vld [vmem:[#allocation5 + $0xe0] sm:$0xff]
    %v154 = vld [vmem:[#allocation5 + $0xe8] sm:$0xff]
    %v155 = vld [vmem:[#allocation5 + $0xf0] sm:$0xff]
    %v156 = vld [vmem:[#allocation5 + $0xf8] sm:$0xff]
    %v157 = vld [vmem:[#allocation5 + $0x100] sm:$0xff]
    %v158 = vld [vmem:[#allocation5 + $0x108] sm:$0xff]
    %v159 = vld [vmem:[#allocation5 + $0x110] sm:$0xff]
    %v160 = vld [vmem:[#allocation5 + $0x118] sm:$0xff]
    %v161 = vld [vmem:[#allocation5 + $0x120] sm:$0xff]
    %v162 = vld [vmem:[#allocation5 + $0x128] sm:$0xff]
    %v163 = vld [vmem:[#allocation5 + $0x130] sm:$0xff]
    %v164 = vld [vmem:[#allocation5 + $0x138] sm:$0xff]
    %v165 = vld [vmem:[#allocation5 + $0x140] sm:$0xff]
    %v166 = vld [vmem:[#allocation5 + $0x148] sm:$0xff]
    %v167 = vld [vmem:[#allocation5 + $0x150] sm:$0xff]
    %v168 = vld [vmem:[#allocation5 + $0x158] sm:$0xff]
    %v169 = vld [vmem:[#allocation5 + $0x160] sm:$0xff]
    %v170 = vld [vmem:[#allocation5 + $0x168] sm:$0xff]
    %v171 = vld [vmem:[#allocation5 + $0x170] sm:$0xff]
    %v172 = vld [vmem:[#allocation5 + $0x178] sm:$0xff]
    %v173 = vld [vmem:[#allocation5 + $0x180] sm:$0xff]
    %v174 = vld [vmem:[#allocation5 + $0x188] sm:$0xff]
    %v175 = vld [vmem:[#allocation5 + $0x190] sm:$0xff]
    %v176 = vld [vmem:[#allocation5 + $0x198] sm:$0xff]
    %v177 = vld [vmem:[#allocation5 + $0x1a0] sm:$0xff]
    %v178 = vld [vmem:[#allocation5 + $0x1a8] sm:$0xff]
    %v179 = vld [vmem:[#allocation5 + $0x1b0] sm:$0xff]
    %v180 = vld [vmem:[#allocation5 + $0x1b8] sm:$0xff]
    %v181 = vld [vmem:[#allocation5 + $0x1c0] sm:$0xff]
    %v182 = vld [vmem:[#allocation5 + $0x1c8] sm:$0xff]
    %v183 = vld [vmem:[#allocation5 + $0x1d0] sm:$0xff]
    %v184 = vld [vmem:[#allocation5 + $0x1d8] sm:$0xff]
    %v185 = vld [vmem:[#allocation5 + $0x1e0] sm:$0xff]
    %v186 = vld [vmem:[#allocation5 + $0x1e8] sm:$0xff]
    %v187 = vld [vmem:[#allocation5 + $0x1f0] sm:$0xff]
    %v188 = vld [vmem:[#allocation5 + $0x1f8] sm:$0xff]
    %v189 = vld [vmem:[#allocation5 + $0x200] sm:$0xff]
    %v190 = vld [vmem:[#allocation5 + $0x208] sm:$0xff]
    %v191 = vld [vmem:[#allocation5 + $0x210] sm:$0xff]
    %v192 = vld [vmem:[#allocation5 + $0x218] sm:$0xff]
    %v193 = vld [vmem:[#allocation5 + $0x220] sm:$0xff]
    %v194 = vld [vmem:[#allocation5 + $0x228] sm:$0xff]
    %v195 = vld [vmem:[#allocation5 + $0x230] sm:$0xff]
    %v196 = vld [vmem:[#allocation5 + $0x238] sm:$0xff]
    %v197 = vld [vmem:[#allocation5 + $0x240] sm:$0xff]
    %v198 = vld [vmem:[#allocation5 + $0x248] sm:$0xff]
    %v199 = vld [vmem:[#allocation5 + $0x250] sm:$0xff]
    %v200 = vld [vmem:[#allocation5 + $0x258] sm:$0xff]
    %v201 = vld [vmem:[#allocation5 + $0x260] sm:$0xff]
    %v202 = vld [vmem:[#allocation5 + $0x268] sm:$0xff]
    %v203 = vld [vmem:[#allocation5 + $0x270] sm:$0xff]
    %v204 = vld [vmem:[#allocation5 + $0x278] sm:$0xff]
    %v205 = vld [vmem:[#allocation5 + $0x280] sm:$0xff]
    %v206 = vld [vmem:[#allocation5 + $0x288] sm:$0xff]
    %v207 = vld [vmem:[#allocation5 + $0x290] sm:$0xff]
    %v208 = vld [vmem:[#allocation5 + $0x298] sm:$0xff]
    %v209 = vld [vmem:[#allocation5 + $0x2a0] sm:$0xff]
    %v210 = vld [vmem:[#allocation5 + $0x2a8] sm:$0xff]
    %v211 = vld [vmem:[#allocation5 + $0x2b0] sm:$0xff]
    %v212 = vld [vmem:[#allocation5 + $0x2b8] sm:$0xff]
    %v213 = vld [vmem:[#allocation5 + $0x2c0] sm:$0xff]
    %v214 = vld [vmem:[#allocation5 + $0x2c8] sm:$0xff]
    %v215 = vld [vmem:[#allocation5 + $0x2d0] sm:$0xff]
    %v216 = vld [vmem:[#allocation5 + $0x2d8] sm:$0xff]
    %v217 = vld [vmem:[#allocation5 + $0x2e0] sm:$0xff]
    %v218 = vld [vmem:[#allocation5 + $0x2e8] sm:$0xff]
    %v219 = vld [vmem:[#allocation5 + $0x2f0] sm:$0xff]
    %v220 = vld [vmem:[#allocation5 + $0x2f8] sm:$0xff]
    %v221 = vld [vmem:[#allocation5 + $0x300] sm:$0xff]
    %v222 = vld [vmem:[#allocation5 + $0x308] sm:$0xff]
    %v223 = vld [vmem:[#allocation5 + $0x310] sm:$0xff]
    %v224 = vld [vmem:[#allocation5 + $0x318] sm:$0xff]
    %v225 = vld [vmem:[#allocation5 + $0x320] sm:$0xff]
    %v226 = vld [vmem:[#allocation5 + $0x328] sm:$0xff]
    %v227 = vld [vmem:[#allocation5 + $0x330] sm:$0xff]
    %v228 = vld [vmem:[#allocation5 + $0x338] sm:$0xff]
    %v229 = vld [vmem:[#allocation5 + $0x340] sm:$0xff]
    %v230 = vld [vmem:[#allocation5 + $0x348] sm:$0xff]
    %v231 = vld [vmem:[#allocation5 + $0x350] sm:$0xff]
    %v232 = vld [vmem:[#allocation5 + $0x358] sm:$0xff]
    %v233 = vld [vmem:[#allocation5 + $0x360] sm:$0xff]
    %v234 = vld [vmem:[#allocation5 + $0x368] sm:$0xff]
    %v235 = vld [vmem:[#allocation5 + $0x370] sm:$0xff]
    %v236 = vld [vmem:[#allocation5 + $0x378] sm:$0xff]
    %v237 = vld [vmem:[#allocation5 + $0x380] sm:$0xff]
    %v238 = vld [vmem:[#allocation5 + $0x388] sm:$0xff]
    %v239 = vld [vmem:[#allocation5 + $0x390] sm:$0xff]
    %v240 = vld [vmem:[#allocation5 + $0x398] sm:$0xff]
    %v241 = vld [vmem:[#allocation5 + $0x3a0] sm:$0xff]
    %v242 = vld [vmem:[#allocation5 + $0x3a8] sm:$0xff]
    %v243 = vld [vmem:[#allocation5 + $0x3b0] sm:$0xff]
    %v244 = vld [vmem:[#allocation5 + $0x3b8] sm:$0xff]
    %v245 = vld [vmem:[#allocation5 + $0x3c0] sm:$0xff]
    %v246 = vld [vmem:[#allocation5 + $0x3c8] sm:$0xff]
    %v247 = vld [vmem:[#allocation5 + $0x3d0] sm:$0xff]
    %v248 = vld [vmem:[#allocation5 + $0x3d8] sm:$0xff]
    %v249 = vld [vmem:[#allocation5 + $0x3e0] sm:$0xff]
    %v250 = vld [vmem:[#allocation5 + $0x3e8] sm:$0xff]
    %v251 = vld [vmem:[#allocation5 + $0x3f0] sm:$0xff]
    %v252 = vld [vmem:[#allocation5 + $0x3f8] sm:$0xff]
    %v253 = vld [vmem:[#allocation5 + $0x400] sm:$0xff]
    %v254 = vld [vmem:[#allocation5 + $0x408] sm:$0xff]
    %v255 = vld [vmem:[#allocation5 + $0x410] sm:$0xff]
    %v256 = vld [vmem:[#allocation5 + $0x418] sm:$0xff]
    %v257 = vld [vmem:[#allocation5 + $0x420] sm:$0xff]
    %v258 = vld [vmem:[#allocation5 + $0x428] sm:$0xff]
    %v259 = vld [vmem:[#allocation5 + $0x430] sm:$0xff]
    %v260 = vld [vmem:[#allocation5 + $0x438] sm:$0xff]
    %v261 = vld [vmem:[#allocation5 + $0x440] sm:$0xff]
    %v262 = vld [vmem:[#allocation5 + $0x448] sm:$0xff]
    %v263 = vld [vmem:[#allocation5 + $0x450] sm:$0xff]
    %v264 = vld [vmem:[#allocation5 + $0x458] sm:$0xff]
    %v265 = vld [vmem:[#allocation5 + $0x460] sm:$0xff]
    %v266 = vld [vmem:[#allocation5 + $0x468] sm:$0xff]
    %v267 = vld [vmem:[#allocation5 + $0x470] sm:$0xff]
    %v268 = vld [vmem:[#allocation5 + $0x478] sm:$0xff]
    %v269 = vld [vmem:[#allocation5 + $0x480] sm:$0xff]
    %v270 = vld [vmem:[#allocation5 + $0x488] sm:$0xff]
    %v271 = vld [vmem:[#allocation5 + $0x490] sm:$0xff]
    %v272 = vld [vmem:[#allocation5 + $0x498] sm:$0xff]
    %v273 = vld [vmem:[#allocation5 + $0x4a0] sm:$0xff]
    %v274 = vld [vmem:[#allocation5 + $0x4a8] sm:$0xff]
    %v275 = vld [vmem:[#allocation5 + $0x4b0] sm:$0xff]
    %v276 = vld [vmem:[#allocation5 + $0x4b8] sm:$0xff]
    %v277 = vld [vmem:[#allocation5 + $0x4c0] sm:$0xff]
    %v278 = vld [vmem:[#allocation5 + $0x4c8] sm:$0xff]
    %v279 = vld [vmem:[#allocation5 + $0x4d0] sm:$0xff]
    %v280 = vld [vmem:[#allocation5 + $0x4d8] sm:$0xff]
    %v281 = vld [vmem:[#allocation5 + $0x4e0] sm:$0xff]
    %v282 = vld [vmem:[#allocation5 + $0x4e8] sm:$0xff]
    %v283 = vld [vmem:[#allocation5 + $0x4f0] sm:$0xff]
    %v284 = vld [vmem:[#allocation5 + $0x4f8] sm:$0xff]
    %v285 = vld [vmem:[#allocation5 + $0x500] sm:$0xff]
    %v286 = vld [vmem:[#allocation5 + $0x508] sm:$0xff]
    %v287 = vld [vmem:[#allocation5 + $0x510] sm:$0xff]
    %v288 = vld [vmem:[#allocation5 + $0x518] sm:$0xff]
    %v289 = vld [vmem:[#allocation5 + $0x520] sm:$0xff]
    %v290 = vld [vmem:[#allocation5 + $0x528] sm:$0xff]
    %v291 = vld [vmem:[#allocation5 + $0x530] sm:$0xff]
    %v292 = vld [vmem:[#allocation5 + $0x538] sm:$0xff]
    %v293 = vld [vmem:[#allocation5 + $0x540] sm:$0xff]
    %v294 = vld [vmem:[#allocation5 + $0x548] sm:$0xff]
    %v295 = vld [vmem:[#allocation5 + $0x550] sm:$0xff]
    %v296 = vld [vmem:[#allocation5 + $0x558] sm:$0xff]
    %v297 = vld [vmem:[#allocation5 + $0x560] sm:$0xff]
    %v298 = vld [vmem:[#allocation5 + $0x568] sm:$0xff]
    %v299 = vld [vmem:[#allocation5 + $0x570] sm:$0xff]
    %v300 = vld [vmem:[#allocation5 + $0x578] sm:$0xff]
    %v301 = vld [vmem:[#allocation5 + $0x580] sm:$0xff]
    %v302 = vld [vmem:[#allocation5 + $0x588] sm:$0xff]
    %v303 = vld [vmem:[#allocation5 + $0x590] sm:$0xff]
    %v304 = vld [vmem:[#allocation5 + $0x598] sm:$0xff]
    %v305 = vld [vmem:[#allocation5 + $0x5a0] sm:$0xff]
    %v306 = vld [vmem:[#allocation5 + $0x5a8] sm:$0xff]
    %v307 = vld [vmem:[#allocation5 + $0x5b0] sm:$0xff]
    %v308 = vld [vmem:[#allocation5 + $0x5b8] sm:$0xff]
    %v309 = vld [vmem:[#allocation5 + $0x5c0] sm:$0xff]
    %v310 = vld [vmem:[#allocation5 + $0x5c8] sm:$0xff]
    %v311 = vld [vmem:[#allocation5 + $0x5d0] sm:$0xff]
    %v312 = vld [vmem:[#allocation5 + $0x5d8] sm:$0xff]
    %v313 = vld [vmem:[#allocation5 + $0x5e0] sm:$0xff]
    %v314 = vld [vmem:[#allocation5 + $0x5e8] sm:$0xff]
    %v315 = vld [vmem:[#allocation5 + $0x5f0] sm:$0xff]
    %v316 = vld [vmem:[#allocation5 + $0x5f8] sm:$0xff]
    %v317 = vld [vmem:[#allocation5 + $0x600] sm:$0xff]
    %v318 = vld [vmem:[#allocation5 + $0x608] sm:$0xff]
    %v319 = vld [vmem:[#allocation5 + $0x610] sm:$0xff]
    %v320 = vld [vmem:[#allocation5 + $0x618] sm:$0xff]
    %v321 = vld [vmem:[#allocation5 + $0x620] sm:$0xff]
    %v322 = vld [vmem:[#allocation5 + $0x628] sm:$0xff]
    %v323 = vld [vmem:[#allocation5 + $0x630] sm:$0xff]
    %v324 = vld [vmem:[#allocation5 + $0x638] sm:$0xff]
    %v325 = vld [vmem:[#allocation5 + $0x640] sm:$0xff]
    %v326 = vld [vmem:[#allocation5 + $0x648] sm:$0xff]
    %v327 = vld [vmem:[#allocation5 + $0x650] sm:$0xff]
    %v328 = vld [vmem:[#allocation5 + $0x658] sm:$0xff]
    %v329 = vld [vmem:[#allocation5 + $0x660] sm:$0xff]
    %v330 = vld [vmem:[#allocation5 + $0x668] sm:$0xff]
    %v331 = vld [vmem:[#allocation5 + $0x670] sm:$0xff]
    %v332 = vld [vmem:[#allocation5 + $0x678] sm:$0xff]
    %v333 = vld [vmem:[#allocation5 + $0x680] sm:$0xff]
    %v334 = vld [vmem:[#allocation5 + $0x688] sm:$0xff]
    %v335 = vld [vmem:[#allocation5 + $0x690] sm:$0xff]
    %v336 = vld [vmem:[#allocation5 + $0x698] sm:$0xff]
    %v337 = vld [vmem:[#allocation5 + $0x6a0] sm:$0xff]
    %v338 = vld [vmem:[#allocation5 + $0x6a8] sm:$0xff]
    %v339 = vld [vmem:[#allocation5 + $0x6b0] sm:$0xff]
    %v340 = vld [vmem:[#allocation5 + $0x6b8] sm:$0xff]
    %v341 = vld [vmem:[#allocation5 + $0x6c0] sm:$0xff]
    %v342 = vld [vmem:[#allocation5 + $0x6c8] sm:$0xff]
    %v343 = vld [vmem:[#allocation5 + $0x6d0] sm:$0xff]
    %v344 = vld [vmem:[#allocation5 + $0x6d8] sm:$0xff]
    %v345 = vld [vmem:[#allocation5 + $0x6e0] sm:$0xff]
    %v346 = vld [vmem:[#allocation5 + $0x6e8] sm:$0xff]
    %v347 = vld [vmem:[#allocation5 + $0x6f0] sm:$0xff]
    %v348 = vld [vmem:[#allocation5 + $0x6f8] sm:$0xff]
    %v349 = vld [vmem:[#allocation5 + $0x700] sm:$0xff]
    %v350 = vld [vmem:[#allocation5 + $0x708] sm:$0xff]
    %v351 = vld [vmem:[#allocation5 + $0x710] sm:$0xff]
    %v352 = vld [vmem:[#allocation5 + $0x718] sm:$0xff]
    %v353 = vld [vmem:[#allocation5 + $0x720] sm:$0xff]
    %v354 = vld [vmem:[#allocation5 + $0x728] sm:$0xff]
    %v355 = vld [vmem:[#allocation5 + $0x730] sm:$0xff]
    %v356 = vld [vmem:[#allocation5 + $0x738] sm:$0xff]
    %v357 = vld [vmem:[#allocation5 + $0x740] sm:$0xff]
    %v358 = vld [vmem:[#allocation5 + $0x748] sm:$0xff]
    %v359 = vld [vmem:[#allocation5 + $0x750] sm:$0xff]
    %v360 = vld [vmem:[#allocation5 + $0x758] sm:$0xff]
    %v361 = vld [vmem:[#allocation5 + $0x760] sm:$0xff]
    %v362 = vld [vmem:[#allocation5 + $0x768] sm:$0xff]
    %v363 = vld [vmem:[#allocation5 + $0x770] sm:$0xff]
    %v364 = vld [vmem:[#allocation5 + $0x778] sm:$0xff]
    %v365 = vld [vmem:[#allocation5 + $0x780] sm:$0xff]
    %v366 = vld [vmem:[#allocation5 + $0x788] sm:$0xff]
    %v367 = vld [vmem:[#allocation5 + $0x790] sm:$0xff]
    %v368 = vld [vmem:[#allocation5 + $0x798] sm:$0xff]
    %v369 = vld [vmem:[#allocation5 + $0x7a0] sm:$0xff]
    %v370 = vld [vmem:[#allocation5 + $0x7a8] sm:$0xff]
    %v371 = vld [vmem:[#allocation5 + $0x7b0] sm:$0xff]
    %v372 = vld [vmem:[#allocation5 + $0x7b8] sm:$0xff]
    %v373 = vld [vmem:[#allocation5 + $0x7c0] sm:$0xff]
    %v374 = vld [vmem:[#allocation5 + $0x7c8] sm:$0xff]
    %v375 = vld [vmem:[#allocation5 + $0x7d0] sm:$0xff]
    %v376 = vld [vmem:[#allocation5 + $0x7d8] sm:$0xff]
    %v377 = vld [vmem:[#allocation5 + $0x7e0] sm:$0xff]
    %v378 = vld [vmem:[#allocation5 + $0x7e8] sm:$0xff]
    %v379 = vld [vmem:[#allocation5 + $0x7f0] sm:$0xff]
    %v380 = vld [vmem:[#allocation5 + $0x7f8] sm:$0xff]
    %v381 = vld [vmem:[#allocation5 + $0x800] sm:$0xff]
    %v382 = vld [vmem:[#allocation5 + $0x808] sm:$0xff]
    %v383 = vld [vmem:[#allocation5 + $0x810] sm:$0xff]
    %v384 = vld [vmem:[#allocation5 + $0x818] sm:$0xff]
    %v385 = vld [vmem:[#allocation5 + $0x820] sm:$0xff]
    %v386 = vld [vmem:[#allocation5 + $0x828] sm:$0xff]
    %v387 = vld [vmem:[#allocation5 + $0x830] sm:$0xff]
    %v388 = vld [vmem:[#allocation5 + $0x838] sm:$0xff]
    %v389 = vld [vmem:[#allocation5 + $0x840] sm:$0xff]
    %v390 = vld [vmem:[#allocation5 + $0x848] sm:$0xff]
    %v391 = vld [vmem:[#allocation5 + $0x850] sm:$0xff]
    %v392 = vld [vmem:[#allocation5 + $0x858] sm:$0xff]
    %v393 = vld [vmem:[#allocation5 + $0x860] sm:$0xff]
    %v394 = vld [vmem:[#allocation5 + $0x868] sm:$0xff]
    %v395 = vld [vmem:[#allocation5 + $0x870] sm:$0xff]
    %v396 = vld [vmem:[#allocation5 + $0x878] sm:$0xff]
    %v397 = vld [vmem:[#allocation5 + $0x880] sm:$0xff]
    %v398 = vld [vmem:[#allocation5 + $0x888] sm:$0xff]
    %v399 = vld [vmem:[#allocation5 + $0x890] sm:$0xff]
    %v400 = vld [vmem:[#allocation5 + $0x898] sm:$0xff]
    %v401 = vld [vmem:[#allocation5 + $0x8a0] sm:$0xff]
    %v402 = vld [vmem:[#allocation5 + $0x8a8] sm:$0xff]
    %v403 = vld [vmem:[#allocation5 + $0x8b0] sm:$0xff]
    %v404 = vld [vmem:[#allocation5 + $0x8b8] sm:$0xff]
    %v405 = vld [vmem:[#allocation5 + $0x8c0] sm:$0xff]
    %v406 = vld [vmem:[#allocation5 + $0x8c8] sm:$0xff]
    %v407 = vld [vmem:[#allocation5 + $0x8d0] sm:$0xff]
    %v408 = vld [vmem:[#allocation5 + $0x8d8] sm:$0xff]
    %v409 = vld [vmem:[#allocation5 + $0x8e0] sm:$0xff]
    %v410 = vld [vmem:[#allocation5 + $0x8e8] sm:$0xff]
    %v411 = vld [vmem:[#allocation5 + $0x8f0] sm:$0xff]
    %v412 = vld [vmem:[#allocation5 + $0x8f8] sm:$0xff]
    %v413 = vld [vmem:[#allocation5 + $0x900] sm:$0xff]
    %v414 = vld [vmem:[#allocation5 + $0x908] sm:$0xff]
    %v415 = vld [vmem:[#allocation5 + $0x910] sm:$0xff]
    %v416 = vld [vmem:[#allocation5 + $0x918] sm:$0xff]
    %v417 = vld [vmem:[#allocation5 + $0x920] sm:$0xff]
    %v418 = vld [vmem:[#allocation5 + $0x928] sm:$0xff]
    %v419 = vld [vmem:[#allocation5 + $0x930] sm:$0xff]
    %v420 = vld [vmem:[#allocation5 + $0x938] sm:$0xff]
    %v421 = vld [vmem:[#allocation5 + $0x940] sm:$0xff]
    %v422 = vld [vmem:[#allocation5 + $0x948] sm:$0xff]
    %v423 = vld [vmem:[#allocation5 + $0x950] sm:$0xff]
    %v424 = vld [vmem:[#allocation5 + $0x958] sm:$0xff]
    %v425 = vld [vmem:[#allocation5 + $0x960] sm:$0xff]
    %v426 = vld [vmem:[#allocation5 + $0x968] sm:$0xff]
    %v427 = vld [vmem:[#allocation5 + $0x970] sm:$0xff]
    %v428 = vld [vmem:[#allocation5 + $0x978] sm:$0xff]
    %v429 = vld [vmem:[#allocation5 + $0x980] sm:$0xff]
    %v430 = vld [vmem:[#allocation5 + $0x988] sm:$0xff]
    %v431 = vld [vmem:[#allocation5 + $0x990] sm:$0xff]
    %v432 = vld [vmem:[#allocation5 + $0x998] sm:$0xff]
    %v433 = vld [vmem:[#allocation5 + $0x9a0] sm:$0xff]
    %v434 = vld [vmem:[#allocation5 + $0x9a8] sm:$0xff]
    %v435 = vld [vmem:[#allocation5 + $0x9b0] sm:$0xff]
    %v436 = vld [vmem:[#allocation5 + $0x9b8] sm:$0xff]
    %v437 = vld [vmem:[#allocation5 + $0x9c0] sm:$0xff]
    %v438 = vld [vmem:[#allocation5 + $0x9c8] sm:$0xff]
    %v439 = vld [vmem:[#allocation5 + $0x9d0] sm:$0xff]
    %v440 = vld [vmem:[#allocation5 + $0x9d8] sm:$0xff]
    %v441 = vld [vmem:[#allocation5 + $0x9e0] sm:$0xff]
    %v442 = vld [vmem:[#allocation5 + $0x9e8] sm:$0xff]
    %v443 = vld [vmem:[#allocation5 + $0x9f0] sm:$0xff]
    %v444 = vld [vmem:[#allocation5 + $0x9f8] sm:$0xff]
    %v445 = vld [vmem:[#allocation5 + $0xa00] sm:$0xff]
    %v446 = vld [vmem:[#allocation5 + $0xa08] sm:$0xff]
    %v447 = vld [vmem:[#allocation5 + $0xa10] sm:$0xff]
    %v448 = vld [vmem:[#allocation5 + $0xa18] sm:$0xff]
    %v449 = vld [vmem:[#allocation5 + $0xa20] sm:$0xff]
    %v450 = vld [vmem:[#allocation5 + $0xa28] sm:$0xff]
    %v451 = vld [vmem:[#allocation5 + $0xa30] sm:$0xff]
    %v452 = vld [vmem:[#allocation5 + $0xa38] sm:$0xff]
    %v453 = vld [vmem:[#allocation5 + $0xa40] sm:$0xff]
    %v454 = vld [vmem:[#allocation5 + $0xa48] sm:$0xff]
    %v455 = vld [vmem:[#allocation5 + $0xa50] sm:$0xff]
    %v456 = vld [vmem:[#allocation5 + $0xa58] sm:$0xff]
    %v457 = vld [vmem:[#allocation5 + $0xa60] sm:$0xff]
    %v458 = vld [vmem:[#allocation5 + $0xa68] sm:$0xff]
    %v459 = vld [vmem:[#allocation5 + $0xa70] sm:$0xff]
    %v460 = vld [vmem:[#allocation5 + $0xa78] sm:$0xff]
    %v461 = vld [vmem:[#allocation5 + $0xa80] sm:$0xff]
    %v462 = vld [vmem:[#allocation5 + $0xa88] sm:$0xff]
    %v463 = vld [vmem:[#allocation5 + $0xa90] sm:$0xff]
    %v464 = vld [vmem:[#allocation5 + $0xa98] sm:$0xff]
    %v465 = vld [vmem:[#allocation5 + $0xaa0] sm:$0xff]
    %v466 = vld [vmem:[#allocation5 + $0xaa8] sm:$0xff]
    %v467 = vld [vmem:[#allocation5 + $0xab0] sm:$0xff]
    %v468 = vld [vmem:[#allocation5 + $0xab8] sm:$0xff]
    %v469 = vld [vmem:[#allocation5 + $0xac0] sm:$0xff]
    %v470 = vld [vmem:[#allocation5 + $0xac8] sm:$0xff]
    %v471 = vld [vmem:[#allocation5 + $0xad0] sm:$0xff]
    %v472 = vld [vmem:[#allocation5 + $0xad8] sm:$0xff]
    %v473 = vld [vmem:[#allocation5 + $0xae0] sm:$0xff]
    %v474 = vld [vmem:[#allocation5 + $0xae8] sm:$0xff]
    %v475 = vld [vmem:[#allocation5 + $0xaf0] sm:$0xff]
    %v476 = vld [vmem:[#allocation5 + $0xaf8] sm:$0xff]
    %v477 = vld [vmem:[#allocation5 + $0xb00] sm:$0xff]
    %v478 = vld [vmem:[#allocation5 + $0xb08] sm:$0xff]
    %v479 = vld [vmem:[#allocation5 + $0xb10] sm:$0xff]
    %v480 = vld [vmem:[#allocation5 + $0xb18] sm:$0xff]
    %v481 = vld [vmem:[#allocation5 + $0xb20] sm:$0xff]
    %v482 = vld [vmem:[#allocation5 + $0xb28] sm:$0xff]
    %v483 = vld [vmem:[#allocation5 + $0xb30] sm:$0xff]
    %v484 = vld [vmem:[#allocation5 + $0xb38] sm:$0xff]
    %v485 = vld [vmem:[#allocation5 + $0xb40] sm:$0xff]
    %v486 = vld [vmem:[#allocation5 + $0xb48] sm:$0xff]
    %v487 = vld [vmem:[#allocation5 + $0xb50] sm:$0xff]
    %v488 = vld [vmem:[#allocation5 + $0xb58] sm:$0xff]
    %v489 = vld [vmem:[#allocation5 + $0xb60] sm:$0xff]
    %v490 = vld [vmem:[#allocation5 + $0xb68] sm:$0xff]
    %v491 = vld [vmem:[#allocation5 + $0xb70] sm:$0xff]
    %v492 = vld [vmem:[#allocation5 + $0xb78] sm:$0xff]
    %v493 = vld [vmem:[#allocation5 + $0xb80] sm:$0xff]
    %v494 = vld [vmem:[#allocation5 + $0xb88] sm:$0xff]
    %v495 = vld [vmem:[#allocation5 + $0xb90] sm:$0xff]
    %v496 = vld [vmem:[#allocation5 + $0xb98] sm:$0xff]
    %v497 = vld [vmem:[#allocation5 + $0xba0] sm:$0xff]
    %v498 = vld [vmem:[#allocation5 + $0xba8] sm:$0xff]
    %v499 = vld [vmem:[#allocation5 + $0xbb0] sm:$0xff]
    %v500 = vld [vmem:[#allocation5 + $0xbb8] sm:$0xff]
    %v501 = vld [vmem:[#allocation5 + $0xbc0] sm:$0xff]
    %v502 = vld [vmem:[#allocation5 + $0xbc8] sm:$0xff]
    %v503 = vld [vmem:[#allocation5 + $0xbd0] sm:$0xff]
    %v504 = vld [vmem:[#allocation5 + $0xbd8] sm:$0xff]
    %v505 = vld [vmem:[#allocation5 + $0xbe0] sm:$0xff]
    %v506 = vld [vmem:[#allocation5 + $0xbe8] sm:$0xff]
    %v507 = vld [vmem:[#allocation5 + $0xbf0] sm:$0xff]
    %v508 = vld [vmem:[#allocation5 + $0xbf8] sm:$0xff]
    %v509 = vld [vmem:[#allocation5 + $0xc00] sm:$0xff]
    %v510 = vld [vmem:[#allocation5 + $0xc08] sm:$0xff]
    %v511 = vld [vmem:[#allocation5 + $0xc10] sm:$0xff]
    %v512 = vld [vmem:[#allocation5 + $0xc18] sm:$0xff]
    %v513 = vld [vmem:[#allocation5 + $0xc20] sm:$0xff]
    %v514 = vld [vmem:[#allocation5 + $0xc28] sm:$0xff]
    %v515 = vld [vmem:[#allocation5 + $0xc30] sm:$0xff]
    %v516 = vld [vmem:[#allocation5 + $0xc38] sm:$0xff]
    %v517 = vld [vmem:[#allocation7] sm:$0xff]
    %v519 = vlaneseq
    %v520 = vshrl.u32 %v519, 7
    %v521 = vsub.s32 0, %v520
    %v522 = vrot.slane %v517, %v521
    %v523 = vlaneseq
    %v524 = vshrl.u32 %v523, 7
    %v525 = vsub.s32 1, %v524
    %v526 = vrot.slane %v517, %v525
    %v527 = vlaneseq
    %v528 = vshrl.u32 %v527, 7
    %v529 = vsub.s32 2, %v528
    %v530 = vrot.slane %v517, %v529
    %v531 = vlaneseq
    %v532 = vshrl.u32 %v531, 7
    %v533 = vsub.s32 3, %v532
    %v534 = vrot.slane %v517, %v533
    %v535 = vlaneseq
    %v536 = vshrl.u32 %v535, 7
    %v537 = vsub.s32 4, %v536
    %v538 = vrot.slane %v517, %v537
    %v539 = vlaneseq
    %v540 = vshrl.u32 %v539, 7
    %v541 = vsub.s32 5, %v540
    %v542 = vrot.slane %v517, %v541
    %v543 = vlaneseq
    %v544 = vshrl.u32 %v543, 7
    %v545 = vsub.s32 6, %v544
    %v546 = vrot.slane %v517, %v545
    %v547 = vlaneseq
    %v548 = vshrl.u32 %v547, 7
    %v549 = vsub.s32 7, %v548
    %v550 = vrot.slane %v517, %v549
    %v567 = vunpack.c.l.b16 %v117
    %v568 = vunpack.c.h.b16 %v117
    %v569 = vunpack.c.l.b16 %v118
    %v570 = vunpack.c.h.b16 %v118
    %v571 = vunpack.c.l.b16 %v119
    %v572 = vunpack.c.h.b16 %v119
    %v573 = vunpack.c.l.b16 %v120
    %v574 = vunpack.c.l.b16 %v121
    %v575 = vunpack.c.h.b16 %v121
    %v576 = vunpack.c.l.b16 %v122
    %v577 = vunpack.c.h.b16 %v122
    %v578 = vunpack.c.l.b16 %v123
    %v579 = vunpack.c.h.b16 %v123
    %v580 = vunpack.c.l.b16 %v124
    %v581 = vpack.c.b16 %v574, %v567
    %v582 = vpack.c.b16 %v575, %v568
    %v583 = vpack.c.b16 %v576, %v569
    %v584 = vpack.c.b16 %v577, %v570
    %v585 = vpack.c.b16 %v578, %v571
    %v586 = vpack.c.b16 %v579, %v572
    %v587 = vpack.c.b16 %v580, %v573
    %v986 = vunpack.c.l.b16 %v125
    %v987 = vunpack.c.h.b16 %v125
    %v988 = vunpack.c.l.b16 %v126
    %v989 = vunpack.c.h.b16 %v126
    %v990 = vunpack.c.l.b16 %v127
    %v991 = vunpack.c.h.b16 %v127
    %v992 = vunpack.c.l.b16 %v128
    %v993 = vunpack.c.h.b16 %v128
    %v994 = vunpack.c.l.b16 %v129
    %v995 = vunpack.c.h.b16 %v129
    %v996 = vunpack.c.l.b16 %v130
    %v997 = vunpack.c.h.b16 %v130
    %v998 = vunpack.c.l.b16 %v131
    %v999 = vunpack.c.h.b16 %v131
    %v1000 = vunpack.c.l.b16 %v132
    %v1001 = vunpack.c.h.b16 %v132
    %v1002 = vunpack.c.l.b16 %v133
    %v1003 = vunpack.c.h.b16 %v133
    %v1004 = vunpack.c.l.b16 %v134
    %v1005 = vunpack.c.h.b16 %v134
    %v1006 = vunpack.c.l.b16 %v135
    %v1007 = vunpack.c.h.b16 %v135
    %v1008 = vunpack.c.l.b16 %v136
    %v1009 = vunpack.c.h.b16 %v136
    %v1010 = vunpack.c.l.b16 %v137
    %v1011 = vunpack.c.h.b16 %v137
    %v1012 = vunpack.c.l.b16 %v138
    %v1013 = vunpack.c.h.b16 %v138
    %v1014 = vunpack.c.l.b16 %v139
    %v1015 = vunpack.c.h.b16 %v139
    %v1016 = vunpack.c.l.b16 %v140
    %v1017 = vunpack.c.h.b16 %v140
    %v1018 = vunpack.c.l.b16 %v141
    %v1019 = vunpack.c.h.b16 %v141
    %v1020 = vunpack.c.l.b16 %v142
    %v1021 = vunpack.c.h.b16 %v142
    %v1022 = vunpack.c.l.b16 %v143
    %v1023 = vunpack.c.h.b16 %v143
    %v1024 = vunpack.c.l.b16 %v144
    %v1025 = vunpack.c.h.b16 %v144
    %v1026 = vunpack.c.l.b16 %v145
    %v1027 = vunpack.c.h.b16 %v145
    %v1028 = vunpack.c.l.b16 %v146
    %v1029 = vunpack.c.h.b16 %v146
    %v1030 = vunpack.c.l.b16 %v147
    %v1031 = vunpack.c.h.b16 %v147
    %v1032 = vunpack.c.l.b16 %v148
    %v1033 = vunpack.c.h.b16 %v148
    %v1034 = vunpack.c.l.b16 %v149
    %v1035 = vunpack.c.h.b16 %v149
    %v1036 = vunpack.c.l.b16 %v150
    %v1037 = vunpack.c.h.b16 %v150
    %v1038 = vunpack.c.l.b16 %v151
    %v1039 = vunpack.c.h.b16 %v151
    %v1040 = vunpack.c.l.b16 %v152
    %v1041 = vunpack.c.h.b16 %v152
    %v1042 = vunpack.c.l.b16 %v153
    %v1043 = vunpack.c.h.b16 %v153
    %v1044 = vunpack.c.l.b16 %v154
    %v1045 = vunpack.c.h.b16 %v154
    %v1046 = vunpack.c.l.b16 %v155
    %v1047 = vunpack.c.h.b16 %v155
    %v1048 = vunpack.c.l.b16 %v156
    %v1049 = vunpack.c.h.b16 %v156
    %v1050 = vunpack.c.l.b16 %v157
    %v1051 = vunpack.c.h.b16 %v157
    %v1052 = vunpack.c.l.b16 %v158
    %v1053 = vunpack.c.h.b16 %v158
    %v1054 = vunpack.c.l.b16 %v159
    %v1055 = vunpack.c.h.b16 %v159
    %v1056 = vunpack.c.l.b16 %v160
    %v1057 = vunpack.c.h.b16 %v160
    %v1058 = vunpack.c.l.b16 %v161
    %v1059 = vunpack.c.h.b16 %v161
    %v1060 = vunpack.c.l.b16 %v162
    %v1061 = vunpack.c.h.b16 %v162
    %v1062 = vunpack.c.l.b16 %v163
    %v1063 = vunpack.c.h.b16 %v163
    %v1064 = vunpack.c.l.b16 %v164
    %v1065 = vunpack.c.h.b16 %v164
    %v1066 = vunpack.c.l.b16 %v165
    %v1067 = vunpack.c.h.b16 %v165
    %v1068 = vunpack.c.l.b16 %v166
    %v1069 = vunpack.c.h.b16 %v166
    %v1070 = vunpack.c.l.b16 %v167
    %v1071 = vunpack.c.h.b16 %v167
    %v1072 = vunpack.c.l.b16 %v168
    %v1073 = vunpack.c.h.b16 %v168
    %v1074 = vunpack.c.l.b16 %v169
    %v1075 = vunpack.c.h.b16 %v169
    %v1076 = vunpack.c.l.b16 %v170
    %v1077 = vunpack.c.h.b16 %v170
    %v1078 = vunpack.c.l.b16 %v171
    %v1079 = vunpack.c.h.b16 %v171
    %v1080 = vunpack.c.l.b16 %v172
    %v1081 = vunpack.c.h.b16 %v172
    %v1082 = vunpack.c.l.b16 %v173
    %v1083 = vunpack.c.h.b16 %v173
    %v1084 = vunpack.c.l.b16 %v174
    %v1085 = vunpack.c.h.b16 %v174
    %v1086 = vunpack.c.l.b16 %v175
    %v1087 = vunpack.c.h.b16 %v175
    %v1088 = vunpack.c.l.b16 %v176
    %v1089 = vunpack.c.h.b16 %v176
    %v1090 = vunpack.c.l.b16 %v177
    %v1091 = vunpack.c.h.b16 %v177
    %v1092 = vunpack.c.l.b16 %v178
    %v1093 = vunpack.c.h.b16 %v178
    %v1094 = vunpack.c.l.b16 %v179
    %v1095 = vunpack.c.h.b16 %v179
    %v1096 = vunpack.c.l.b16 %v180
    %v1097 = vunpack.c.h.b16 %v180
    %v1098 = vunpack.c.l.b16 %v181
    %v1099 = vunpack.c.h.b16 %v181
    %v1100 = vunpack.c.l.b16 %v182
    %v1101 = vunpack.c.h.b16 %v182
    %v1102 = vunpack.c.l.b16 %v183
    %v1103 = vunpack.c.h.b16 %v183
    %v1104 = vunpack.c.l.b16 %v184
    %v1105 = vunpack.c.h.b16 %v184
    %v1106 = vunpack.c.l.b16 %v185
    %v1107 = vunpack.c.h.b16 %v185
    %v1108 = vunpack.c.l.b16 %v186
    %v1109 = vunpack.c.h.b16 %v186
    %v1110 = vunpack.c.l.b16 %v187
    %v1111 = vunpack.c.h.b16 %v187
    %v1112 = vunpack.c.l.b16 %v188
    %v1113 = vunpack.c.h.b16 %v188
    %v1114 = vunpack.c.l.b16 %v189
    %v1115 = vunpack.c.h.b16 %v189
    %v1116 = vunpack.c.l.b16 %v190
    %v1117 = vunpack.c.h.b16 %v190
    %v1118 = vunpack.c.l.b16 %v191
    %v1119 = vunpack.c.h.b16 %v191
    %v1120 = vunpack.c.l.b16 %v192
    %v1121 = vunpack.c.h.b16 %v192
    %v1122 = vunpack.c.l.b16 %v193
    %v1123 = vunpack.c.h.b16 %v193
    %v1124 = vunpack.c.l.b16 %v194
    %v1125 = vunpack.c.h.b16 %v194
    %v1126 = vunpack.c.l.b16 %v195
    %v1127 = vunpack.c.h.b16 %v195
    %v1128 = vunpack.c.l.b16 %v196
    %v1129 = vunpack.c.h.b16 %v196
    %v1130 = vunpack.c.l.b16 %v197
    %v1131 = vunpack.c.h.b16 %v197
    %v1132 = vunpack.c.l.b16 %v198
    %v1133 = vunpack.c.h.b16 %v198
    %v1134 = vunpack.c.l.b16 %v199
    %v1135 = vunpack.c.h.b16 %v199
    %v1136 = vunpack.c.l.b16 %v200
    %v1137 = vunpack.c.h.b16 %v200
    %v1138 = vunpack.c.l.b16 %v201
    %v1139 = vunpack.c.h.b16 %v201
    %v1140 = vunpack.c.l.b16 %v202
    %v1141 = vunpack.c.h.b16 %v202
    %v1142 = vunpack.c.l.b16 %v203
    %v1143 = vunpack.c.h.b16 %v203
    %v1144 = vunpack.c.l.b16 %v204
    %v1145 = vunpack.c.h.b16 %v204
    %v1146 = vunpack.c.l.b16 %v205
    %v1147 = vunpack.c.h.b16 %v205
    %v1148 = vunpack.c.l.b16 %v206
    %v1149 = vunpack.c.h.b16 %v206
    %v1150 = vunpack.c.l.b16 %v207
    %v1151 = vunpack.c.h.b16 %v207
    %v1152 = vunpack.c.l.b16 %v208
    %v1153 = vunpack.c.h.b16 %v208
    %v1154 = vunpack.c.l.b16 %v209
    %v1155 = vunpack.c.h.b16 %v209
    %v1156 = vunpack.c.l.b16 %v210
    %v1157 = vunpack.c.h.b16 %v210
    %v1158 = vunpack.c.l.b16 %v211
    %v1159 = vunpack.c.h.b16 %v211
    %v1160 = vunpack.c.l.b16 %v212
    %v1161 = vunpack.c.h.b16 %v212
    %v1162 = vunpack.c.l.b16 %v213
    %v1163 = vunpack.c.h.b16 %v213
    %v1164 = vunpack.c.l.b16 %v214
    %v1165 = vunpack.c.h.b16 %v214
    %v1166 = vunpack.c.l.b16 %v215
    %v1167 = vunpack.c.h.b16 %v215
    %v1168 = vunpack.c.l.b16 %v216
    %v1169 = vunpack.c.h.b16 %v216
    %v1170 = vunpack.c.l.b16 %v217
    %v1171 = vunpack.c.h.b16 %v217
    %v1172 = vunpack.c.l.b16 %v218
    %v1173 = vunpack.c.h.b16 %v218
    %v1174 = vunpack.c.l.b16 %v219
    %v1175 = vunpack.c.h.b16 %v219
    %v1176 = vunpack.c.l.b16 %v220
    %v1177 = vunpack.c.h.b16 %v220
    %v1178 = vunpack.c.l.b16 %v221
    %v1179 = vunpack.c.h.b16 %v221
    %v1180 = vunpack.c.l.b16 %v222
    %v1181 = vunpack.c.h.b16 %v222
    %v1182 = vunpack.c.l.b16 %v223
    %v1183 = vunpack.c.h.b16 %v223
    %v1184 = vunpack.c.l.b16 %v224
    %v1185 = vunpack.c.h.b16 %v224
    %v1186 = vunpack.c.l.b16 %v225
    %v1187 = vunpack.c.h.b16 %v225
    %v1188 = vunpack.c.l.b16 %v226
    %v1189 = vunpack.c.h.b16 %v226
    %v1190 = vunpack.c.l.b16 %v227
    %v1191 = vunpack.c.h.b16 %v227
    %v1192 = vunpack.c.l.b16 %v228
    %v1193 = vunpack.c.h.b16 %v228
    %v1194 = vunpack.c.l.b16 %v229
    %v1195 = vunpack.c.h.b16 %v229
    %v1196 = vunpack.c.l.b16 %v230
    %v1197 = vunpack.c.h.b16 %v230
    %v1198 = vunpack.c.l.b16 %v231
    %v1199 = vunpack.c.h.b16 %v231
    %v1200 = vunpack.c.l.b16 %v232
    %v1201 = vunpack.c.h.b16 %v232
    %v1202 = vunpack.c.l.b16 %v233
    %v1203 = vunpack.c.h.b16 %v233
    %v1204 = vunpack.c.l.b16 %v234
    %v1205 = vunpack.c.h.b16 %v234
    %v1206 = vunpack.c.l.b16 %v235
    %v1207 = vunpack.c.h.b16 %v235
    %v1208 = vunpack.c.l.b16 %v236
    %v1209 = vunpack.c.h.b16 %v236
    %v1210 = vunpack.c.l.b16 %v237
    %v1211 = vunpack.c.h.b16 %v237
    %v1212 = vunpack.c.l.b16 %v238
    %v1213 = vunpack.c.h.b16 %v238
    %v1214 = vunpack.c.l.b16 %v239
    %v1215 = vunpack.c.h.b16 %v239
    %v1216 = vunpack.c.l.b16 %v240
    %v1217 = vunpack.c.h.b16 %v240
    %v1218 = vunpack.c.l.b16 %v241
    %v1219 = vunpack.c.h.b16 %v241
    %v1220 = vunpack.c.l.b16 %v242
    %v1221 = vunpack.c.h.b16 %v242
    %v1222 = vunpack.c.l.b16 %v243
    %v1223 = vunpack.c.h.b16 %v243
    %v1224 = vunpack.c.l.b16 %v244
    %v1225 = vunpack.c.h.b16 %v244
    %v1226 = vunpack.c.l.b16 %v245
    %v1227 = vunpack.c.h.b16 %v245
    %v1228 = vunpack.c.l.b16 %v246
    %v1229 = vunpack.c.h.b16 %v246
    %v1230 = vunpack.c.l.b16 %v247
    %v1231 = vunpack.c.h.b16 %v247
    %v1232 = vunpack.c.l.b16 %v248
    %v1233 = vunpack.c.h.b16 %v248
    %v1234 = vunpack.c.l.b16 %v249
    %v1235 = vunpack.c.h.b16 %v249
    %v1236 = vunpack.c.l.b16 %v250
    %v1237 = vunpack.c.h.b16 %v250
    %v1238 = vunpack.c.l.b16 %v251
    %v1239 = vunpack.c.h.b16 %v251
    %v1240 = vunpack.c.l.b16 %v252
    %v1241 = vunpack.c.h.b16 %v252
    %v1242 = vunpack.c.l.b16 %v253
    %v1243 = vunpack.c.h.b16 %v253
    %v1244 = vunpack.c.l.b16 %v254
    %v1245 = vunpack.c.h.b16 %v254
    %v1246 = vunpack.c.l.b16 %v255
    %v1247 = vunpack.c.h.b16 %v255
    %v1248 = vunpack.c.l.b16 %v256
    %v1249 = vunpack.c.h.b16 %v256
    %v1250 = vunpack.c.l.b16 %v257
    %v1251 = vunpack.c.h.b16 %v257
    %v1252 = vunpack.c.l.b16 %v258
    %v1253 = vunpack.c.h.b16 %v258
    %v1254 = vunpack.c.l.b16 %v259
    %v1255 = vunpack.c.h.b16 %v259
    %v1256 = vunpack.c.l.b16 %v260
    %v1257 = vunpack.c.h.b16 %v260
    %v1258 = vunpack.c.l.b16 %v261
    %v1259 = vunpack.c.h.b16 %v261
    %v1260 = vunpack.c.l.b16 %v262
    %v1261 = vunpack.c.h.b16 %v262
    %v1262 = vunpack.c.l.b16 %v263
    %v1263 = vunpack.c.h.b16 %v263
    %v1264 = vunpack.c.l.b16 %v264
    %v1265 = vunpack.c.h.b16 %v264
    %v1266 = vunpack.c.l.b16 %v265
    %v1267 = vunpack.c.h.b16 %v265
    %v1268 = vunpack.c.l.b16 %v266
    %v1269 = vunpack.c.h.b16 %v266
    %v1270 = vunpack.c.l.b16 %v267
    %v1271 = vunpack.c.h.b16 %v267
    %v1272 = vunpack.c.l.b16 %v268
    %v1273 = vunpack.c.h.b16 %v268
    %v1274 = vunpack.c.l.b16 %v269
    %v1275 = vunpack.c.h.b16 %v269
    %v1276 = vunpack.c.l.b16 %v270
    %v1277 = vunpack.c.h.b16 %v270
    %v1278 = vunpack.c.l.b16 %v271
    %v1279 = vunpack.c.h.b16 %v271
    %v1280 = vunpack.c.l.b16 %v272
    %v1281 = vunpack.c.h.b16 %v272
    %v1282 = vunpack.c.l.b16 %v273
    %v1283 = vunpack.c.h.b16 %v273
    %v1284 = vunpack.c.l.b16 %v274
    %v1285 = vunpack.c.h.b16 %v274
    %v1286 = vunpack.c.l.b16 %v275
    %v1287 = vunpack.c.h.b16 %v275
    %v1288 = vunpack.c.l.b16 %v276
    %v1289 = vunpack.c.h.b16 %v276
    %v1290 = vunpack.c.l.b16 %v277
    %v1291 = vunpack.c.h.b16 %v277
    %v1292 = vunpack.c.l.b16 %v278
    %v1293 = vunpack.c.h.b16 %v278
    %v1294 = vunpack.c.l.b16 %v279
    %v1295 = vunpack.c.h.b16 %v279
    %v1296 = vunpack.c.l.b16 %v280
    %v1297 = vunpack.c.h.b16 %v280
    %v1298 = vunpack.c.l.b16 %v281
    %v1299 = vunpack.c.h.b16 %v281
    %v1300 = vunpack.c.l.b16 %v282
    %v1301 = vunpack.c.h.b16 %v282
    %v1302 = vunpack.c.l.b16 %v283
    %v1303 = vunpack.c.h.b16 %v283
    %v1304 = vunpack.c.l.b16 %v284
    %v1305 = vunpack.c.h.b16 %v284
    %v1306 = vunpack.c.l.b16 %v285
    %v1307 = vunpack.c.h.b16 %v285
    %v1308 = vunpack.c.l.b16 %v286
    %v1309 = vunpack.c.h.b16 %v286
    %v1310 = vunpack.c.l.b16 %v287
    %v1311 = vunpack.c.h.b16 %v287
    %v1312 = vunpack.c.l.b16 %v288
    %v1313 = vunpack.c.h.b16 %v288
    %v1314 = vunpack.c.l.b16 %v289
    %v1315 = vunpack.c.h.b16 %v289
    %v1316 = vunpack.c.l.b16 %v290
    %v1317 = vunpack.c.h.b16 %v290
    %v1318 = vunpack.c.l.b16 %v291
    %v1319 = vunpack.c.h.b16 %v291
    %v1320 = vunpack.c.l.b16 %v292
    %v1321 = vunpack.c.h.b16 %v292
    %v1322 = vunpack.c.l.b16 %v293
    %v1323 = vunpack.c.h.b16 %v293
    %v1324 = vunpack.c.l.b16 %v294
    %v1325 = vunpack.c.h.b16 %v294
    %v1326 = vunpack.c.l.b16 %v295
    %v1327 = vunpack.c.h.b16 %v295
    %v1328 = vunpack.c.l.b16 %v296
    %v1329 = vunpack.c.h.b16 %v296
    %v1330 = vunpack.c.l.b16 %v297
    %v1331 = vunpack.c.h.b16 %v297
    %v1332 = vunpack.c.l.b16 %v298
    %v1333 = vunpack.c.h.b16 %v298
    %v1334 = vunpack.c.l.b16 %v299
    %v1335 = vunpack.c.h.b16 %v299
    %v1336 = vunpack.c.l.b16 %v300
    %v1337 = vunpack.c.h.b16 %v300
    %v1338 = vunpack.c.l.b16 %v301
    %v1339 = vunpack.c.h.b16 %v301
    %v1340 = vunpack.c.l.b16 %v302
    %v1341 = vunpack.c.h.b16 %v302
    %v1342 = vunpack.c.l.b16 %v303
    %v1343 = vunpack.c.h.b16 %v303
    %v1344 = vunpack.c.l.b16 %v304
    %v1345 = vunpack.c.h.b16 %v304
    %v1346 = vunpack.c.l.b16 %v305
    %v1347 = vunpack.c.h.b16 %v305
    %v1348 = vunpack.c.l.b16 %v306
    %v1349 = vunpack.c.h.b16 %v306
    %v1350 = vunpack.c.l.b16 %v307
    %v1351 = vunpack.c.h.b16 %v307
    %v1352 = vunpack.c.l.b16 %v308
    %v1353 = vunpack.c.h.b16 %v308
    %v1354 = vunpack.c.l.b16 %v309
    %v1355 = vunpack.c.h.b16 %v309
    %v1356 = vunpack.c.l.b16 %v310
    %v1357 = vunpack.c.h.b16 %v310
    %v1358 = vunpack.c.l.b16 %v311
    %v1359 = vunpack.c.h.b16 %v311
    %v1360 = vunpack.c.l.b16 %v312
    %v1361 = vunpack.c.h.b16 %v312
    %v1362 = vunpack.c.l.b16 %v313
    %v1363 = vunpack.c.h.b16 %v313
    %v1364 = vunpack.c.l.b16 %v314
    %v1365 = vunpack.c.h.b16 %v314
    %v1366 = vunpack.c.l.b16 %v315
    %v1367 = vunpack.c.h.b16 %v315
    %v1368 = vunpack.c.l.b16 %v316
    %v1369 = vunpack.c.h.b16 %v316
    %v1370 = vunpack.c.l.b16 %v317
    %v1371 = vunpack.c.h.b16 %v317
    %v1372 = vunpack.c.l.b16 %v318
    %v1373 = vunpack.c.h.b16 %v318
    %v1374 = vunpack.c.l.b16 %v319
    %v1375 = vunpack.c.h.b16 %v319
    %v1376 = vunpack.c.l.b16 %v320
    %v1377 = vunpack.c.h.b16 %v320
    %v1378 = vunpack.c.l.b16 %v321
    %v1379 = vunpack.c.h.b16 %v321
    %v1380 = vunpack.c.l.b16 %v322
    %v1381 = vunpack.c.h.b16 %v322
    %v1382 = vunpack.c.l.b16 %v323
    %v1383 = vunpack.c.h.b16 %v323
    %v1384 = vunpack.c.l.b16 %v324
    %v1385 = vunpack.c.h.b16 %v324
    %v1386 = vunpack.c.l.b16 %v325
    %v1387 = vunpack.c.h.b16 %v325
    %v1388 = vunpack.c.l.b16 %v326
    %v1389 = vunpack.c.h.b16 %v326
    %v1390 = vunpack.c.l.b16 %v327
    %v1391 = vunpack.c.h.b16 %v327
    %v1392 = vunpack.c.l.b16 %v328
    %v1393 = vunpack.c.h.b16 %v328
    %v1394 = vunpack.c.l.b16 %v329
    %v1395 = vunpack.c.h.b16 %v329
    %v1396 = vunpack.c.l.b16 %v330
    %v1397 = vunpack.c.h.b16 %v330
    %v1398 = vunpack.c.l.b16 %v331
    %v1399 = vunpack.c.h.b16 %v331
    %v1400 = vunpack.c.l.b16 %v332
    %v1401 = vunpack.c.h.b16 %v332
    %v1402 = vunpack.c.l.b16 %v333
    %v1403 = vunpack.c.h.b16 %v333
    %v1404 = vunpack.c.l.b16 %v334
    %v1405 = vunpack.c.h.b16 %v334
    %v1406 = vunpack.c.l.b16 %v335
    %v1407 = vunpack.c.h.b16 %v335
    %v1408 = vunpack.c.l.b16 %v336
    %v1409 = vunpack.c.h.b16 %v336
    %v1410 = vunpack.c.l.b16 %v337
    %v1411 = vunpack.c.h.b16 %v337
    %v1412 = vunpack.c.l.b16 %v338
    %v1413 = vunpack.c.h.b16 %v338
    %v1414 = vunpack.c.l.b16 %v339
    %v1415 = vunpack.c.h.b16 %v339
    %v1416 = vunpack.c.l.b16 %v340
    %v1417 = vunpack.c.h.b16 %v340
    %v1418 = vunpack.c.l.b16 %v341
    %v1419 = vunpack.c.h.b16 %v341
    %v1420 = vunpack.c.l.b16 %v342
    %v1421 = vunpack.c.h.b16 %v342
    %v1422 = vunpack.c.l.b16 %v343
    %v1423 = vunpack.c.h.b16 %v343
    %v1424 = vunpack.c.l.b16 %v344
    %v1425 = vunpack.c.h.b16 %v344
    %v1426 = vunpack.c.l.b16 %v345
    %v1427 = vunpack.c.h.b16 %v345
    %v1428 = vunpack.c.l.b16 %v346
    %v1429 = vunpack.c.h.b16 %v346
    %v1430 = vunpack.c.l.b16 %v347
    %v1431 = vunpack.c.h.b16 %v347
    %v1432 = vunpack.c.l.b16 %v348
    %v1433 = vunpack.c.h.b16 %v348
    %v1434 = vunpack.c.l.b16 %v349
    %v1435 = vunpack.c.h.b16 %v349
    %v1436 = vunpack.c.l.b16 %v350
    %v1437 = vunpack.c.h.b16 %v350
    %v1438 = vunpack.c.l.b16 %v351
    %v1439 = vunpack.c.h.b16 %v351
    %v1440 = vunpack.c.l.b16 %v352
    %v1441 = vunpack.c.h.b16 %v352
    %v1442 = vunpack.c.l.b16 %v353
    %v1443 = vunpack.c.h.b16 %v353
    %v1444 = vunpack.c.l.b16 %v354
    %v1445 = vunpack.c.h.b16 %v354
    %v1446 = vunpack.c.l.b16 %v355
    %v1447 = vunpack.c.h.b16 %v355
    %v1448 = vunpack.c.l.b16 %v356
    %v1449 = vunpack.c.h.b16 %v356
    %v1450 = vunpack.c.l.b16 %v357
    %v1451 = vunpack.c.h.b16 %v357
    %v1452 = vunpack.c.l.b16 %v358
    %v1453 = vunpack.c.h.b16 %v358
    %v1454 = vunpack.c.l.b16 %v359
    %v1455 = vunpack.c.h.b16 %v359
    %v1456 = vunpack.c.l.b16 %v360
    %v1457 = vunpack.c.h.b16 %v360
    %v1458 = vunpack.c.l.b16 %v361
    %v1459 = vunpack.c.h.b16 %v361
    %v1460 = vunpack.c.l.b16 %v362
    %v1461 = vunpack.c.h.b16 %v362
    %v1462 = vunpack.c.l.b16 %v363
    %v1463 = vunpack.c.h.b16 %v363
    %v1464 = vunpack.c.l.b16 %v364
    %v1465 = vunpack.c.h.b16 %v364
    %v1466 = vunpack.c.l.b16 %v365
    %v1467 = vunpack.c.h.b16 %v365
    %v1468 = vunpack.c.l.b16 %v366
    %v1469 = vunpack.c.h.b16 %v366
    %v1470 = vunpack.c.l.b16 %v367
    %v1471 = vunpack.c.h.b16 %v367
    %v1472 = vunpack.c.l.b16 %v368
    %v1473 = vunpack.c.h.b16 %v368
    %v1474 = vunpack.c.l.b16 %v369
    %v1475 = vunpack.c.h.b16 %v369
    %v1476 = vunpack.c.l.b16 %v370
    %v1477 = vunpack.c.h.b16 %v370
    %v1478 = vunpack.c.l.b16 %v371
    %v1479 = vunpack.c.h.b16 %v371
    %v1480 = vunpack.c.l.b16 %v372
    %v1481 = vunpack.c.h.b16 %v372
    %v1482 = vunpack.c.l.b16 %v373
    %v1483 = vunpack.c.h.b16 %v373
    %v1484 = vunpack.c.l.b16 %v374
    %v1485 = vunpack.c.h.b16 %v374
    %v1486 = vunpack.c.l.b16 %v375
    %v1487 = vunpack.c.h.b16 %v375
    %v1488 = vunpack.c.l.b16 %v376
    %v1489 = vunpack.c.h.b16 %v376
    %v1490 = vunpack.c.l.b16 %v377
    %v1491 = vunpack.c.h.b16 %v377
    %v1492 = vunpack.c.l.b16 %v378
    %v1493 = vunpack.c.h.b16 %v378
    %v1494 = vunpack.c.l.b16 %v379
    %v1495 = vunpack.c.h.b16 %v379
    %v1496 = vunpack.c.l.b16 %v380
    %v1497 = vunpack.c.h.b16 %v380
    %v1498 = vunpack.c.l.b16 %v381
    %v1499 = vunpack.c.h.b16 %v381
    %v1500 = vunpack.c.l.b16 %v382
    %v1501 = vunpack.c.h.b16 %v382
    %v1502 = vunpack.c.l.b16 %v383
    %v1503 = vunpack.c.h.b16 %v383
    %v1504 = vunpack.c.l.b16 %v384
    %v1505 = vunpack.c.h.b16 %v384
    %v1506 = vunpack.c.l.b16 %v385
    %v1507 = vunpack.c.h.b16 %v385
    %v1508 = vunpack.c.l.b16 %v386
    %v1509 = vunpack.c.h.b16 %v386
    %v1510 = vunpack.c.l.b16 %v387
    %v1511 = vunpack.c.h.b16 %v387
    %v1512 = vunpack.c.l.b16 %v388
    %v1513 = vunpack.c.h.b16 %v388
    %v1514 = vunpack.c.l.b16 %v389
    %v1515 = vunpack.c.h.b16 %v389
    %v1516 = vunpack.c.l.b16 %v390
    %v1517 = vunpack.c.h.b16 %v390
    %v1518 = vunpack.c.l.b16 %v391
    %v1519 = vunpack.c.h.b16 %v391
    %v1520 = vunpack.c.l.b16 %v392
    %v1521 = vunpack.c.h.b16 %v392
    %v1522 = vunpack.c.l.b16 %v393
    %v1523 = vunpack.c.h.b16 %v393
    %v1524 = vunpack.c.l.b16 %v394
    %v1525 = vunpack.c.h.b16 %v394
    %v1526 = vunpack.c.l.b16 %v395
    %v1527 = vunpack.c.h.b16 %v395
    %v1528 = vunpack.c.l.b16 %v396
    %v1529 = vunpack.c.h.b16 %v396
    %v1530 = vunpack.c.l.b16 %v397
    %v1531 = vunpack.c.h.b16 %v397
    %v1532 = vunpack.c.l.b16 %v398
    %v1533 = vunpack.c.h.b16 %v398
    %v1534 = vunpack.c.l.b16 %v399
    %v1535 = vunpack.c.h.b16 %v399
    %v1536 = vunpack.c.l.b16 %v400
    %v1537 = vunpack.c.h.b16 %v400
    %v1538 = vunpack.c.l.b16 %v401
    %v1539 = vunpack.c.h.b16 %v401
    %v1540 = vunpack.c.l.b16 %v402
    %v1541 = vunpack.c.h.b16 %v402
    %v1542 = vunpack.c.l.b16 %v403
    %v1543 = vunpack.c.h.b16 %v403
    %v1544 = vunpack.c.l.b16 %v404
    %v1545 = vunpack.c.h.b16 %v404
    %v1546 = vunpack.c.l.b16 %v405
    %v1547 = vunpack.c.h.b16 %v405
    %v1548 = vunpack.c.l.b16 %v406
    %v1549 = vunpack.c.h.b16 %v406
    %v1550 = vunpack.c.l.b16 %v407
    %v1551 = vunpack.c.h.b16 %v407
    %v1552 = vunpack.c.l.b16 %v408
    %v1553 = vunpack.c.h.b16 %v408
    %v1554 = vunpack.c.l.b16 %v409
    %v1555 = vunpack.c.h.b16 %v409
    %v1556 = vunpack.c.l.b16 %v410
    %v1557 = vunpack.c.h.b16 %v410
    %v1558 = vunpack.c.l.b16 %v411
    %v1559 = vunpack.c.h.b16 %v411
    %v1560 = vunpack.c.l.b16 %v412
    %v1561 = vunpack.c.h.b16 %v412
    %v1562 = vunpack.c.l.b16 %v413
    %v1563 = vunpack.c.h.b16 %v413
    %v1564 = vunpack.c.l.b16 %v414
    %v1565 = vunpack.c.h.b16 %v414
    %v1566 = vunpack.c.l.b16 %v415
    %v1567 = vunpack.c.h.b16 %v415
    %v1568 = vunpack.c.l.b16 %v416
    %v1569 = vunpack.c.h.b16 %v416
    %v1570 = vunpack.c.l.b16 %v417
    %v1571 = vunpack.c.h.b16 %v417
    %v1572 = vunpack.c.l.b16 %v418
    %v1573 = vunpack.c.h.b16 %v418
    %v1574 = vunpack.c.l.b16 %v419
    %v1575 = vunpack.c.h.b16 %v419
    %v1576 = vunpack.c.l.b16 %v420
    %v1577 = vunpack.c.h.b16 %v420
    %v1578 = vunpack.c.l.b16 %v421
    %v1579 = vunpack.c.h.b16 %v421
    %v1580 = vunpack.c.l.b16 %v422
    %v1581 = vunpack.c.h.b16 %v422
    %v1582 = vunpack.c.l.b16 %v423
    %v1583 = vunpack.c.h.b16 %v423
    %v1584 = vunpack.c.l.b16 %v424
    %v1585 = vunpack.c.h.b16 %v424
    %v1586 = vunpack.c.l.b16 %v425
    %v1587 = vunpack.c.h.b16 %v425
    %v1588 = vunpack.c.l.b16 %v426
    %v1589 = vunpack.c.h.b16 %v426
    %v1590 = vunpack.c.l.b16 %v427
    %v1591 = vunpack.c.h.b16 %v427
    %v1592 = vunpack.c.l.b16 %v428
    %v1593 = vunpack.c.h.b16 %v428
    %v1594 = vunpack.c.l.b16 %v429
    %v1595 = vunpack.c.h.b16 %v429
    %v1596 = vunpack.c.l.b16 %v430
    %v1597 = vunpack.c.h.b16 %v430
    %v1598 = vunpack.c.l.b16 %v431
    %v1599 = vunpack.c.h.b16 %v431
    %v1600 = vunpack.c.l.b16 %v432
    %v1601 = vunpack.c.h.b16 %v432
    %v1602 = vunpack.c.l.b16 %v433
    %v1603 = vunpack.c.h.b16 %v433
    %v1604 = vunpack.c.l.b16 %v434
    %v1605 = vunpack.c.h.b16 %v434
    %v1606 = vunpack.c.l.b16 %v435
    %v1607 = vunpack.c.h.b16 %v435
    %v1608 = vunpack.c.l.b16 %v436
    %v1609 = vunpack.c.h.b16 %v436
    %v1610 = vunpack.c.l.b16 %v437
    %v1611 = vunpack.c.h.b16 %v437
    %v1612 = vunpack.c.l.b16 %v438
    %v1613 = vunpack.c.h.b16 %v438
    %v1614 = vunpack.c.l.b16 %v439
    %v1615 = vunpack.c.h.b16 %v439
    %v1616 = vunpack.c.l.b16 %v440
    %v1617 = vunpack.c.h.b16 %v440
    %v1618 = vunpack.c.l.b16 %v441
    %v1619 = vunpack.c.h.b16 %v441
    %v1620 = vunpack.c.l.b16 %v442
    %v1621 = vunpack.c.h.b16 %v442
    %v1622 = vunpack.c.l.b16 %v443
    %v1623 = vunpack.c.h.b16 %v443
    %v1624 = vunpack.c.l.b16 %v444
    %v1625 = vunpack.c.h.b16 %v444
    %v1626 = vunpack.c.l.b16 %v445
    %v1627 = vunpack.c.h.b16 %v445
    %v1628 = vunpack.c.l.b16 %v446
    %v1629 = vunpack.c.h.b16 %v446
    %v1630 = vunpack.c.l.b16 %v447
    %v1631 = vunpack.c.h.b16 %v447
    %v1632 = vunpack.c.l.b16 %v448
    %v1633 = vunpack.c.h.b16 %v448
    %v1634 = vunpack.c.l.b16 %v449
    %v1635 = vunpack.c.h.b16 %v449
    %v1636 = vunpack.c.l.b16 %v450
    %v1637 = vunpack.c.h.b16 %v450
    %v1638 = vunpack.c.l.b16 %v451
    %v1639 = vunpack.c.h.b16 %v451
    %v1640 = vunpack.c.l.b16 %v452
    %v1641 = vunpack.c.h.b16 %v452
    %v1642 = vunpack.c.l.b16 %v453
    %v1643 = vunpack.c.h.b16 %v453
    %v1644 = vunpack.c.l.b16 %v454
    %v1645 = vunpack.c.h.b16 %v454
    %v1646 = vunpack.c.l.b16 %v455
    %v1647 = vunpack.c.h.b16 %v455
    %v1648 = vunpack.c.l.b16 %v456
    %v1649 = vunpack.c.h.b16 %v456
    %v1650 = vunpack.c.l.b16 %v457
    %v1651 = vunpack.c.h.b16 %v457
    %v1652 = vunpack.c.l.b16 %v458
    %v1653 = vunpack.c.h.b16 %v458
    %v1654 = vunpack.c.l.b16 %v459
    %v1655 = vunpack.c.h.b16 %v459
    %v1656 = vunpack.c.l.b16 %v460
    %v1657 = vunpack.c.h.b16 %v460
    %v1658 = vunpack.c.l.b16 %v461
    %v1659 = vunpack.c.h.b16 %v461
    %v1660 = vunpack.c.l.b16 %v462
    %v1661 = vunpack.c.h.b16 %v462
    %v1662 = vunpack.c.l.b16 %v463
    %v1663 = vunpack.c.h.b16 %v463
    %v1664 = vunpack.c.l.b16 %v464
    %v1665 = vunpack.c.h.b16 %v464
    %v1666 = vunpack.c.l.b16 %v465
    %v1667 = vunpack.c.h.b16 %v465
    %v1668 = vunpack.c.l.b16 %v466
    %v1669 = vunpack.c.h.b16 %v466
    %v1670 = vunpack.c.l.b16 %v467
    %v1671 = vunpack.c.h.b16 %v467
    %v1672 = vunpack.c.l.b16 %v468
    %v1673 = vunpack.c.h.b16 %v468
    %v1674 = vunpack.c.l.b16 %v469
    %v1675 = vunpack.c.h.b16 %v469
    %v1676 = vunpack.c.l.b16 %v470
    %v1677 = vunpack.c.h.b16 %v470
    %v1678 = vunpack.c.l.b16 %v471
    %v1679 = vunpack.c.h.b16 %v471
    %v1680 = vunpack.c.l.b16 %v472
    %v1681 = vunpack.c.h.b16 %v472
    %v1682 = vunpack.c.l.b16 %v473
    %v1683 = vunpack.c.h.b16 %v473
    %v1684 = vunpack.c.l.b16 %v474
    %v1685 = vunpack.c.h.b16 %v474
    %v1686 = vunpack.c.l.b16 %v475
    %v1687 = vunpack.c.h.b16 %v475
    %v1688 = vunpack.c.l.b16 %v476
    %v1689 = vunpack.c.h.b16 %v476
    %v1690 = vunpack.c.l.b16 %v477
    %v1691 = vunpack.c.h.b16 %v477
    %v1692 = vunpack.c.l.b16 %v478
    %v1693 = vunpack.c.h.b16 %v478
    %v1694 = vunpack.c.l.b16 %v479
    %v1695 = vunpack.c.h.b16 %v479
    %v1696 = vunpack.c.l.b16 %v480
    %v1697 = vunpack.c.h.b16 %v480
    %v1698 = vunpack.c.l.b16 %v481
    %v1699 = vunpack.c.h.b16 %v481
    %v1700 = vunpack.c.l.b16 %v482
    %v1701 = vunpack.c.h.b16 %v482
    %v1702 = vunpack.c.l.b16 %v483
    %v1703 = vunpack.c.h.b16 %v483
    %v1704 = vunpack.c.l.b16 %v484
    %v1705 = vunpack.c.h.b16 %v484
    %v1706 = vunpack.c.l.b16 %v485
    %v1707 = vunpack.c.h.b16 %v485
    %v1708 = vunpack.c.l.b16 %v486
    %v1709 = vunpack.c.h.b16 %v486
    %v1710 = vunpack.c.l.b16 %v487
    %v1711 = vunpack.c.h.b16 %v487
    %v1712 = vunpack.c.l.b16 %v488
    %v1713 = vunpack.c.h.b16 %v488
    %v1714 = vunpack.c.l.b16 %v489
    %v1715 = vunpack.c.h.b16 %v489
    %v1716 = vunpack.c.l.b16 %v490
    %v1717 = vunpack.c.h.b16 %v490
    %v1718 = vunpack.c.l.b16 %v491
    %v1719 = vunpack.c.h.b16 %v491
    %v1720 = vunpack.c.l.b16 %v492
    %v1721 = vunpack.c.h.b16 %v492
    %v1722 = vunpack.c.l.b16 %v493
    %v1723 = vunpack.c.h.b16 %v493
    %v1724 = vunpack.c.l.b16 %v494
    %v1725 = vunpack.c.h.b16 %v494
    %v1726 = vunpack.c.l.b16 %v495
    %v1727 = vunpack.c.h.b16 %v495
    %v1728 = vunpack.c.l.b16 %v496
    %v1729 = vunpack.c.h.b16 %v496
    %v1730 = vunpack.c.l.b16 %v497
    %v1731 = vunpack.c.h.b16 %v497
    %v1732 = vunpack.c.l.b16 %v498
    %v1733 = vunpack.c.h.b16 %v498
    %v1734 = vunpack.c.l.b16 %v499
    %v1735 = vunpack.c.h.b16 %v499
    %v1736 = vunpack.c.l.b16 %v500
    %v1737 = vunpack.c.h.b16 %v500
    %v1738 = vunpack.c.l.b16 %v501
    %v1739 = vunpack.c.h.b16 %v501
    %v1740 = vunpack.c.l.b16 %v502
    %v1741 = vunpack.c.h.b16 %v502
    %v1742 = vunpack.c.l.b16 %v503
    %v1743 = vunpack.c.h.b16 %v503
    %v1744 = vunpack.c.l.b16 %v504
    %v1745 = vunpack.c.h.b16 %v504
    %v1746 = vunpack.c.l.b16 %v505
    %v1747 = vunpack.c.h.b16 %v505
    %v1748 = vunpack.c.l.b16 %v506
    %v1749 = vunpack.c.h.b16 %v506
    %v1750 = vunpack.c.l.b16 %v507
    %v1751 = vunpack.c.h.b16 %v507
    %v1752 = vunpack.c.l.b16 %v508
    %v1753 = vunpack.c.h.b16 %v508
    %v1754 = vunpack.c.l.b16 %v509
    %v1755 = vunpack.c.h.b16 %v509
    %v1756 = vunpack.c.l.b16 %v510
    %v1757 = vunpack.c.h.b16 %v510
    %v1758 = vunpack.c.l.b16 %v511
    %v1759 = vunpack.c.h.b16 %v511
    %v1760 = vunpack.c.l.b16 %v512
    %v1761 = vunpack.c.h.b16 %v512
    %v1762 = vunpack.c.l.b16 %v513
    %v1763 = vunpack.c.h.b16 %v513
    %v1764 = vunpack.c.l.b16 %v514
    %v1765 = vunpack.c.h.b16 %v514
    %v1766 = vunpack.c.l.b16 %v515
    %v1767 = vunpack.c.h.b16 %v515
    %v1768 = vunpack.c.l.b16 %v516
    %v1769 = vunpack.c.h.b16 %v516
    %v1770 = vpack.c.b16 %v994, %v986
    %v1771 = vpack.c.b16 %v995, %v987
    %v1772 = vpack.c.b16 %v996, %v988
    %v1773 = vpack.c.b16 %v997, %v989
    %v1774 = vpack.c.b16 %v998, %v990
    %v1775 = vpack.c.b16 %v999, %v991
    %v1776 = vpack.c.b16 %v1000, %v992
    %v1777 = vpack.c.b16 %v1001, %v993
    %v1778 = vpack.c.b16 %v1010, %v1002
    %v1779 = vpack.c.b16 %v1011, %v1003
    %v1780 = vpack.c.b16 %v1012, %v1004
    %v1781 = vpack.c.b16 %v1013, %v1005
    %v1782 = vpack.c.b16 %v1014, %v1006
    %v1783 = vpack.c.b16 %v1015, %v1007
    %v1784 = vpack.c.b16 %v1016, %v1008
    %v1785 = vpack.c.b16 %v1017, %v1009
    %v1786 = vpack.c.b16 %v1026, %v1018
    %v1787 = vpack.c.b16 %v1027, %v1019
    %v1788 = vpack.c.b16 %v1028, %v1020
    %v1789 = vpack.c.b16 %v1029, %v1021
    %v1790 = vpack.c.b16 %v1030, %v1022
    %v1791 = vpack.c.b16 %v1031, %v1023
    %v1792 = vpack.c.b16 %v1032, %v1024
    %v1793 = vpack.c.b16 %v1033, %v1025
    %v1794 = vpack.c.b16 %v1042, %v1034
    %v1795 = vpack.c.b16 %v1043, %v1035
    %v1796 = vpack.c.b16 %v1044, %v1036
    %v1797 = vpack.c.b16 %v1045, %v1037
    %v1798 = vpack.c.b16 %v1046, %v1038
    %v1799 = vpack.c.b16 %v1047, %v1039
    %v1800 = vpack.c.b16 %v1048, %v1040
    %v1801 = vpack.c.b16 %v1049, %v1041
    %v1802 = vpack.c.b16 %v1058, %v1050
    %v1803 = vpack.c.b16 %v1059, %v1051
    %v1804 = vpack.c.b16 %v1060, %v1052
    %v1805 = vpack.c.b16 %v1061, %v1053
    %v1806 = vpack.c.b16 %v1062, %v1054
    %v1807 = vpack.c.b16 %v1063, %v1055
    %v1808 = vpack.c.b16 %v1064, %v1056
    %v1809 = vpack.c.b16 %v1065, %v1057
    %v1810 = vpack.c.b16 %v1074, %v1066
    %v1811 = vpack.c.b16 %v1075, %v1067
    %v1812 = vpack.c.b16 %v1076, %v1068
    %v1813 = vpack.c.b16 %v1077, %v1069
    %v1814 = vpack.c.b16 %v1078, %v1070
    %v1815 = vpack.c.b16 %v1079, %v1071
    %v1816 = vpack.c.b16 %v1080, %v1072
    %v1817 = vpack.c.b16 %v1081, %v1073
    %v1818 = vpack.c.b16 %v1090, %v1082
    %v1819 = vpack.c.b16 %v1091, %v1083
    %v1820 = vpack.c.b16 %v1092, %v1084
    %v1821 = vpack.c.b16 %v1093, %v1085
    %v1822 = vpack.c.b16 %v1094, %v1086
    %v1823 = vpack.c.b16 %v1095, %v1087
    %v1824 = vpack.c.b16 %v1096, %v1088
    %v1825 = vpack.c.b16 %v1097, %v1089
    %v1826 = vpack.c.b16 %v1106, %v1098
    %v1827 = vpack.c.b16 %v1107, %v1099
    %v1828 = vpack.c.b16 %v1108, %v1100
    %v1829 = vpack.c.b16 %v1109, %v1101
    %v1830 = vpack.c.b16 %v1110, %v1102
    %v1831 = vpack.c.b16 %v1111, %v1103
    %v1832 = vpack.c.b16 %v1112, %v1104
    %v1833 = vpack.c.b16 %v1113, %v1105
    %v1834 = vpack.c.b16 %v1122, %v1114
    %v1835 = vpack.c.b16 %v1123, %v1115
    %v1836 = vpack.c.b16 %v1124, %v1116
    %v1837 = vpack.c.b16 %v1125, %v1117
    %v1838 = vpack.c.b16 %v1126, %v1118
    %v1839 = vpack.c.b16 %v1127, %v1119
    %v1840 = vpack.c.b16 %v1128, %v1120
    %v1841 = vpack.c.b16 %v1129, %v1121
    %v1842 = vpack.c.b16 %v1138, %v1130
    %v1843 = vpack.c.b16 %v1139, %v1131
    %v1844 = vpack.c.b16 %v1140, %v1132
    %v1845 = vpack.c.b16 %v1141, %v1133
    %v1846 = vpack.c.b16 %v1142, %v1134
    %v1847 = vpack.c.b16 %v1143, %v1135
    %v1848 = vpack.c.b16 %v1144, %v1136
    %v1849 = vpack.c.b16 %v1145, %v1137
    %v1850 = vpack.c.b16 %v1154, %v1146
    %v1851 = vpack.c.b16 %v1155, %v1147
    %v1852 = vpack.c.b16 %v1156, %v1148
    %v1853 = vpack.c.b16 %v1157, %v1149
    %v1854 = vpack.c.b16 %v1158, %v1150
    %v1855 = vpack.c.b16 %v1159, %v1151
    %v1856 = vpack.c.b16 %v1160, %v1152
    %v1857 = vpack.c.b16 %v1161, %v1153
    %v1858 = vpack.c.b16 %v1170, %v1162
    %v1859 = vpack.c.b16 %v1171, %v1163
    %v1860 = vpack.c.b16 %v1172, %v1164
    %v1861 = vpack.c.b16 %v1173, %v1165
    %v1862 = vpack.c.b16 %v1174, %v1166
    %v1863 = vpack.c.b16 %v1175, %v1167
    %v1864 = vpack.c.b16 %v1176, %v1168
    %v1865 = vpack.c.b16 %v1177, %v1169
    %v1866 = vpack.c.b16 %v1186, %v1178
    %v1867 = vpack.c.b16 %v1187, %v1179
    %v1868 = vpack.c.b16 %v1188, %v1180
    %v1869 = vpack.c.b16 %v1189, %v1181
    %v1870 = vpack.c.b16 %v1190, %v1182
    %v1871 = vpack.c.b16 %v1191, %v1183
    %v1872 = vpack.c.b16 %v1192, %v1184
    %v1873 = vpack.c.b16 %v1193, %v1185
    %v1874 = vpack.c.b16 %v1202, %v1194
    %v1875 = vpack.c.b16 %v1203, %v1195
    %v1876 = vpack.c.b16 %v1204, %v1196
    %v1877 = vpack.c.b16 %v1205, %v1197
    %v1878 = vpack.c.b16 %v1206, %v1198
    %v1879 = vpack.c.b16 %v1207, %v1199
    %v1880 = vpack.c.b16 %v1208, %v1200
    %v1881 = vpack.c.b16 %v1209, %v1201
    %v1882 = vpack.c.b16 %v1218, %v1210
    %v1883 = vpack.c.b16 %v1219, %v1211
    %v1884 = vpack.c.b16 %v1220, %v1212
    %v1885 = vpack.c.b16 %v1221, %v1213
    %v1886 = vpack.c.b16 %v1222, %v1214
    %v1887 = vpack.c.b16 %v1223, %v1215
    %v1888 = vpack.c.b16 %v1224, %v1216
    %v1889 = vpack.c.b16 %v1225, %v1217
    %v1890 = vpack.c.b16 %v1234, %v1226
    %v1891 = vpack.c.b16 %v1235, %v1227
    %v1892 = vpack.c.b16 %v1236, %v1228
    %v1893 = vpack.c.b16 %v1237, %v1229
    %v1894 = vpack.c.b16 %v1238, %v1230
    %v1895 = vpack.c.b16 %v1239, %v1231
    %v1896 = vpack.c.b16 %v1240, %v1232
    %v1897 = vpack.c.b16 %v1241, %v1233
    %v1898 = vpack.c.b16 %v1250, %v1242
    %v1899 = vpack.c.b16 %v1251, %v1243
    %v1900 = vpack.c.b16 %v1252, %v1244
    %v1901 = vpack.c.b16 %v1253, %v1245
    %v1902 = vpack.c.b16 %v1254, %v1246
    %v1903 = vpack.c.b16 %v1255, %v1247
    %v1904 = vpack.c.b16 %v1256, %v1248
    %v1905 = vpack.c.b16 %v1257, %v1249
    %v1906 = vpack.c.b16 %v1266, %v1258
    %v1907 = vpack.c.b16 %v1267, %v1259
    %v1908 = vpack.c.b16 %v1268, %v1260
    %v1909 = vpack.c.b16 %v1269, %v1261
    %v1910 = vpack.c.b16 %v1270, %v1262
    %v1911 = vpack.c.b16 %v1271, %v1263
    %v1912 = vpack.c.b16 %v1272, %v1264
    %v1913 = vpack.c.b16 %v1273, %v1265
    %v1914 = vpack.c.b16 %v1282, %v1274
    %v1915 = vpack.c.b16 %v1283, %v1275
    %v1916 = vpack.c.b16 %v1284, %v1276
    %v1917 = vpack.c.b16 %v1285, %v1277
    %v1918 = vpack.c.b16 %v1286, %v1278
    %v1919 = vpack.c.b16 %v1287, %v1279
    %v1920 = vpack.c.b16 %v1288, %v1280
    %v1921 = vpack.c.b16 %v1289, %v1281
    %v1922 = vpack.c.b16 %v1298, %v1290
    %v1923 = vpack.c.b16 %v1299, %v1291
    %v1924 = vpack.c.b16 %v1300, %v1292
    %v1925 = vpack.c.b16 %v1301, %v1293
    %v1926 = vpack.c.b16 %v1302, %v1294
    %v1927 = vpack.c.b16 %v1303, %v1295
    %v1928 = vpack.c.b16 %v1304, %v1296
    %v1929 = vpack.c.b16 %v1305, %v1297
    %v1930 = vpack.c.b16 %v1314, %v1306
    %v1931 = vpack.c.b16 %v1315, %v1307
    %v1932 = vpack.c.b16 %v1316, %v1308
    %v1933 = vpack.c.b16 %v1317, %v1309
    %v1934 = vpack.c.b16 %v1318, %v1310
    %v1935 = vpack.c.b16 %v1319, %v1311
    %v1936 = vpack.c.b16 %v1320, %v1312
    %v1937 = vpack.c.b16 %v1321, %v1313
    %v1938 = vpack.c.b16 %v1330, %v1322
    %v1939 = vpack.c.b16 %v1331, %v1323
    %v1940 = vpack.c.b16 %v1332, %v1324
    %v1941 = vpack.c.b16 %v1333, %v1325
    %v1942 = vpack.c.b16 %v1334, %v1326
    %v1943 = vpack.c.b16 %v1335, %v1327
    %v1944 = vpack.c.b16 %v1336, %v1328
    %v1945 = vpack.c.b16 %v1337, %v1329
    %v1946 = vpack.c.b16 %v1346, %v1338
    %v1947 = vpack.c.b16 %v1347, %v1339
    %v1948 = vpack.c.b16 %v1348, %v1340
    %v1949 = vpack.c.b16 %v1349, %v1341
    %v1950 = vpack.c.b16 %v1350, %v1342
    %v1951 = vpack.c.b16 %v1351, %v1343
    %v1952 = vpack.c.b16 %v1352, %v1344
    %v1953 = vpack.c.b16 %v1353, %v1345
    %v1954 = vpack.c.b16 %v1362, %v1354
    %v1955 = vpack.c.b16 %v1363, %v1355
    %v1956 = vpack.c.b16 %v1364, %v1356
    %v1957 = vpack.c.b16 %v1365, %v1357
    %v1958 = vpack.c.b16 %v1366, %v1358
    %v1959 = vpack.c.b16 %v1367, %v1359
    %v1960 = vpack.c.b16 %v1368, %v1360
    %v1961 = vpack.c.b16 %v1369, %v1361
    %v1962 = vpack.c.b16 %v1378, %v1370
    %v1963 = vpack.c.b16 %v1379, %v1371
    %v1964 = vpack.c.b16 %v1380, %v1372
    %v1965 = vpack.c.b16 %v1381, %v1373
    %v1966 = vpack.c.b16 %v1382, %v1374
    %v1967 = vpack.c.b16 %v1383, %v1375
    %v1968 = vpack.c.b16 %v1384, %v1376
    %v1969 = vpack.c.b16 %v1385, %v1377
    %v1970 = vpack.c.b16 %v1394, %v1386
    %v1971 = vpack.c.b16 %v1395, %v1387
    %v1972 = vpack.c.b16 %v1396, %v1388
    %v1973 = vpack.c.b16 %v1397, %v1389
    %v1974 = vpack.c.b16 %v1398, %v1390
    %v1975 = vpack.c.b16 %v1399, %v1391
    %v1976 = vpack.c.b16 %v1400, %v1392
    %v1977 = vpack.c.b16 %v1401, %v1393
    %v1978 = vpack.c.b16 %v1410, %v1402
    %v1979 = vpack.c.b16 %v1411, %v1403
    %v1980 = vpack.c.b16 %v1412, %v1404
    %v1981 = vpack.c.b16 %v1413, %v1405
    %v1982 = vpack.c.b16 %v1414, %v1406
    %v1983 = vpack.c.b16 %v1415, %v1407
    %v1984 = vpack.c.b16 %v1416, %v1408
    %v1985 = vpack.c.b16 %v1417, %v1409
    %v1986 = vpack.c.b16 %v1426, %v1418
    %v1987 = vpack.c.b16 %v1427, %v1419
    %v1988 = vpack.c.b16 %v1428, %v1420
    %v1989 = vpack.c.b16 %v1429, %v1421
    %v1990 = vpack.c.b16 %v1430, %v1422
    %v1991 = vpack.c.b16 %v1431, %v1423
    %v1992 = vpack.c.b16 %v1432, %v1424
    %v1993 = vpack.c.b16 %v1433, %v1425
    %v1994 = vpack.c.b16 %v1442, %v1434
    %v1995 = vpack.c.b16 %v1443, %v1435
    %v1996 = vpack.c.b16 %v1444, %v1436
    %v1997 = vpack.c.b16 %v1445, %v1437
    %v1998 = vpack.c.b16 %v1446, %v1438
    %v1999 = vpack.c.b16 %v1447, %v1439
    %v2000 = vpack.c.b16 %v1448, %v1440
    %v2001 = vpack.c.b16 %v1449, %v1441
    %v2002 = vpack.c.b16 %v1458, %v1450
    %v2003 = vpack.c.b16 %v1459, %v1451
    %v2004 = vpack.c.b16 %v1460, %v1452
    %v2005 = vpack.c.b16 %v1461, %v1453
    %v2006 = vpack.c.b16 %v1462, %v1454
    %v2007 = vpack.c.b16 %v1463, %v1455
    %v2008 = vpack.c.b16 %v1464, %v1456
    %v2009 = vpack.c.b16 %v1465, %v1457
    %v2010 = vpack.c.b16 %v1474, %v1466
    %v2011 = vpack.c.b16 %v1475, %v1467
    %v2012 = vpack.c.b16 %v1476, %v1468
    %v2013 = vpack.c.b16 %v1477, %v1469
    %v2014 = vpack.c.b16 %v1478, %v1470
    %v2015 = vpack.c.b16 %v1479, %v1471
    %v2016 = vpack.c.b16 %v1480, %v1472
    %v2017 = vpack.c.b16 %v1481, %v1473
    %v2018 = vpack.c.b16 %v1490, %v1482
    %v2019 = vpack.c.b16 %v1491, %v1483
    %v2020 = vpack.c.b16 %v1492, %v1484
    %v2021 = vpack.c.b16 %v1493, %v1485
    %v2022 = vpack.c.b16 %v1494, %v1486
    %v2023 = vpack.c.b16 %v1495, %v1487
    %v2024 = vpack.c.b16 %v1496, %v1488
    %v2025 = vpack.c.b16 %v1497, %v1489
    %v2026 = vpack.c.b16 %v1506, %v1498
    %v2027 = vpack.c.b16 %v1507, %v1499
    %v2028 = vpack.c.b16 %v1508, %v1500
    %v2029 = vpack.c.b16 %v1509, %v1501
    %v2030 = vpack.c.b16 %v1510, %v1502
    %v2031 = vpack.c.b16 %v1511, %v1503
    %v2032 = vpack.c.b16 %v1512, %v1504
    %v2033 = vpack.c.b16 %v1513, %v1505
    %v2034 = vpack.c.b16 %v1522, %v1514
    %v2035 = vpack.c.b16 %v1523, %v1515
    %v2036 = vpack.c.b16 %v1524, %v1516
    %v2037 = vpack.c.b16 %v1525, %v1517
    %v2038 = vpack.c.b16 %v1526, %v1518
    %v2039 = vpack.c.b16 %v1527, %v1519
    %v2040 = vpack.c.b16 %v1528, %v1520
    %v2041 = vpack.c.b16 %v1529, %v1521
    %v2042 = vpack.c.b16 %v1538, %v1530
    %v2043 = vpack.c.b16 %v1539, %v1531
    %v2044 = vpack.c.b16 %v1540, %v1532
    %v2045 = vpack.c.b16 %v1541, %v1533
    %v2046 = vpack.c.b16 %v1542, %v1534
    %v2047 = vpack.c.b16 %v1543, %v1535
    %v2048 = vpack.c.b16 %v1544, %v1536
    %v2049 = vpack.c.b16 %v1545, %v1537
    %v2050 = vpack.c.b16 %v1554, %v1546
    %v2051 = vpack.c.b16 %v1555, %v1547
    %v2052 = vpack.c.b16 %v1556, %v1548
    %v2053 = vpack.c.b16 %v1557, %v1549
    %v2054 = vpack.c.b16 %v1558, %v1550
    %v2055 = vpack.c.b16 %v1559, %v1551
    %v2056 = vpack.c.b16 %v1560, %v1552
    %v2057 = vpack.c.b16 %v1561, %v1553
    %v2058 = vpack.c.b16 %v1570, %v1562
    %v2059 = vpack.c.b16 %v1571, %v1563
    %v2060 = vpack.c.b16 %v1572, %v1564
    %v2061 = vpack.c.b16 %v1573, %v1565
    %v2062 = vpack.c.b16 %v1574, %v1566
    %v2063 = vpack.c.b16 %v1575, %v1567
    %v2064 = vpack.c.b16 %v1576, %v1568
    %v2065 = vpack.c.b16 %v1577, %v1569
    %v2066 = vpack.c.b16 %v1586, %v1578
    %v2067 = vpack.c.b16 %v1587, %v1579
    %v2068 = vpack.c.b16 %v1588, %v1580
    %v2069 = vpack.c.b16 %v1589, %v1581
    %v2070 = vpack.c.b16 %v1590, %v1582
    %v2071 = vpack.c.b16 %v1591, %v1583
    %v2072 = vpack.c.b16 %v1592, %v1584
    %v2073 = vpack.c.b16 %v1593, %v1585
    %v2074 = vpack.c.b16 %v1602, %v1594
    %v2075 = vpack.c.b16 %v1603, %v1595
    %v2076 = vpack.c.b16 %v1604, %v1596
    %v2077 = vpack.c.b16 %v1605, %v1597
    %v2078 = vpack.c.b16 %v1606, %v1598
    %v2079 = vpack.c.b16 %v1607, %v1599
    %v2080 = vpack.c.b16 %v1608, %v1600
    %v2081 = vpack.c.b16 %v1609, %v1601
    %v2082 = vpack.c.b16 %v1618, %v1610
    %v2083 = vpack.c.b16 %v1619, %v1611
    %v2084 = vpack.c.b16 %v1620, %v1612
    %v2085 = vpack.c.b16 %v1621, %v1613
    %v2086 = vpack.c.b16 %v1622, %v1614
    %v2087 = vpack.c.b16 %v1623, %v1615
    %v2088 = vpack.c.b16 %v1624, %v1616
    %v2089 = vpack.c.b16 %v1625, %v1617
    %v2090 = vpack.c.b16 %v1634, %v1626
    %v2091 = vpack.c.b16 %v1635, %v1627
    %v2092 = vpack.c.b16 %v1636, %v1628
    %v2093 = vpack.c.b16 %v1637, %v1629
    %v2094 = vpack.c.b16 %v1638, %v1630
    %v2095 = vpack.c.b16 %v1639, %v1631
    %v2096 = vpack.c.b16 %v1640, %v1632
    %v2097 = vpack.c.b16 %v1641, %v1633
    %v2098 = vpack.c.b16 %v1650, %v1642
    %v2099 = vpack.c.b16 %v1651, %v1643
    %v2100 = vpack.c.b16 %v1652, %v1644
    %v2101 = vpack.c.b16 %v1653, %v1645
    %v2102 = vpack.c.b16 %v1654, %v1646
    %v2103 = vpack.c.b16 %v1655, %v1647
    %v2104 = vpack.c.b16 %v1656, %v1648
    %v2105 = vpack.c.b16 %v1657, %v1649
    %v2106 = vpack.c.b16 %v1666, %v1658
    %v2107 = vpack.c.b16 %v1667, %v1659
    %v2108 = vpack.c.b16 %v1668, %v1660
    %v2109 = vpack.c.b16 %v1669, %v1661
    %v2110 = vpack.c.b16 %v1670, %v1662
    %v2111 = vpack.c.b16 %v1671, %v1663
    %v2112 = vpack.c.b16 %v1672, %v1664
    %v2113 = vpack.c.b16 %v1673, %v1665
    %v2114 = vpack.c.b16 %v1682, %v1674
    %v2115 = vpack.c.b16 %v1683, %v1675
    %v2116 = vpack.c.b16 %v1684, %v1676
    %v2117 = vpack.c.b16 %v1685, %v1677
    %v2118 = vpack.c.b16 %v1686, %v1678
    %v2119 = vpack.c.b16 %v1687, %v1679
    %v2120 = vpack.c.b16 %v1688, %v1680
    %v2121 = vpack.c.b16 %v1689, %v1681
    %v2122 = vpack.c.b16 %v1698, %v1690
    %v2123 = vpack.c.b16 %v1699, %v1691
    %v2124 = vpack.c.b16 %v1700, %v1692
    %v2125 = vpack.c.b16 %v1701, %v1693
    %v2126 = vpack.c.b16 %v1702, %v1694
    %v2127 = vpack.c.b16 %v1703, %v1695
    %v2128 = vpack.c.b16 %v1704, %v1696
    %v2129 = vpack.c.b16 %v1705, %v1697
    %v2130 = vpack.c.b16 %v1714, %v1706
    %v2131 = vpack.c.b16 %v1715, %v1707
    %v2132 = vpack.c.b16 %v1716, %v1708
    %v2133 = vpack.c.b16 %v1717, %v1709
    %v2134 = vpack.c.b16 %v1718, %v1710
    %v2135 = vpack.c.b16 %v1719, %v1711
    %v2136 = vpack.c.b16 %v1720, %v1712
    %v2137 = vpack.c.b16 %v1721, %v1713
    %v2138 = vpack.c.b16 %v1730, %v1722
    %v2139 = vpack.c.b16 %v1731, %v1723
    %v2140 = vpack.c.b16 %v1732, %v1724
    %v2141 = vpack.c.b16 %v1733, %v1725
    %v2142 = vpack.c.b16 %v1734, %v1726
    %v2143 = vpack.c.b16 %v1735, %v1727
    %v2144 = vpack.c.b16 %v1736, %v1728
    %v2145 = vpack.c.b16 %v1737, %v1729
    %v2146 = vpack.c.b16 %v1746, %v1738
    %v2147 = vpack.c.b16 %v1747, %v1739
    %v2148 = vpack.c.b16 %v1748, %v1740
    %v2149 = vpack.c.b16 %v1749, %v1741
    %v2150 = vpack.c.b16 %v1750, %v1742
    %v2151 = vpack.c.b16 %v1751, %v1743
    %v2152 = vpack.c.b16 %v1752, %v1744
    %v2153 = vpack.c.b16 %v1753, %v1745
    %v2154 = vpack.c.b16 %v1762, %v1754
    %v2155 = vpack.c.b16 %v1763, %v1755
    %v2156 = vpack.c.b16 %v1764, %v1756
    %v2157 = vpack.c.b16 %v1765, %v1757
    %v2158 = vpack.c.b16 %v1766, %v1758
    %v2159 = vpack.c.b16 %v1767, %v1759
    %v2160 = vpack.c.b16 %v1768, %v1760
    %v2161 = vpack.c.b16 %v1769, %v1761
    %vm2554 = vcmask 130048
    %v2556 = vsel %vm2554, %v587, 0
    %2558 = vmatprep.subr.bf16.mxu0 %v1771
    %2559 = vmatpush1.bf16.msra.mxu0 %v1770
    %2560 = vmatprep.subr.bf16.mxu0 %v1779
    %2561 = vmatpush1.bf16.msra.mxu0 %v1778
    %2562 = vmatprep.subr.bf16.mxu0 %v1787
    %2563 = vmatpush1.bf16.msra.mxu0 %v1786
    %2564 = vmatprep.subr.bf16.mxu0 %v1795
    %2565 = vmatpush1.bf16.msra.mxu0 %v1794
    %2566 = vmatprep.subr.bf16.mxu0 %v1803
    %2567 = vmatpush1.bf16.msra.mxu0 %v1802
    %2568 = vmatprep.subr.bf16.mxu0 %v1811
    %2569 = vmatpush1.bf16.msra.mxu0 %v1810
    %2570 = vmatprep.subr.bf16.mxu0 %v1819
    %2571 = vmatpush1.bf16.msra.mxu0 %v1818
    %2572 = vmatprep.subr.bf16.mxu0 %v1827
    %2573 = vmatpush1.bf16.msra.mxu0 %v1826
    %2574 = vmatprep.subr.bf16.mxu0 %v1835
    %2575 = vmatpush1.bf16.msra.mxu0 %v1834
    %2576 = vmatprep.subr.bf16.mxu0 %v1843
    %2577 = vmatpush1.bf16.msra.mxu0 %v1842
    %2578 = vmatprep.subr.bf16.mxu0 %v1851
    %2579 = vmatpush1.bf16.msra.mxu0 %v1850
    %2580 = vmatprep.subr.bf16.mxu0 %v1859
    %2581 = vmatpush1.bf16.msra.mxu0 %v1858
    %2582 = vmatprep.subr.bf16.mxu0 %v1867
    %2583 = vmatpush1.bf16.msra.mxu0 %v1866
    %2584 = vmatprep.subr.bf16.mxu0 %v1875
    %2585 = vmatpush1.bf16.msra.mxu0 %v1874
    %2586 = vmatprep.subr.bf16.mxu0 %v1883
    %2587 = vmatpush1.bf16.msra.mxu0 %v1882
    %2588 = vmatprep.subr.bf16.mxu0 %v1891
    %2589 = vmatpush1.bf16.msra.mxu0 %v1890
    %2590 = vmatprep.mubr.bf16.mxu0 %v582
    %2591 = vmatmul.mubr.bf16.gmra.mrb[0].mxu0 %v581
    %v2592 = vpop.f32.mrb[0].mxu0
    %v2593 = vadd.f32 %v522, %v2592
    %v2594 = vpop.f32.mrb[0].mxu0
    %v2595 = vadd.f32 %v526, %v2594
    %v2596 = vpop.f32.mrb[0].mxu0
    %v2597 = vadd.f32 %v522, %v2596
    %v2598 = vpop.f32.mrb[0].mxu0
    %v2599 = vadd.f32 %v526, %v2598
    %2600 = vdwg.mxu0
    %2601 = vmatprep.subr.bf16.mxu0 %v1899
    %2602 = vmatpush1.bf16.msra.mxu0 %v1898
    %2603 = vmatprep.subr.bf16.mxu0 %v1907
    %2604 = vmatpush1.bf16.msra.mxu0 %v1906
    %2605 = vmatprep.subr.bf16.mxu0 %v1915
    %2606 = vmatpush1.bf16.msra.mxu0 %v1914
    %2607 = vmatprep.subr.bf16.mxu0 %v1923
    %2608 = vmatpush1.bf16.msra.mxu0 %v1922
    %2609 = vmatprep.subr.bf16.mxu0 %v1931
    %2610 = vmatpush1.bf16.msra.mxu0 %v1930
    %2611 = vmatprep.subr.bf16.mxu0 %v1939
    %2612 = vmatpush1.bf16.msra.mxu0 %v1938
    %2613 = vmatprep.subr.bf16.mxu0 %v1947
    %2614 = vmatpush1.bf16.msra.mxu0 %v1946
    %2615 = vmatprep.subr.bf16.mxu0 %v1955
    %2616 = vmatpush1.bf16.msra.mxu0 %v1954
    %2617 = vmatprep.subr.bf16.mxu0 %v1963
    %2618 = vmatpush1.bf16.msra.mxu0 %v1962
    %2619 = vmatprep.subr.bf16.mxu0 %v1971
    %2620 = vmatpush1.bf16.msra.mxu0 %v1970
    %2621 = vmatprep.subr.bf16.mxu0 %v1979
    %2622 = vmatpush1.bf16.msra.mxu0 %v1978
    %2623 = vmatprep.subr.bf16.mxu0 %v1987
    %2624 = vmatpush1.bf16.msra.mxu0 %v1986
    %2625 = vmatprep.subr.bf16.mxu0 %v1995
    %2626 = vmatpush1.bf16.msra.mxu0 %v1994
    %2627 = vmatprep.subr.bf16.mxu0 %v2003
    %2628 = vmatpush1.bf16.msra.mxu0 %v2002
    %2629 = vmatprep.subr.bf16.mxu0 %v2011
    %2630 = vmatpush1.bf16.msra.mxu0 %v2010
    %2631 = vmatprep.subr.bf16.mxu0 %v2019
    %2632 = vmatpush1.bf16.msra.mxu0 %v2018
    %2633 = vmatprep.mubr.bf16.mxu0 %v584
    %2634 = vmatmul.mubr.bf16.gmra.mrb[0].mxu0 %v583
    %v2635 = vpop.f32.mrb[0].mxu0
    %v2636 = vadd.f32 %v2593, %v2635
    %v2637 = vpop.f32.mrb[0].mxu0
    %v2638 = vadd.f32 %v2595, %v2637
    %v2639 = vpop.f32.mrb[0].mxu0
    %v2640 = vadd.f32 %v2597, %v2639
    %v2641 = vpop.f32.mrb[0].mxu0
    %v2642 = vadd.f32 %v2599, %v2641
    %2643 = vdwg.mxu0
    %2644 = vmatprep.subr.bf16.mxu0 %v2027
    %2645 = vmatpush1.bf16.msra.mxu0 %v2026
    %2646 = vmatprep.subr.bf16.mxu0 %v2035
    %2647 = vmatpush1.bf16.msra.mxu0 %v2034
    %2648 = vmatprep.subr.bf16.mxu0 %v2043
    %2649 = vmatpush1.bf16.msra.mxu0 %v2042
    %2650 = vmatprep.subr.bf16.mxu0 %v2051
    %2651 = vmatpush1.bf16.msra.mxu0 %v2050
    %2652 = vmatprep.subr.bf16.mxu0 %v2059
    %2653 = vmatpush1.bf16.msra.mxu0 %v2058
    %2654 = vmatprep.subr.bf16.mxu0 %v2067
    %2655 = vmatpush1.bf16.msra.mxu0 %v2066
    %2656 = vmatprep.subr.bf16.mxu0 %v2075
    %2657 = vmatpush1.bf16.msra.mxu0 %v2074
    %2658 = vmatprep.subr.bf16.mxu0 %v2083
    %2659 = vmatpush1.bf16.msra.mxu0 %v2082
    %2660 = vmatprep.subr.bf16.mxu0 %v2091
    %2661 = vmatpush1.bf16.msra.mxu0 %v2090
    %2662 = vmatprep.subr.bf16.mxu0 %v2099
    %2663 = vmatpush1.bf16.msra.mxu0 %v2098
    %2664 = vmatprep.subr.bf16.mxu0 %v2107
    %2665 = vmatpush1.bf16.msra.mxu0 %v2106
    %2666 = vmatprep.subr.bf16.mxu0 %v2115
    %2667 = vmatpush1.bf16.msra.mxu0 %v2114
    %2668 = vmatprep.subr.bf16.mxu0 %v2123
    %2669 = vmatpush1.bf16.msra.mxu0 %v2122
    %2670 = vmatprep.subr.bf16.mxu0 %v2131
    %2671 = vmatpush1.bf16.msra.mxu0 %v2130
    %2672 = vmatprep.subr.bf16.mxu0 %v2139
    %2673 = vmatpush1.bf16.msra.mxu0 %v2138
    %2674 = vmatprep.subr.bf16.mxu0 %v2147
    %2675 = vmatpush1.bf16.msra.mxu0 %v2146
    %2676 = vmatprep.mubr.bf16.mxu0 %v586
    %2677 = vmatmul.mubr.bf16.gmra.mrb[0].mxu0 %v585
    %v2678 = vpop.f32.mrb[0].mxu0
    %v2679 = vadd.f32 %v2636, %v2678
    %v2680 = vpop.f32.mrb[0].mxu0
    %v2681 = vadd.f32 %v2638, %v2680
    %v2682 = vpop.f32.mrb[0].mxu0
    %v2683 = vadd.f32 %v2640, %v2682
    %v2684 = vpop.f32.mrb[0].mxu0
    %v2685 = vadd.f32 %v2642, %v2684
    %2686 = vdwg.mxu0
    %2687 = vmatprep.subr.bf16.mxu0 %v2155
    %2688 = vmatpush1.bf16.msra.mxu0 %v2154
    %2689 = vmatprep.subr.bf16.mxu0 0
    %2690 = vmatpush1.bf16.msra.mxu0 0
    %2691 = vmatprep.subr.bf16.mxu0 0
    %2692 = vmatpush1.bf16.msra.mxu0 0
    %2693 = vmatprep.subr.bf16.mxu0 0
    %2694 = vmatpush1.bf16.msra.mxu0 0
    %2695 = vmatprep.subr.bf16.mxu0 0
    %2696 = vmatpush1.bf16.msra.mxu0 0
    %2697 = vmatprep.subr.bf16.mxu0 0
    %2698 = vmatpush1.bf16.msra.mxu0 0
    %2699 = vmatprep.subr.bf16.mxu0 0
    %2700 = vmatpush1.bf16.msra.mxu0 0
    %2701 = vmatprep.subr.bf16.mxu0 0
    %2702 = vmatpush1.bf16.msra.mxu0 0
    %2703 = vmatprep.subr.bf16.mxu0 0
    %2704 = vmatpush1.bf16.msra.mxu0 0
    %2705 = vmatprep.subr.bf16.mxu0 0
    %2706 = vmatpush1.bf16.msra.mxu0 0
    %2707 = vmatprep.subr.bf16.mxu0 0
    %2708 = vmatpush1.bf16.msra.mxu0 0
    %2709 = vmatprep.subr.bf16.mxu0 0
    %2710 = vmatpush1.bf16.msra.mxu0 0
    %2711 = vmatprep.subr.bf16.mxu0 0
    %2712 = vmatpush1.bf16.msra.mxu0 0
    %2713 = vmatprep.subr.bf16.mxu0 0
    %2714 = vmatpush1.bf16.msra.mxu0 0
    %2715 = vmatprep.subr.bf16.mxu0 0
    %2716 = vmatpush1.bf16.msra.mxu0 0
    %2717 = vmatprep.subr.bf16.mxu0 0
    %2718 = vmatpush1.bf16.msra.mxu0 0
    %2719 = vmatprep.mubr.bf16.mxu0 0
    %2720 = vmatmul.mubr.bf16.gmra.mrb[0].mxu0 %v2556
    %v2721 = vpop.f32.mrb[0].mxu0
    %v2722 = vadd.f32 %v2679, %v2721
    %v2723 = vpop.f32.mrb[0].mxu0
    %v2724 = vadd.f32 %v2681, %v2723
    %v2725 = vpop.f32.mrb[0].mxu0
    %v2726 = vadd.f32 %v2683, %v2725
    %v2727 = vpop.f32.mrb[0].mxu0
    %v2728 = vadd.f32 %v2685, %v2727
    %2729 = vdwg.mxu0
    %2730 = vmatprep.subr.bf16.mxu0 %v1773
    %2731 = vmatpush1.bf16.msra.mxu0 %v1772
    %2732 = vmatprep.subr.bf16.mxu0 %v1781
    %2733 = vmatpush1.bf16.msra.mxu0 %v1780
    %2734 = vmatprep.subr.bf16.mxu0 %v1789
    %2735 = vmatpush1.bf16.msra.mxu0 %v1788
    %2736 = vmatprep.subr.bf16.mxu0 %v1797
    %2737 = vmatpush1.bf16.msra.mxu0 %v1796
    %2738 = vmatprep.subr.bf16.mxu0 %v1805
    %2739 = vmatpush1.bf16.msra.mxu0 %v1804
    %2740 = vmatprep.subr.bf16.mxu0 %v1813
    %2741 = vmatpush1.bf16.msra.mxu0 %v1812
    %2742 = vmatprep.subr.bf16.mxu0 %v1821
    %2743 = vmatpush1.bf16.msra.mxu0 %v1820
    %2744 = vmatprep.subr.bf16.mxu0 %v1829
    %2745 = vmatpush1.bf16.msra.mxu0 %v1828
    %2746 = vmatprep.subr.bf16.mxu0 %v1837
    %2747 = vmatpush1.bf16.msra.mxu0 %v1836
    %2748 = vmatprep.subr.bf16.mxu0 %v1845
    %2749 = vmatpush1.bf16.msra.mxu0 %v1844
    %2750 = vmatprep.subr.bf16.mxu0 %v1853
    %2751 = vmatpush1.bf16.msra.mxu0 %v1852
    %2752 = vmatprep.subr.bf16.mxu0 %v1861
    %2753 = vmatpush1.bf16.msra.mxu0 %v1860
    %2754 = vmatprep.subr.bf16.mxu0 %v1869
    %2755 = vmatpush1.bf16.msra.mxu0 %v1868
    %2756 = vmatprep.subr.bf16.mxu0 %v1877
    %2757 = vmatpush1.bf16.msra.mxu0 %v1876
    %2758 = vmatprep.subr.bf16.mxu0 %v1885
    %2759 = vmatpush1.bf16.msra.mxu0 %v1884
    %2760 = vmatprep.subr.bf16.mxu0 %v1893
    %2761 = vmatpush1.bf16.msra.mxu0 %v1892
    %2762 = vmatprep.mubr.bf16.mxu0 %v582
    %2763 = vmatmul.mubr.bf16.gmra.mrb[0].mxu0 %v581
    %v2764 = vpop.f32.mrb[0].mxu0
    %v2765 = vadd.f32 %v530, %v2764
    %v2766 = vpop.f32.mrb[0].mxu0
    %v2767 = vadd.f32 %v534, %v2766
    %v2768 = vpop.f32.mrb[0].mxu0
    %v2769 = vadd.f32 %v530, %v2768
    %v2770 = vpop.f32.mrb[0].mxu0
    %v2771 = vadd.f32 %v534, %v2770
    %2772 = vdwg.mxu0
    %2773 = vmatprep.subr.bf16.mxu0 %v1901
    %2774 = vmatpush1.bf16.msra.mxu0 %v1900
    %2775 = vmatprep.subr.bf16.mxu0 %v1909
    %2776 = vmatpush1.bf16.msra.mxu0 %v1908
    %2777 = vmatprep.subr.bf16.mxu0 %v1917
    %2778 = vmatpush1.bf16.msra.mxu0 %v1916
    %2779 = vmatprep.subr.bf16.mxu0 %v1925
    %2780 = vmatpush1.bf16.msra.mxu0 %v1924
    %2781 = vmatprep.subr.bf16.mxu0 %v1933
    %2782 = vmatpush1.bf16.msra.mxu0 %v1932
    %2783 = vmatprep.subr.bf16.mxu0 %v1941
    %2784 = vmatpush1.bf16.msra.mxu0 %v1940
    %2785 = vmatprep.subr.bf16.mxu0 %v1949
    %2786 = vmatpush1.bf16.msra.mxu0 %v1948
    %2787 = vmatprep.subr.bf16.mxu0 %v1957
    %2788 = vmatpush1.bf16.msra.mxu0 %v1956
    %2789 = vmatprep.subr.bf16.mxu0 %v1965
    %2790 = vmatpush1.bf16.msra.mxu0 %v1964
    %2791 = vmatprep.subr.bf16.mxu0 %v1973
    %2792 = vmatpush1.bf16.msra.mxu0 %v1972
    %2793 = vmatprep.subr.bf16.mxu0 %v1981
    %2794 = vmatpush1.bf16.msra.mxu0 %v1980
    %2795 = vmatprep.subr.bf16.mxu0 %v1989
    %2796 = vmatpush1.bf16.msra.mxu0 %v1988
    %2797 = vmatprep.subr.bf16.mxu0 %v1997
    %2798 = vmatpush1.bf16.msra.mxu0 %v1996
    %2799 = vmatprep.subr.bf16.mxu0 %v2005
    %2800 = vmatpush1.bf16.msra.mxu0 %v2004
    %2801 = vmatprep.subr.bf16.mxu0 %v2013
    %2802 = vmatpush1.bf16.msra.mxu0 %v2012
    %2803 = vmatprep.subr.bf16.mxu0 %v2021
    %2804 = vmatpush1.bf16.msra.mxu0 %v2020
    %2805 = vmatprep.mubr.bf16.mxu0 %v584
    %2806 = vmatmul.mubr.bf16.gmra.mrb[0].mxu0 %v583
    %v2807 = vpop.f32.mrb[0].mxu0
    %v2808 = vadd.f32 %v2765, %v2807
    %v2809 = vpop.f32.mrb[0].mxu0
    %v2810 = vadd.f32 %v2767, %v2809
    %v2811 = vpop.f32.mrb[0].mxu0
    %v2812 = vadd.f32 %v2769, %v2811
    %v2813 = vpop.f32.mrb[0].mxu0
    %v2814 = vadd.f32 %v2771, %v2813
    %2815 = vdwg.mxu0
    %2816 = vmatprep.subr.bf16.mxu0 %v2029
    %2817 = vmatpush1.bf16.msra.mxu0 %v2028
    %2818 = vmatprep.subr.bf16.mxu0 %v2037
    %2819 = vmatpush1.bf16.msra.mxu0 %v2036
    %2820 = vmatprep.subr.bf16.mxu0 %v2045
    %2821 = vmatpush1.bf16.msra.mxu0 %v2044
    %2822 = vmatprep.subr.bf16.mxu0 %v2053
    %2823 = vmatpush1.bf16.msra.mxu0 %v2052
    %2824 = vmatprep.subr.bf16.mxu0 %v2061
    %2825 = vmatpush1.bf16.msra.mxu0 %v2060
    %2826 = vmatprep.subr.bf16.mxu0 %v2069
    %2827 = vmatpush1.bf16.msra.mxu0 %v2068
    %2828 = vmatprep.subr.bf16.mxu0 %v2077
    %2829 = vmatpush1.bf16.msra.mxu0 %v2076
    %2830 = vmatprep.subr.bf16.mxu0 %v2085
    %2831 = vmatpush1.bf16.msra.mxu0 %v2084
    %2832 = vmatprep.subr.bf16.mxu0 %v2093
    %2833 = vmatpush1.bf16.msra.mxu0 %v2092
    %2834 = vmatprep.subr.bf16.mxu0 %v2101
    %2835 = vmatpush1.bf16.msra.mxu0 %v2100
    %2836 = vmatprep.subr.bf16.mxu0 %v2109
    %2837 = vmatpush1.bf16.msra.mxu0 %v2108
    %2838 = vmatprep.subr.bf16.mxu0 %v2117
    %2839 = vmatpush1.bf16.msra.mxu0 %v2116
    %2840 = vmatprep.subr.bf16.mxu0 %v2125
    %2841 = vmatpush1.bf16.msra.mxu0 %v2124
    %2842 = vmatprep.subr.bf16.mxu0 %v2133
    %2843 = vmatpush1.bf16.msra.mxu0 %v2132
    %2844 = vmatprep.subr.bf16.mxu0 %v2141
    %2845 = vmatpush1.bf16.msra.mxu0 %v2140
    %2846 = vmatprep.subr.bf16.mxu0 %v2149
    %2847 = vmatpush1.bf16.msra.mxu0 %v2148
    %2848 = vmatprep.mubr.bf16.mxu0 %v586
    %2849 = vmatmul.mubr.bf16.gmra.mrb[0].mxu0 %v585
    %v2850 = vpop.f32.mrb[0].mxu0
    %v2851 = vadd.f32 %v2808, %v2850
    %v2852 = vpop.f32.mrb[0].mxu0
    %v2853 = vadd.f32 %v2810, %v2852
    %v2854 = vpop.f32.mrb[0].mxu0
    %v2855 = vadd.f32 %v2812, %v2854
    %v2856 = vpop.f32.mrb[0].mxu0
    %v2857 = vadd.f32 %v2814, %v2856
    %2858 = vdwg.mxu0
    %2859 = vmatprep.subr.bf16.mxu0 %v2157
    %2860 = vmatpush1.bf16.msra.mxu0 %v2156
    %2861 = vmatprep.subr.bf16.mxu0 0
    %2862 = vmatpush1.bf16.msra.mxu0 0
    %2863 = vmatprep.subr.bf16.mxu0 0
    %2864 = vmatpush1.bf16.msra.mxu0 0
    %2865 = vmatprep.subr.bf16.mxu0 0
    %2866 = vmatpush1.bf16.msra.mxu0 0
    %2867 = vmatprep.subr.bf16.mxu0 0
    %2868 = vmatpush1.bf16.msra.mxu0 0
    %2869 = vmatprep.subr.bf16.mxu0 0
    %2870 = vmatpush1.bf16.msra.mxu0 0
    %2871 = vmatprep.subr.bf16.mxu0 0
    %2872 = vmatpush1.bf16.msra.mxu0 0
    %2873 = vmatprep.subr.bf16.mxu0 0
    %2874 = vmatpush1.bf16.msra.mxu0 0
    %2875 = vmatprep.subr.bf16.mxu0 0
    %2876 = vmatpush1.bf16.msra.mxu0 0
    %2877 = vmatprep.subr.bf16.mxu0 0
    %2878 = vmatpush1.bf16.msra.mxu0 0
    %2879 = vmatprep.subr.bf16.mxu0 0
    %2880 = vmatpush1.bf16.msra.mxu0 0
    %2881 = vmatprep.subr.bf16.mxu0 0
    %2882 = vmatpush1.bf16.msra.mxu0 0
    %2883 = vmatprep.subr.bf16.mxu0 0
    %2884 = vmatpush1.bf16.msra.mxu0 0
    %2885 = vmatprep.subr.bf16.mxu0 0
    %2886 = vmatpush1.bf16.msra.mxu0 0
    %2887 = vmatprep.subr.bf16.mxu0 0
    %2888 = vmatpush1.bf16.msra.mxu0 0
    %2889 = vmatprep.subr.bf16.mxu0 0
    %2890 = vmatpush1.bf16.msra.mxu0 0
    %2891 = vmatprep.mubr.bf16.mxu0 0
    %2892 = vmatmul.mubr.bf16.gmra.mrb[0].mxu0 %v2556
    %v2893 = vpop.f32.mrb[0].mxu0
    %v2894 = vadd.f32 %v2851, %v2893
    %v2895 = vpop.f32.mrb[0].mxu0
    %v2896 = vadd.f32 %v2853, %v2895
    %v2897 = vpop.f32.mrb[0].mxu0
    %v2898 = vadd.f32 %v2855, %v2897
    %v2899 = vpop.f32.mrb[0].mxu0
    %v2900 = vadd.f32 %v2857, %v2899
    %2901 = vdwg.mxu0
    %2902 = vmatprep.subr.bf16.mxu0 %v1775
    %2903 = vmatpush1.bf16.msra.mxu0 %v1774
    %2904 = vmatprep.subr.bf16.mxu0 %v1783
    %2905 = vmatpush1.bf16.msra.mxu0 %v1782
    %2906 = vmatprep.subr.bf16.mxu0 %v1791
    %2907 = vmatpush1.bf16.msra.mxu0 %v1790
    %2908 = vmatprep.subr.bf16.mxu0 %v1799
    %2909 = vmatpush1.bf16.msra.mxu0 %v1798
    %2910 = vmatprep.subr.bf16.mxu0 %v1807
    %2911 = vmatpush1.bf16.msra.mxu0 %v1806
    %2912 = vmatprep.subr.bf16.mxu0 %v1815
    %2913 = vmatpush1.bf16.msra.mxu0 %v1814
    %2914 = vmatprep.subr.bf16.mxu0 %v1823
    %2915 = vmatpush1.bf16.msra.mxu0 %v1822
    %2916 = vmatprep.subr.bf16.mxu0 %v1831
    %2917 = vmatpush1.bf16.msra.mxu0 %v1830
    %2918 = vmatprep.subr.bf16.mxu0 %v1839
    %2919 = vmatpush1.bf16.msra.mxu0 %v1838
    %2920 = vmatprep.subr.bf16.mxu0 %v1847
    %2921 = vmatpush1.bf16.msra.mxu0 %v1846
    %2922 = vmatprep.subr.bf16.mxu0 %v1855
    %2923 = vmatpush1.bf16.msra.mxu0 %v1854
    %2924 = vmatprep.subr.bf16.mxu0 %v1863
    %2925 = vmatpush1.bf16.msra.mxu0 %v1862
    %2926 = vmatprep.subr.bf16.mxu0 %v1871
    %2927 = vmatpush1.bf16.msra.mxu0 %v1870
    %2928 = vmatprep.subr.bf16.mxu0 %v1879
    %2929 = vmatpush1.bf16.msra.mxu0 %v1878
    %2930 = vmatprep.subr.bf16.mxu0 %v1887
    %2931 = vmatpush1.bf16.msra.mxu0 %v1886
    %2932 = vmatprep.subr.bf16.mxu0 %v1895
    %2933 = vmatpush1.bf16.msra.mxu0 %v1894
    %2934 = vmatprep.mubr.bf16.mxu0 %v582
    %2935 = vmatmul.mubr.bf16.gmra.mrb[0].mxu0 %v581
    %v2936 = vpop.f32.mrb[0].mxu0
    %v2937 = vadd.f32 %v538, %v2936
    %v2938 = vpop.f32.mrb[0].mxu0
    %v2939 = vadd.f32 %v542, %v2938
    %v2940 = vpop.f32.mrb[0].mxu0
    %v2941 = vadd.f32 %v538, %v2940
    %v2942 = vpop.f32.mrb[0].mxu0
    %v2943 = vadd.f32 %v542, %v2942
    %2944 = vdwg.mxu0
    %2945 = vmatprep.subr.bf16.mxu0 %v1903
    %2946 = vmatpush1.bf16.msra.mxu0 %v1902
    %2947 = vmatprep.subr.bf16.mxu0 %v1911
    %2948 = vmatpush1.bf16.msra.mxu0 %v1910
    %2949 = vmatprep.subr.bf16.mxu0 %v1919
    %2950 = vmatpush1.bf16.msra.mxu0 %v1918
    %2951 = vmatprep.subr.bf16.mxu0 %v1927
    %2952 = vmatpush1.bf16.msra.mxu0 %v1926
    %2953 = vmatprep.subr.bf16.mxu0 %v1935
    %2954 = vmatpush1.bf16.msra.mxu0 %v1934
    %2955 = vmatprep.subr.bf16.mxu0 %v1943
    %2956 = vmatpush1.bf16.msra.mxu0 %v1942
    %2957 = vmatprep.subr.bf16.mxu0 %v1951
    %2958 = vmatpush1.bf16.msra.mxu0 %v1950
    %2959 = vmatprep.subr.bf16.mxu0 %v1959
    %2960 = vmatpush1.bf16.msra.mxu0 %v1958
    %2961 = vmatprep.subr.bf16.mxu0 %v1967
    %2962 = vmatpush1.bf16.msra.mxu0 %v1966
    %2963 = vmatprep.subr.bf16.mxu0 %v1975
    %2964 = vmatpush1.bf16.msra.mxu0 %v1974
    %2965 = vmatprep.subr.bf16.mxu0 %v1983
    %2966 = vmatpush1.bf16.msra.mxu0 %v1982
    %2967 = vmatprep.subr.bf16.mxu0 %v1991
    %2968 = vmatpush1.bf16.msra.mxu0 %v1990
    %2969 = vmatprep.subr.bf16.mxu0 %v1999
    %2970 = vmatpush1.bf16.msra.mxu0 %v1998
    %2971 = vmatprep.subr.bf16.mxu0 %v2007
    %2972 = vmatpush1.bf16.msra.mxu0 %v2006
    %2973 = vmatprep.subr.bf16.mxu0 %v2015
    %2974 = vmatpush1.bf16.msra.mxu0 %v2014
    %2975 = vmatprep.subr.bf16.mxu0 %v2023
    %2976 = vmatpush1.bf16.msra.mxu0 %v2022
    %2977 = vmatprep.mubr.bf16.mxu0 %v584
    %2978 = vmatmul.mubr.bf16.gmra.mrb[0].mxu0 %v583
    %v2979 = vpop.f32.mrb[0].mxu0
    %v2980 = vadd.f32 %v2937, %v2979
    %v2981 = vpop.f32.mrb[0].mxu0
    %v2982 = vadd.f32 %v2939, %v2981
    %v2983 = vpop.f32.mrb[0].mxu0
    %v2984 = vadd.f32 %v2941, %v2983
    %v2985 = vpop.f32.mrb[0].mxu0
    %v2986 = vadd.f32 %v2943, %v2985
    %2987 = vdwg.mxu0
    %2988 = vmatprep.subr.bf16.mxu0 %v2031
    %2989 = vmatpush1.bf16.msra.mxu0 %v2030
    %2990 = vmatprep.subr.bf16.mxu0 %v2039
    %2991 = vmatpush1.bf16.msra.mxu0 %v2038
    %2992 = vmatprep.subr.bf16.mxu0 %v2047
    %2993 = vmatpush1.bf16.msra.mxu0 %v2046
    %2994 = vmatprep.subr.bf16.mxu0 %v2055
    %2995 = vmatpush1.bf16.msra.mxu0 %v2054
    %2996 = vmatprep.subr.bf16.mxu0 %v2063
    %2997 = vmatpush1.bf16.msra.mxu0 %v2062
    %2998 = vmatprep.subr.bf16.mxu0 %v2071
    %2999 = vmatpush1.bf16.msra.mxu0 %v2070
    %3000 = vmatprep.subr.bf16.mxu0 %v2079
    %3001 = vmatpush1.bf16.msra.mxu0 %v2078
    %3002 = vmatprep.subr.bf16.mxu0 %v2087
    %3003 = vmatpush1.bf16.msra.mxu0 %v2086
    %3004 = vmatprep.subr.bf16.mxu0 %v2095
    %3005 = vmatpush1.bf16.msra.mxu0 %v2094
    %3006 = vmatprep.subr.bf16.mxu0 %v2103
    %3007 = vmatpush1.bf16.msra.mxu0 %v2102
    %3008 = vmatprep.subr.bf16.mxu0 %v2111
    %3009 = vmatpush1.bf16.msra.mxu0 %v2110
    %3010 = vmatprep.subr.bf16.mxu0 %v2119
    %3011 = vmatpush1.bf16.msra.mxu0 %v2118
    %3012 = vmatprep.subr.bf16.mxu0 %v2127
    %3013 = vmatpush1.bf16.msra.mxu0 %v2126
    %3014 = vmatprep.subr.bf16.mxu0 %v2135
    %3015 = vmatpush1.bf16.msra.mxu0 %v2134
    %3016 = vmatprep.subr.bf16.mxu0 %v2143
    %3017 = vmatpush1.bf16.msra.mxu0 %v2142
    %3018 = vmatprep.subr.bf16.mxu0 %v2151
    %3019 = vmatpush1.bf16.msra.mxu0 %v2150
    %3020 = vmatprep.mubr.bf16.mxu0 %v586
    %3021 = vmatmul.mubr.bf16.gmra.mrb[0].mxu0 %v585
    %v3022 = vpop.f32.mrb[0].mxu0
    %v3023 = vadd.f32 %v2980, %v3022
    %v3024 = vpop.f32.mrb[0].mxu0
    %v3025 = vadd.f32 %v2982, %v3024
    %v3026 = vpop.f32.mrb[0].mxu0
    %v3027 = vadd.f32 %v2984, %v3026
    %v3028 = vpop.f32.mrb[0].mxu0
    %v3029 = vadd.f32 %v2986, %v3028
    %3030 = vdwg.mxu0
    %3031 = vmatprep.subr.bf16.mxu0 %v2159
    %3032 = vmatpush1.bf16.msra.mxu0 %v2158
    %3033 = vmatprep.subr.bf16.mxu0 0
    %3034 = vmatpush1.bf16.msra.mxu0 0
    %3035 = vmatprep.subr.bf16.mxu0 0
    %3036 = vmatpush1.bf16.msra.mxu0 0
    %3037 = vmatprep.subr.bf16.mxu0 0
    %3038 = vmatpush1.bf16.msra.mxu0 0
    %3039 = vmatprep.subr.bf16.mxu0 0
    %3040 = vmatpush1.bf16.msra.mxu0 0
    %3041 = vmatprep.subr.bf16.mxu0 0
    %3042 = vmatpush1.bf16.msra.mxu0 0
    %3043 = vmatprep.subr.bf16.mxu0 0
    %3044 = vmatpush1.bf16.msra.mxu0 0
    %3045 = vmatprep.subr.bf16.mxu0 0
    %3046 = vmatpush1.bf16.msra.mxu0 0
    %3047 = vmatprep.subr.bf16.mxu0 0
    %3048 = vmatpush1.bf16.msra.mxu0 0
    %3049 = vmatprep.subr.bf16.mxu0 0
    %3050 = vmatpush1.bf16.msra.mxu0 0
    %3051 = vmatprep.subr.bf16.mxu0 0
    %3052 = vmatpush1.bf16.msra.mxu0 0
    %3053 = vmatprep.subr.bf16.mxu0 0
    %3054 = vmatpush1.bf16.msra.mxu0 0
    %3055 = vmatprep.subr.bf16.mxu0 0
    %3056 = vmatpush1.bf16.msra.mxu0 0
    %3057 = vmatprep.subr.bf16.mxu0 0
    %3058 = vmatpush1.bf16.msra.mxu0 0
    %3059 = vmatprep.subr.bf16.mxu0 0
    %3060 = vmatpush1.bf16.msra.mxu0 0
    %3061 = vmatprep.subr.bf16.mxu0 0
    %3062 = vmatpush1.bf16.msra.mxu0 0
    %3063 = vmatprep.mubr.bf16.mxu0 0
    %3064 = vmatmul.mubr.bf16.gmra.mrb[0].mxu0 %v2556
    %v3065 = vpop.f32.mrb[0].mxu0
    %v3066 = vadd.f32 %v3023, %v3065
    %v3067 = vpop.f32.mrb[0].mxu0
    %v3068 = vadd.f32 %v3025, %v3067
    %v3069 = vpop.f32.mrb[0].mxu0
    %v3070 = vadd.f32 %v3027, %v3069
    %v3071 = vpop.f32.mrb[0].mxu0
    %v3072 = vadd.f32 %v3029, %v3071
    %3073 = vdwg.mxu0
    %3074 = vmatprep.subr.bf16.mxu0 %v1777
    %3075 = vmatpush1.bf16.msra.mxu0 %v1776
    %3076 = vmatprep.subr.bf16.mxu0 %v1785
    %3077 = vmatpush1.bf16.msra.mxu0 %v1784
    %3078 = vmatprep.subr.bf16.mxu0 %v1793
    %3079 = vmatpush1.bf16.msra.mxu0 %v1792
    %3080 = vmatprep.subr.bf16.mxu0 %v1801
    %3081 = vmatpush1.bf16.msra.mxu0 %v1800
    %3082 = vmatprep.subr.bf16.mxu0 %v1809
    %3083 = vmatpush1.bf16.msra.mxu0 %v1808
    %3084 = vmatprep.subr.bf16.mxu0 %v1817
    %3085 = vmatpush1.bf16.msra.mxu0 %v1816
    %3086 = vmatprep.subr.bf16.mxu0 %v1825
    %3087 = vmatpush1.bf16.msra.mxu0 %v1824
    %3088 = vmatprep.subr.bf16.mxu0 %v1833
    %3089 = vmatpush1.bf16.msra.mxu0 %v1832
    %3090 = vmatprep.subr.bf16.mxu0 %v1841
    %3091 = vmatpush1.bf16.msra.mxu0 %v1840
    %3092 = vmatprep.subr.bf16.mxu0 %v1849
    %3093 = vmatpush1.bf16.msra.mxu0 %v1848
    %3094 = vmatprep.subr.bf16.mxu0 %v1857
    %3095 = vmatpush1.bf16.msra.mxu0 %v1856
    %3096 = vmatprep.subr.bf16.mxu0 %v1865
    %3097 = vmatpush1.bf16.msra.mxu0 %v1864
    %3098 = vmatprep.subr.bf16.mxu0 %v1873
    %3099 = vmatpush1.bf16.msra.mxu0 %v1872
    %3100 = vmatprep.subr.bf16.mxu0 %v1881
    %3101 = vmatpush1.bf16.msra.mxu0 %v1880
    %3102 = vmatprep.subr.bf16.mxu0 %v1889
    %3103 = vmatpush1.bf16.msra.mxu0 %v1888
    %3104 = vmatprep.subr.bf16.mxu0 %v1897
    %3105 = vmatpush1.bf16.msra.mxu0 %v1896
    %3106 = vmatprep.mubr.bf16.mxu0 %v582
    %3107 = vmatmul.mubr.bf16.gmra.mrb[0].mxu0 %v581
    %v3108 = vpop.f32.mrb[0].mxu0
    %v3109 = vadd.f32 %v546, %v3108
    %v3110 = vpop.f32.mrb[0].mxu0
    %v3111 = vadd.f32 %v550, %v3110
    %v3112 = vpop.f32.mrb[0].mxu0
    %v3113 = vadd.f32 %v546, %v3112
    %v3114 = vpop.f32.mrb[0].mxu0
    %v3115 = vadd.f32 %v550, %v3114
    %3116 = vdwg.mxu0
    %3117 = vmatprep.subr.bf16.mxu0 %v1905
    %3118 = vmatpush1.bf16.msra.mxu0 %v1904
    %3119 = vmatprep.subr.bf16.mxu0 %v1913
    %3120 = vmatpush1.bf16.msra.mxu0 %v1912
    %3121 = vmatprep.subr.bf16.mxu0 %v1921
    %3122 = vmatpush1.bf16.msra.mxu0 %v1920
    %3123 = vmatprep.subr.bf16.mxu0 %v1929
    %3124 = vmatpush1.bf16.msra.mxu0 %v1928
    %3125 = vmatprep.subr.bf16.mxu0 %v1937
    %3126 = vmatpush1.bf16.msra.mxu0 %v1936
    %3127 = vmatprep.subr.bf16.mxu0 %v1945
    %3128 = vmatpush1.bf16.msra.mxu0 %v1944
    %3129 = vmatprep.subr.bf16.mxu0 %v1953
    %3130 = vmatpush1.bf16.msra.mxu0 %v1952
    %3131 = vmatprep.subr.bf16.mxu0 %v1961
    %3132 = vmatpush1.bf16.msra.mxu0 %v1960
    %3133 = vmatprep.subr.bf16.mxu0 %v1969
    %3134 = vmatpush1.bf16.msra.mxu0 %v1968
    %3135 = vmatprep.subr.bf16.mxu0 %v1977
    %3136 = vmatpush1.bf16.msra.mxu0 %v1976
    %3137 = vmatprep.subr.bf16.mxu0 %v1985
    %3138 = vmatpush1.bf16.msra.mxu0 %v1984
    %3139 = vmatprep.subr.bf16.mxu0 %v1993
    %3140 = vmatpush1.bf16.msra.mxu0 %v1992
    %3141 = vmatprep.subr.bf16.mxu0 %v2001
    %3142 = vmatpush1.bf16.msra.mxu0 %v2000
    %3143 = vmatprep.subr.bf16.mxu0 %v2009
    %3144 = vmatpush1.bf16.msra.mxu0 %v2008
    %3145 = vmatprep.subr.bf16.mxu0 %v2017
    %3146 = vmatpush1.bf16.msra.mxu0 %v2016
    %3147 = vmatprep.subr.bf16.mxu0 %v2025
    %3148 = vmatpush1.bf16.msra.mxu0 %v2024
    %3149 = vmatprep.mubr.bf16.mxu0 %v584
    %3150 = vmatmul.mubr.bf16.gmra.mrb[0].mxu0 %v583
    %v3151 = vpop.f32.mrb[0].mxu0
    %v3152 = vadd.f32 %v3109, %v3151
    %v3153 = vpop.f32.mrb[0].mxu0
    %v3154 = vadd.f32 %v3111, %v3153
    %v3155 = vpop.f32.mrb[0].mxu0
    %v3156 = vadd.f32 %v3113, %v3155
    %v3157 = vpop.f32.mrb[0].mxu0
    %v3158 = vadd.f32 %v3115, %v3157
    %3159 = vdwg.mxu0
    %3160 = vmatprep.subr.bf16.mxu0 %v2033
    %3161 = vmatpush1.bf16.msra.mxu0 %v2032
    %3162 = vmatprep.subr.bf16.mxu0 %v2041
    %3163 = vmatpush1.bf16.msra.mxu0 %v2040
    %3164 = vmatprep.subr.bf16.mxu0 %v2049
    %3165 = vmatpush1.bf16.msra.mxu0 %v2048
    %3166 = vmatprep.subr.bf16.mxu0 %v2057
    %3167 = vmatpush1.bf16.msra.mxu0 %v2056
    %3168 = vmatprep.subr.bf16.mxu0 %v2065
    %3169 = vmatpush1.bf16.msra.mxu0 %v2064
    %3170 = vmatprep.subr.bf16.mxu0 %v2073
    %3171 = vmatpush1.bf16.msra.mxu0 %v2072
    %3172 = vmatprep.subr.bf16.mxu0 %v2081
    %3173 = vmatpush1.bf16.msra.mxu0 %v2080
    %3174 = vmatprep.subr.bf16.mxu0 %v2089
    %3175 = vmatpush1.bf16.msra.mxu0 %v2088
    %3176 = vmatprep.subr.bf16.mxu0 %v2097
    %3177 = vmatpush1.bf16.msra.mxu0 %v2096
    %3178 = vmatprep.subr.bf16.mxu0 %v2105
    %3179 = vmatpush1.bf16.msra.mxu0 %v2104
    %3180 = vmatprep.subr.bf16.mxu0 %v2113
    %3181 = vmatpush1.bf16.msra.mxu0 %v2112
    %3182 = vmatprep.subr.bf16.mxu0 %v2121
    %3183 = vmatpush1.bf16.msra.mxu0 %v2120
    %3184 = vmatprep.subr.bf16.mxu0 %v2129
    %3185 = vmatpush1.bf16.msra.mxu0 %v2128
    %3186 = vmatprep.subr.bf16.mxu0 %v2137
    %3187 = vmatpush1.bf16.msra.mxu0 %v2136
    %3188 = vmatprep.subr.bf16.mxu0 %v2145
    %3189 = vmatpush1.bf16.msra.mxu0 %v2144
    %3190 = vmatprep.subr.bf16.mxu0 %v2153
    %3191 = vmatpush1.bf16.msra.mxu0 %v2152
    %3192 = vmatprep.mubr.bf16.mxu0 %v586
    %3193 = vmatmul.mubr.bf16.gmra.mrb[0].mxu0 %v585
    %v3194 = vpop.f32.mrb[0].mxu0
    %v3195 = vadd.f32 %v3152, %v3194
    %v3196 = vpop.f32.mrb[0].mxu0
    %v3197 = vadd.f32 %v3154, %v3196
    %v3198 = vpop.f32.mrb[0].mxu0
    %v3199 = vadd.f32 %v3156, %v3198
    %v3200 = vpop.f32.mrb[0].mxu0
    %v3201 = vadd.f32 %v3158, %v3200
    %3202 = vdwg.mxu0
    %3203 = vmatprep.subr.bf16.mxu0 %v2161
    %3204 = vmatpush1.bf16.msra.mxu0 %v2160
    %3205 = vmatprep.subr.bf16.mxu0 0
    %3206 = vmatpush1.bf16.msra.mxu0 0
    %3207 = vmatprep.subr.bf16.mxu0 0
    %3208 = vmatpush1.bf16.msra.mxu0 0
    %3209 = vmatprep.subr.bf16.mxu0 0
    %3210 = vmatpush1.bf16.msra.mxu0 0
    %3211 = vmatprep.subr.bf16.mxu0 0
    %3212 = vmatpush1.bf16.msra.mxu0 0
    %3213 = vmatprep.subr.bf16.mxu0 0
    %3214 = vmatpush1.bf16.msra.mxu0 0
    %3215 = vmatprep.subr.bf16.mxu0 0
    %3216 = vmatpush1.bf16.msra.mxu0 0
    %3217 = vmatprep.subr.bf16.mxu0 0
    %3218 = vmatpush1.bf16.msra.mxu0 0
    %3219 = vmatprep.subr.bf16.mxu0 0
    %3220 = vmatpush1.bf16.msra.mxu0 0
    %3221 = vmatprep.subr.bf16.mxu0 0
    %3222 = vmatpush1.bf16.msra.mxu0 0
    %3223 = vmatprep.subr.bf16.mxu0 0
    %3224 = vmatpush1.bf16.msra.mxu0 0
    %3225 = vmatprep.subr.bf16.mxu0 0
    %3226 = vmatpush1.bf16.msra.mxu0 0
    %3227 = vmatprep.subr.bf16.mxu0 0
    %3228 = vmatpush1.bf16.msra.mxu0 0
    %3229 = vmatprep.subr.bf16.mxu0 0
    %3230 = vmatpush1.bf16.msra.mxu0 0
    %3231 = vmatprep.subr.bf16.mxu0 0
    %3232 = vmatpush1.bf16.msra.mxu0 0
    %3233 = vmatprep.subr.bf16.mxu0 0
    %3234 = vmatpush1.bf16.msra.mxu0 0
    %3235 = vmatprep.mubr.bf16.mxu0 0
    %3236 = vmatmul.mubr.bf16.gmra.mrb[0].mxu0 %v2556
    %v3237 = vpop.f32.mrb[0].mxu0
    %v3238 = vadd.f32 %v3195, %v3237
    %v3239 = vpop.f32.mrb[0].mxu0
    %v3240 = vadd.f32 %v3197, %v3239
    %v3241 = vpop.f32.mrb[0].mxu0
    %v3242 = vadd.f32 %v3199, %v3241
    %v3243 = vpop.f32.mrb[0].mxu0
    %v3244 = vadd.f32 %v3201, %v3243
    %3245 = vdwg.mxu0
    %v3246 = vmax.f32 %v2722, 0.0
    %v3247 = vmax.f32 %v2724, 0.0
    %v3248 = vmax.f32 %v2894, 0.0
    %v3249 = vmax.f32 %v2896, 0.0
    %v3250 = vmax.f32 %v3066, 0.0
    %v3251 = vmax.f32 %v3068, 0.0
    %v3252 = vmax.f32 %v3238, 0.0
    %v3253 = vmax.f32 %v3240, 0.0
    %v3254 = vmax.f32 %v2726, 0.0
    %v3255 = vmax.f32 %v2728, 0.0
    %v3256 = vmax.f32 %v2898, 0.0
    %v3257 = vmax.f32 %v2900, 0.0
    %v3258 = vmax.f32 %v3070, 0.0
    %v3259 = vmax.f32 %v3072, 0.0
    %v3260 = vmax.f32 %v3242, 0.0
    %v3261 = vmax.f32 %v3244, 0.0
    %v3262 = vpack.c.bf16 %v3254, %v3246
    %v3263 = vpack.c.bf16 %v3255, %v3247
    %v3264 = vpack.c.bf16 %v3256, %v3248
    %v3265 = vpack.c.bf16 %v3257, %v3249
    %v3266 = vpack.c.bf16 %v3258, %v3250
    %v3267 = vpack.c.bf16 %v3259, %v3251
    %v3268 = vpack.c.bf16 %v3260, %v3252
    %v3269 = vpack.c.bf16 %v3261, %v3253
    %v3270 = vld [vmem:[#allocation8] sm:$0xff]
    %v3271 = vld [vmem:[#allocation8 + $0x8] sm:$0xff]
    %v3272 = vld [vmem:[#allocation8 + $0x10] sm:$0xff]
    %v3273 = vld [vmem:[#allocation8 + $0x18] sm:$0xff]
    %v3274 = vld [vmem:[#allocation8 + $0x20] sm:$0xff]
    %v3275 = vld [vmem:[#allocation8 + $0x28] sm:$0xff]
    %v3276 = vld [vmem:[#allocation8 + $0x30] sm:$0xff]
    %v3277 = vld [vmem:[#allocation8 + $0x38] sm:$0xff]
    %v3278 = vld [vmem:[#allocation8 + $0x40] sm:$0xff]
    %v3279 = vld [vmem:[#allocation8 + $0x48] sm:$0xff]
    %v3280 = vld [vmem:[#allocation8 + $0x50] sm:$0xff]
    %v3281 = vld [vmem:[#allocation8 + $0x58] sm:$0xff]
    %v3282 = vld [vmem:[#allocation8 + $0x60] sm:$0xff]
    %v3283 = vld [vmem:[#allocation8 + $0x68] sm:$0xff]
    %v3284 = vld [vmem:[#allocation8 + $0x70] sm:$0xff]
    %v3285 = vld [vmem:[#allocation8 + $0x78] sm:$0xff]
    %v3286 = vld [vmem:[#allocation8 + $0x80] sm:$0xff]
    %v3287 = vld [vmem:[#allocation8 + $0x88] sm:$0xff]
    %v3288 = vld [vmem:[#allocation8 + $0x90] sm:$0xff]
    %v3289 = vld [vmem:[#allocation8 + $0x98] sm:$0xff]
    %v3290 = vld [vmem:[#allocation8 + $0xa0] sm:$0xff]
    %v3291 = vld [vmem:[#allocation8 + $0xa8] sm:$0xff]
    %v3292 = vld [vmem:[#allocation8 + $0xb0] sm:$0xff]
    %v3293 = vld [vmem:[#allocation8 + $0xb8] sm:$0xff]
    %v3294 = vld [vmem:[#allocation8 + $0xc0] sm:$0xff]
    %v3295 = vld [vmem:[#allocation8 + $0xc8] sm:$0xff]
    %v3296 = vld [vmem:[#allocation8 + $0xd0] sm:$0xff]
    %v3297 = vld [vmem:[#allocation8 + $0xd8] sm:$0xff]
    %v3298 = vld [vmem:[#allocation8 + $0xe0] sm:$0xff]
    %v3299 = vld [vmem:[#allocation8 + $0xe8] sm:$0xff]
    %v3300 = vld [vmem:[#allocation8 + $0xf0] sm:$0xff]
    %v3301 = vld [vmem:[#allocation8 + $0xf8] sm:$0xff]
    %v3302 = vld [vmem:[#allocation8 + $0x100] sm:$0xff]
    %v3303 = vld [vmem:[#allocation8 + $0x108] sm:$0xff]
    %v3304 = vld [vmem:[#allocation8 + $0x110] sm:$0xff]
    %v3305 = vld [vmem:[#allocation8 + $0x118] sm:$0xff]
    %v3306 = vld [vmem:[#allocation8 + $0x120] sm:$0xff]
    %v3307 = vld [vmem:[#allocation8 + $0x128] sm:$0xff]
    %v3308 = vld [vmem:[#allocation8 + $0x130] sm:$0xff]
    %v3309 = vld [vmem:[#allocation8 + $0x138] sm:$0xff]
    %v3310 = vld [vmem:[#allocation8 + $0x140] sm:$0xff]
    %v3311 = vld [vmem:[#allocation8 + $0x148] sm:$0xff]
    %v3312 = vld [vmem:[#allocation8 + $0x150] sm:$0xff]
    %v3313 = vld [vmem:[#allocation8 + $0x158] sm:$0xff]
    %v3314 = vld [vmem:[#allocation8 + $0x160] sm:$0xff]
    %v3315 = vld [vmem:[#allocation8 + $0x168] sm:$0xff]
    %v3316 = vld [vmem:[#allocation8 + $0x170] sm:$0xff]
    %v3317 = vld [vmem:[#allocation8 + $0x178] sm:$0xff]
    %v3318 = vld [vmem:[#allocation8 + $0x180] sm:$0xff]
    %v3319 = vld [vmem:[#allocation8 + $0x188] sm:$0xff]
    %v3320 = vld [vmem:[#allocation8 + $0x190] sm:$0xff]
    %v3321 = vld [vmem:[#allocation8 + $0x198] sm:$0xff]
    %v3322 = vld [vmem:[#allocation8 + $0x1a0] sm:$0xff]
    %v3323 = vld [vmem:[#allocation8 + $0x1a8] sm:$0xff]
    %v3324 = vld [vmem:[#allocation8 + $0x1b0] sm:$0xff]
    %v3325 = vld [vmem:[#allocation8 + $0x1b8] sm:$0xff]
    %v3326 = vld [vmem:[#allocation8 + $0x1c0] sm:$0xff]
    %v3327 = vld [vmem:[#allocation8 + $0x1c8] sm:$0xff]
    %v3328 = vld [vmem:[#allocation8 + $0x1d0] sm:$0xff]
    %v3329 = vld [vmem:[#allocation8 + $0x1d8] sm:$0xff]
    %v3330 = vld [vmem:[#allocation8 + $0x1e0] sm:$0xff]
    %v3331 = vld [vmem:[#allocation8 + $0x1e8] sm:$0xff]
    %v3332 = vld [vmem:[#allocation8 + $0x1f0] sm:$0xff]
    %v3333 = vld [vmem:[#allocation8 + $0x1f8] sm:$0xff]
    %v3334 = vld [vmem:[#allocation8 + $0x200] sm:$0xff]
    %v3335 = vld [vmem:[#allocation8 + $0x208] sm:$0xff]
    %v3336 = vld [vmem:[#allocation8 + $0x210] sm:$0xff]
    %v3337 = vld [vmem:[#allocation8 + $0x218] sm:$0xff]
    %v3338 = vld [vmem:[#allocation8 + $0x220] sm:$0xff]
    %v3339 = vld [vmem:[#allocation8 + $0x228] sm:$0xff]
    %v3340 = vld [vmem:[#allocation8 + $0x230] sm:$0xff]
    %v3341 = vld [vmem:[#allocation8 + $0x238] sm:$0xff]
    %v3342 = vld [vmem:[#allocation8 + $0x240] sm:$0xff]
    %v3343 = vld [vmem:[#allocation8 + $0x248] sm:$0xff]
    %v3344 = vld [vmem:[#allocation8 + $0x250] sm:$0xff]
    %v3345 = vld [vmem:[#allocation8 + $0x258] sm:$0xff]
    %v3346 = vld [vmem:[#allocation8 + $0x260] sm:$0xff]
    %v3347 = vld [vmem:[#allocation8 + $0x268] sm:$0xff]
    %v3348 = vld [vmem:[#allocation8 + $0x270] sm:$0xff]
    %v3349 = vld [vmem:[#allocation8 + $0x278] sm:$0xff]
    %v3350 = vld [vmem:[#allocation8 + $0x280] sm:$0xff]
    %v3351 = vld [vmem:[#allocation8 + $0x288] sm:$0xff]
    %v3352 = vld [vmem:[#allocation8 + $0x290] sm:$0xff]
    %v3353 = vld [vmem:[#allocation8 + $0x298] sm:$0xff]
    %v3354 = vld [vmem:[#allocation8 + $0x2a0] sm:$0xff]
    %v3355 = vld [vmem:[#allocation8 + $0x2a8] sm:$0xff]
    %v3356 = vld [vmem:[#allocation8 + $0x2b0] sm:$0xff]
    %v3357 = vld [vmem:[#allocation8 + $0x2b8] sm:$0xff]
    %v3358 = vld [vmem:[#allocation8 + $0x2c0] sm:$0xff]
    %v3359 = vld [vmem:[#allocation8 + $0x2c8] sm:$0xff]
    %v3360 = vld [vmem:[#allocation8 + $0x2d0] sm:$0xff]
    %v3361 = vld [vmem:[#allocation8 + $0x2d8] sm:$0xff]
    %v3362 = vld [vmem:[#allocation8 + $0x2e0] sm:$0xff]
    %v3363 = vld [vmem:[#allocation8 + $0x2e8] sm:$0xff]
    %v3364 = vld [vmem:[#allocation8 + $0x2f0] sm:$0xff]
    %v3365 = vld [vmem:[#allocation8 + $0x2f8] sm:$0xff]
    %v3366 = vld [vmem:[#allocation8 + $0x300] sm:$0xff]
    %v3367 = vld [vmem:[#allocation8 + $0x308] sm:$0xff]
    %v3368 = vld [vmem:[#allocation8 + $0x310] sm:$0xff]
    %v3369 = vld [vmem:[#allocation8 + $0x318] sm:$0xff]
    %v3370 = vld [vmem:[#allocation8 + $0x320] sm:$0xff]
    %v3371 = vld [vmem:[#allocation8 + $0x328] sm:$0xff]
    %v3372 = vld [vmem:[#allocation8 + $0x330] sm:$0xff]
    %v3373 = vld [vmem:[#allocation8 + $0x338] sm:$0xff]
    %v3374 = vld [vmem:[#allocation8 + $0x340] sm:$0xff]
    %v3375 = vld [vmem:[#allocation8 + $0x348] sm:$0xff]
    %v3376 = vld [vmem:[#allocation8 + $0x350] sm:$0xff]
    %v3377 = vld [vmem:[#allocation8 + $0x358] sm:$0xff]
    %v3378 = vld [vmem:[#allocation8 + $0x360] sm:$0xff]
    %v3379 = vld [vmem:[#allocation8 + $0x368] sm:$0xff]
    %v3380 = vld [vmem:[#allocation8 + $0x370] sm:$0xff]
    %v3381 = vld [vmem:[#allocation8 + $0x378] sm:$0xff]
    %v3382 = vld [vmem:[#allocation8 + $0x380] sm:$0xff]
    %v3383 = vld [vmem:[#allocation8 + $0x388] sm:$0xff]
    %v3384 = vld [vmem:[#allocation8 + $0x390] sm:$0xff]
    %v3385 = vld [vmem:[#allocation8 + $0x398] sm:$0xff]
    %v3386 = vld [vmem:[#allocation8 + $0x3a0] sm:$0xff]
    %v3387 = vld [vmem:[#allocation8 + $0x3a8] sm:$0xff]
    %v3388 = vld [vmem:[#allocation8 + $0x3b0] sm:$0xff]
    %v3389 = vld [vmem:[#allocation8 + $0x3b8] sm:$0xff]
    %v3390 = vld [vmem:[#allocation8 + $0x3c0] sm:$0xff]
    %v3391 = vld [vmem:[#allocation8 + $0x3c8] sm:$0xff]
    %v3392 = vld [vmem:[#allocation8 + $0x3d0] sm:$0xff]
    %v3393 = vld [vmem:[#allocation8 + $0x3d8] sm:$0xff]
    %v3394 = vld [vmem:[#allocation8 + $0x3e0] sm:$0xff]
    %v3395 = vld [vmem:[#allocation8 + $0x3e8] sm:$0xff]
    %v3396 = vld [vmem:[#allocation8 + $0x3f0] sm:$0xff]
    %v3397 = vld [vmem:[#allocation8 + $0x3f8] sm:$0xff]
    %v3398 = vld [vmem:[#allocation8 + $0x400] sm:$0xff]
    %v3399 = vld [vmem:[#allocation8 + $0x408] sm:$0xff]
    %v3400 = vld [vmem:[#allocation8 + $0x410] sm:$0xff]
    %v3401 = vld [vmem:[#allocation8 + $0x418] sm:$0xff]
    %v3402 = vld [vmem:[#allocation8 + $0x420] sm:$0xff]
    %v3403 = vld [vmem:[#allocation8 + $0x428] sm:$0xff]
    %v3404 = vld [vmem:[#allocation8 + $0x430] sm:$0xff]
    %v3405 = vld [vmem:[#allocation8 + $0x438] sm:$0xff]
    %v3406 = vld [vmem:[#allocation8 + $0x440] sm:$0xff]
    %v3407 = vld [vmem:[#allocation8 + $0x448] sm:$0xff]
    %v3408 = vld [vmem:[#allocation8 + $0x450] sm:$0xff]
    %v3409 = vld [vmem:[#allocation8 + $0x458] sm:$0xff]
    %v3410 = vld [vmem:[#allocation8 + $0x460] sm:$0xff]
    %v3411 = vld [vmem:[#allocation8 + $0x468] sm:$0xff]
    %v3412 = vld [vmem:[#allocation8 + $0x470] sm:$0xff]
    %v3413 = vld [vmem:[#allocation8 + $0x478] sm:$0xff]
    %v3414 = vld [vmem:[#allocation8 + $0x480] sm:$0xff]
    %v3415 = vld [vmem:[#allocation8 + $0x488] sm:$0xff]
    %v3416 = vld [vmem:[#allocation8 + $0x490] sm:$0xff]
    %v3417 = vld [vmem:[#allocation8 + $0x498] sm:$0xff]
    %v3418 = vld [vmem:[#allocation8 + $0x4a0] sm:$0xff]
    %v3419 = vld [vmem:[#allocation8 + $0x4a8] sm:$0xff]
    %v3420 = vld [vmem:[#allocation8 + $0x4b0] sm:$0xff]
    %v3421 = vld [vmem:[#allocation8 + $0x4b8] sm:$0xff]
    %v3422 = vld [vmem:[#allocation8 + $0x4c0] sm:$0xff]
    %v3423 = vld [vmem:[#allocation8 + $0x4c8] sm:$0xff]
    %v3424 = vld [vmem:[#allocation8 + $0x4d0] sm:$0xff]
    %v3425 = vld [vmem:[#allocation8 + $0x4d8] sm:$0xff]
    %v3426 = vld [vmem:[#allocation8 + $0x4e0] sm:$0xff]
    %v3427 = vld [vmem:[#allocation8 + $0x4e8] sm:$0xff]
    %v3428 = vld [vmem:[#allocation8 + $0x4f0] sm:$0xff]
    %v3429 = vld [vmem:[#allocation8 + $0x4f8] sm:$0xff]
    %v3430 = vld [vmem:[#allocation8 + $0x500] sm:$0xff]
    %v3431 = vld [vmem:[#allocation8 + $0x508] sm:$0xff]
    %v3432 = vld [vmem:[#allocation8 + $0x510] sm:$0xff]
    %v3433 = vld [vmem:[#allocation8 + $0x518] sm:$0xff]
    %v3434 = vld [vmem:[#allocation8 + $0x520] sm:$0xff]
    %v3435 = vld [vmem:[#allocation8 + $0x528] sm:$0xff]
    %v3436 = vld [vmem:[#allocation8 + $0x530] sm:$0xff]
    %v3437 = vld [vmem:[#allocation8 + $0x538] sm:$0xff]
    %v3438 = vld [vmem:[#allocation8 + $0x540] sm:$0xff]
    %v3439 = vld [vmem:[#allocation8 + $0x548] sm:$0xff]
    %v3440 = vld [vmem:[#allocation8 + $0x550] sm:$0xff]
    %v3441 = vld [vmem:[#allocation8 + $0x558] sm:$0xff]
    %v3442 = vld [vmem:[#allocation8 + $0x560] sm:$0xff]
    %v3443 = vld [vmem:[#allocation8 + $0x568] sm:$0xff]
    %v3444 = vld [vmem:[#allocation8 + $0x570] sm:$0xff]
    %v3445 = vld [vmem:[#allocation8 + $0x578] sm:$0xff]
    %v3446 = vld [vmem:[#allocation8 + $0x580] sm:$0xff]
    %v3447 = vld [vmem:[#allocation8 + $0x588] sm:$0xff]
    %v3448 = vld [vmem:[#allocation8 + $0x590] sm:$0xff]
    %v3449 = vld [vmem:[#allocation8 + $0x598] sm:$0xff]
    %v3450 = vld [vmem:[#allocation8 + $0x5a0] sm:$0xff]
    %v3451 = vld [vmem:[#allocation8 + $0x5a8] sm:$0xff]
    %v3452 = vld [vmem:[#allocation8 + $0x5b0] sm:$0xff]
    %v3453 = vld [vmem:[#allocation8 + $0x5b8] sm:$0xff]
    %v3454 = vld [vmem:[#allocation8 + $0x5c0] sm:$0xff]
    %v3455 = vld [vmem:[#allocation8 + $0x5c8] sm:$0xff]
    %v3456 = vld [vmem:[#allocation8 + $0x5d0] sm:$0xff]
    %v3457 = vld [vmem:[#allocation8 + $0x5d8] sm:$0xff]
    %v3458 = vld [vmem:[#allocation8 + $0x5e0] sm:$0xff]
    %v3459 = vld [vmem:[#allocation8 + $0x5e8] sm:$0xff]
    %v3460 = vld [vmem:[#allocation8 + $0x5f0] sm:$0xff]
    %v3461 = vld [vmem:[#allocation8 + $0x5f8] sm:$0xff]
    %v3462 = vld [vmem:[#allocation8 + $0x600] sm:$0xff]
    %v3463 = vld [vmem:[#allocation8 + $0x608] sm:$0xff]
    %v3464 = vld [vmem:[#allocation8 + $0x610] sm:$0xff]
    %v3465 = vld [vmem:[#allocation8 + $0x618] sm:$0xff]
    %v3466 = vld [vmem:[#allocation8 + $0x620] sm:$0xff]
    %v3467 = vld [vmem:[#allocation8 + $0x628] sm:$0xff]
    %v3468 = vld [vmem:[#allocation8 + $0x630] sm:$0xff]
    %v3469 = vld [vmem:[#allocation8 + $0x638] sm:$0xff]
    %v3470 = vld [vmem:[#allocation8 + $0x640] sm:$0xff]
    %v3471 = vld [vmem:[#allocation8 + $0x648] sm:$0xff]
    %v3472 = vld [vmem:[#allocation8 + $0x650] sm:$0xff]
    %v3473 = vld [vmem:[#allocation8 + $0x658] sm:$0xff]
    %v3474 = vld [vmem:[#allocation8 + $0x660] sm:$0xff]
    %v3475 = vld [vmem:[#allocation8 + $0x668] sm:$0xff]
    %v3476 = vld [vmem:[#allocation8 + $0x670] sm:$0xff]
    %v3477 = vld [vmem:[#allocation8 + $0x678] sm:$0xff]
    %v3478 = vld [vmem:[#allocation8 + $0x680] sm:$0xff]
    %v3479 = vld [vmem:[#allocation8 + $0x688] sm:$0xff]
    %v3480 = vld [vmem:[#allocation8 + $0x690] sm:$0xff]
    %v3481 = vld [vmem:[#allocation8 + $0x698] sm:$0xff]
    %v3482 = vld [vmem:[#allocation8 + $0x6a0] sm:$0xff]
    %v3483 = vld [vmem:[#allocation8 + $0x6a8] sm:$0xff]
    %v3484 = vld [vmem:[#allocation8 + $0x6b0] sm:$0xff]
    %v3485 = vld [vmem:[#allocation8 + $0x6b8] sm:$0xff]
    %v3486 = vld [vmem:[#allocation8 + $0x6c0] sm:$0xff]
    %v3487 = vld [vmem:[#allocation8 + $0x6c8] sm:$0xff]
    %v3488 = vld [vmem:[#allocation8 + $0x6d0] sm:$0xff]
    %v3489 = vld [vmem:[#allocation8 + $0x6d8] sm:$0xff]
    %v3490 = vld [vmem:[#allocation8 + $0x6e0] sm:$0xff]
    %v3491 = vld [vmem:[#allocation8 + $0x6e8] sm:$0xff]
    %v3492 = vld [vmem:[#allocation8 + $0x6f0] sm:$0xff]
    %v3493 = vld [vmem:[#allocation8 + $0x6f8] sm:$0xff]
    %v3494 = vld [vmem:[#allocation8 + $0x700] sm:$0xff]
    %v3495 = vld [vmem:[#allocation8 + $0x708] sm:$0xff]
    %v3496 = vld [vmem:[#allocation8 + $0x710] sm:$0xff]
    %v3497 = vld [vmem:[#allocation8 + $0x718] sm:$0xff]
    %v3498 = vld [vmem:[#allocation8 + $0x720] sm:$0xff]
    %v3499 = vld [vmem:[#allocation8 + $0x728] sm:$0xff]
    %v3500 = vld [vmem:[#allocation8 + $0x730] sm:$0xff]
    %v3501 = vld [vmem:[#allocation8 + $0x738] sm:$0xff]
    %v3502 = vld [vmem:[#allocation8 + $0x740] sm:$0xff]
    %v3503 = vld [vmem:[#allocation8 + $0x748] sm:$0xff]
    %v3504 = vld [vmem:[#allocation8 + $0x750] sm:$0xff]
    %v3505 = vld [vmem:[#allocation8 + $0x758] sm:$0xff]
    %v3506 = vld [vmem:[#allocation8 + $0x760] sm:$0xff]
    %v3507 = vld [vmem:[#allocation8 + $0x768] sm:$0xff]
    %v3508 = vld [vmem:[#allocation8 + $0x770] sm:$0xff]
    %v3509 = vld [vmem:[#allocation8 + $0x778] sm:$0xff]
    %v3510 = vld [vmem:[#allocation8 + $0x780] sm:$0xff]
    %v3511 = vld [vmem:[#allocation8 + $0x788] sm:$0xff]
    %v3512 = vld [vmem:[#allocation8 + $0x790] sm:$0xff]
    %v3513 = vld [vmem:[#allocation8 + $0x798] sm:$0xff]
    %v3514 = vld [vmem:[#allocation8 + $0x7a0] sm:$0xff]
    %v3515 = vld [vmem:[#allocation8 + $0x7a8] sm:$0xff]
    %v3516 = vld [vmem:[#allocation8 + $0x7b0] sm:$0xff]
    %v3517 = vld [vmem:[#allocation8 + $0x7b8] sm:$0xff]
    %v3518 = vld [vmem:[#allocation8 + $0x7c0] sm:$0xff]
    %v3519 = vld [vmem:[#allocation8 + $0x7c8] sm:$0xff]
    %v3520 = vld [vmem:[#allocation8 + $0x7d0] sm:$0xff]
    %v3521 = vld [vmem:[#allocation8 + $0x7d8] sm:$0xff]
    %v3522 = vld [vmem:[#allocation8 + $0x7e0] sm:$0xff]
    %v3523 = vld [vmem:[#allocation8 + $0x7e8] sm:$0xff]
    %v3524 = vld [vmem:[#allocation8 + $0x7f0] sm:$0xff]
    %v3525 = vld [vmem:[#allocation8 + $0x7f8] sm:$0xff]
    %v3526 = vld [vmem:[#allocation10] sm:$0xf]
    %v3528 = vlaneseq
    %v3529 = vshrl.u32 %v3528, 7
    %v3530 = vsub.s32 0, %v3529
    %v3531 = vrot.slane %v3526, %v3530
    %v3532 = vlaneseq
    %v3533 = vshrl.u32 %v3532, 7
    %v3534 = vsub.s32 1, %v3533
    %v3535 = vrot.slane %v3526, %v3534
    %v3536 = vlaneseq
    %v3537 = vshrl.u32 %v3536, 7
    %v3538 = vsub.s32 2, %v3537
    %v3539 = vrot.slane %v3526, %v3538
    %v3540 = vlaneseq
    %v3541 = vshrl.u32 %v3540, 7
    %v3542 = vsub.s32 3, %v3541
    %v3543 = vrot.slane %v3526, %v3542
    %v3804 = vunpack.c.l.b16 %v3270
    %v3805 = vunpack.c.h.b16 %v3270
    %v3806 = vunpack.c.l.b16 %v3271
    %v3807 = vunpack.c.h.b16 %v3271
    %v3808 = vunpack.c.l.b16 %v3272
    %v3809 = vunpack.c.h.b16 %v3272
    %v3810 = vunpack.c.l.b16 %v3273
    %v3811 = vunpack.c.h.b16 %v3273
    %v3812 = vunpack.c.l.b16 %v3274
    %v3813 = vunpack.c.h.b16 %v3274
    %v3814 = vunpack.c.l.b16 %v3275
    %v3815 = vunpack.c.h.b16 %v3275
    %v3816 = vunpack.c.l.b16 %v3276
    %v3817 = vunpack.c.h.b16 %v3276
    %v3818 = vunpack.c.l.b16 %v3277
    %v3819 = vunpack.c.h.b16 %v3277
    %v3820 = vunpack.c.l.b16 %v3278
    %v3821 = vunpack.c.h.b16 %v3278
    %v3822 = vunpack.c.l.b16 %v3279
    %v3823 = vunpack.c.h.b16 %v3279
    %v3824 = vunpack.c.l.b16 %v3280
    %v3825 = vunpack.c.h.b16 %v3280
    %v3826 = vunpack.c.l.b16 %v3281
    %v3827 = vunpack.c.h.b16 %v3281
    %v3828 = vunpack.c.l.b16 %v3282
    %v3829 = vunpack.c.h.b16 %v3282
    %v3830 = vunpack.c.l.b16 %v3283
    %v3831 = vunpack.c.h.b16 %v3283
    %v3832 = vunpack.c.l.b16 %v3284
    %v3833 = vunpack.c.h.b16 %v3284
    %v3834 = vunpack.c.l.b16 %v3285
    %v3835 = vunpack.c.h.b16 %v3285
    %v3836 = vunpack.c.l.b16 %v3286
    %v3837 = vunpack.c.h.b16 %v3286
    %v3838 = vunpack.c.l.b16 %v3287
    %v3839 = vunpack.c.h.b16 %v3287
    %v3840 = vunpack.c.l.b16 %v3288
    %v3841 = vunpack.c.h.b16 %v3288
    %v3842 = vunpack.c.l.b16 %v3289
    %v3843 = vunpack.c.h.b16 %v3289
    %v3844 = vunpack.c.l.b16 %v3290
    %v3845 = vunpack.c.h.b16 %v3290
    %v3846 = vunpack.c.l.b16 %v3291
    %v3847 = vunpack.c.h.b16 %v3291
    %v3848 = vunpack.c.l.b16 %v3292
    %v3849 = vunpack.c.h.b16 %v3292
    %v3850 = vunpack.c.l.b16 %v3293
    %v3851 = vunpack.c.h.b16 %v3293
    %v3852 = vunpack.c.l.b16 %v3294
    %v3853 = vunpack.c.h.b16 %v3294
    %v3854 = vunpack.c.l.b16 %v3295
    %v3855 = vunpack.c.h.b16 %v3295
    %v3856 = vunpack.c.l.b16 %v3296
    %v3857 = vunpack.c.h.b16 %v3296
    %v3858 = vunpack.c.l.b16 %v3297
    %v3859 = vunpack.c.h.b16 %v3297
    %v3860 = vunpack.c.l.b16 %v3298
    %v3861 = vunpack.c.h.b16 %v3298
    %v3862 = vunpack.c.l.b16 %v3299
    %v3863 = vunpack.c.h.b16 %v3299
    %v3864 = vunpack.c.l.b16 %v3300
    %v3865 = vunpack.c.h.b16 %v3300
    %v3866 = vunpack.c.l.b16 %v3301
    %v3867 = vunpack.c.h.b16 %v3301
    %v3868 = vunpack.c.l.b16 %v3302
    %v3869 = vunpack.c.h.b16 %v3302
    %v3870 = vunpack.c.l.b16 %v3303
    %v3871 = vunpack.c.h.b16 %v3303
    %v3872 = vunpack.c.l.b16 %v3304
    %v3873 = vunpack.c.h.b16 %v3304
    %v3874 = vunpack.c.l.b16 %v3305
    %v3875 = vunpack.c.h.b16 %v3305
    %v3876 = vunpack.c.l.b16 %v3306
    %v3877 = vunpack.c.h.b16 %v3306
    %v3878 = vunpack.c.l.b16 %v3307
    %v3879 = vunpack.c.h.b16 %v3307
    %v3880 = vunpack.c.l.b16 %v3308
    %v3881 = vunpack.c.h.b16 %v3308
    %v3882 = vunpack.c.l.b16 %v3309
    %v3883 = vunpack.c.h.b16 %v3309
    %v3884 = vunpack.c.l.b16 %v3310
    %v3885 = vunpack.c.h.b16 %v3310
    %v3886 = vunpack.c.l.b16 %v3311
    %v3887 = vunpack.c.h.b16 %v3311
    %v3888 = vunpack.c.l.b16 %v3312
    %v3889 = vunpack.c.h.b16 %v3312
    %v3890 = vunpack.c.l.b16 %v3313
    %v3891 = vunpack.c.h.b16 %v3313
    %v3892 = vunpack.c.l.b16 %v3314
    %v3893 = vunpack.c.h.b16 %v3314
    %v3894 = vunpack.c.l.b16 %v3315
    %v3895 = vunpack.c.h.b16 %v3315
    %v3896 = vunpack.c.l.b16 %v3316
    %v3897 = vunpack.c.h.b16 %v3316
    %v3898 = vunpack.c.l.b16 %v3317
    %v3899 = vunpack.c.h.b16 %v3317
    %v3900 = vunpack.c.l.b16 %v3318
    %v3901 = vunpack.c.h.b16 %v3318
    %v3902 = vunpack.c.l.b16 %v3319
    %v3903 = vunpack.c.h.b16 %v3319
    %v3904 = vunpack.c.l.b16 %v3320
    %v3905 = vunpack.c.h.b16 %v3320
    %v3906 = vunpack.c.l.b16 %v3321
    %v3907 = vunpack.c.h.b16 %v3321
    %v3908 = vunpack.c.l.b16 %v3322
    %v3909 = vunpack.c.h.b16 %v3322
    %v3910 = vunpack.c.l.b16 %v3323
    %v3911 = vunpack.c.h.b16 %v3323
    %v3912 = vunpack.c.l.b16 %v3324
    %v3913 = vunpack.c.h.b16 %v3324
    %v3914 = vunpack.c.l.b16 %v3325
    %v3915 = vunpack.c.h.b16 %v3325
    %v3916 = vunpack.c.l.b16 %v3326
    %v3917 = vunpack.c.h.b16 %v3326
    %v3918 = vunpack.c.l.b16 %v3327
    %v3919 = vunpack.c.h.b16 %v3327
    %v3920 = vunpack.c.l.b16 %v3328
    %v3921 = vunpack.c.h.b16 %v3328
    %v3922 = vunpack.c.l.b16 %v3329
    %v3923 = vunpack.c.h.b16 %v3329
    %v3924 = vunpack.c.l.b16 %v3330
    %v3925 = vunpack.c.h.b16 %v3330
    %v3926 = vunpack.c.l.b16 %v3331
    %v3927 = vunpack.c.h.b16 %v3331
    %v3928 = vunpack.c.l.b16 %v3332
    %v3929 = vunpack.c.h.b16 %v3332
    %v3930 = vunpack.c.l.b16 %v3333
    %v3931 = vunpack.c.h.b16 %v3333
    %v3932 = vunpack.c.l.b16 %v3334
    %v3933 = vunpack.c.h.b16 %v3334
    %v3934 = vunpack.c.l.b16 %v3335
    %v3935 = vunpack.c.h.b16 %v3335
    %v3936 = vunpack.c.l.b16 %v3336
    %v3937 = vunpack.c.h.b16 %v3336
    %v3938 = vunpack.c.l.b16 %v3337
    %v3939 = vunpack.c.h.b16 %v3337
    %v3940 = vunpack.c.l.b16 %v3338
    %v3941 = vunpack.c.h.b16 %v3338
    %v3942 = vunpack.c.l.b16 %v3339
    %v3943 = vunpack.c.h.b16 %v3339
    %v3944 = vunpack.c.l.b16 %v3340
    %v3945 = vunpack.c.h.b16 %v3340
    %v3946 = vunpack.c.l.b16 %v3341
    %v3947 = vunpack.c.h.b16 %v3341
    %v3948 = vunpack.c.l.b16 %v3342
    %v3949 = vunpack.c.h.b16 %v3342
    %v3950 = vunpack.c.l.b16 %v3343
    %v3951 = vunpack.c.h.b16 %v3343
    %v3952 = vunpack.c.l.b16 %v3344
    %v3953 = vunpack.c.h.b16 %v3344
    %v3954 = vunpack.c.l.b16 %v3345
    %v3955 = vunpack.c.h.b16 %v3345
    %v3956 = vunpack.c.l.b16 %v3346
    %v3957 = vunpack.c.h.b16 %v3346
    %v3958 = vunpack.c.l.b16 %v3347
    %v3959 = vunpack.c.h.b16 %v3347
    %v3960 = vunpack.c.l.b16 %v3348
    %v3961 = vunpack.c.h.b16 %v3348
    %v3962 = vunpack.c.l.b16 %v3349
    %v3963 = vunpack.c.h.b16 %v3349
    %v3964 = vunpack.c.l.b16 %v3350
    %v3965 = vunpack.c.h.b16 %v3350
    %v3966 = vunpack.c.l.b16 %v3351
    %v3967 = vunpack.c.h.b16 %v3351
    %v3968 = vunpack.c.l.b16 %v3352
    %v3969 = vunpack.c.h.b16 %v3352
    %v3970 = vunpack.c.l.b16 %v3353
    %v3971 = vunpack.c.h.b16 %v3353
    %v3972 = vunpack.c.l.b16 %v3354
    %v3973 = vunpack.c.h.b16 %v3354
    %v3974 = vunpack.c.l.b16 %v3355
    %v3975 = vunpack.c.h.b16 %v3355
    %v3976 = vunpack.c.l.b16 %v3356
    %v3977 = vunpack.c.h.b16 %v3356
    %v3978 = vunpack.c.l.b16 %v3357
    %v3979 = vunpack.c.h.b16 %v3357
    %v3980 = vunpack.c.l.b16 %v3358
    %v3981 = vunpack.c.h.b16 %v3358
    %v3982 = vunpack.c.l.b16 %v3359
    %v3983 = vunpack.c.h.b16 %v3359
    %v3984 = vunpack.c.l.b16 %v3360
    %v3985 = vunpack.c.h.b16 %v3360
    %v3986 = vunpack.c.l.b16 %v3361
    %v3987 = vunpack.c.h.b16 %v3361
    %v3988 = vunpack.c.l.b16 %v3362
    %v3989 = vunpack.c.h.b16 %v3362
    %v3990 = vunpack.c.l.b16 %v3363
    %v3991 = vunpack.c.h.b16 %v3363
    %v3992 = vunpack.c.l.b16 %v3364
    %v3993 = vunpack.c.h.b16 %v3364
    %v3994 = vunpack.c.l.b16 %v3365
    %v3995 = vunpack.c.h.b16 %v3365
    %v3996 = vunpack.c.l.b16 %v3366
    %v3997 = vunpack.c.h.b16 %v3366
    %v3998 = vunpack.c.l.b16 %v3367
    %v3999 = vunpack.c.h.b16 %v3367
    %v4000 = vunpack.c.l.b16 %v3368
    %v4001 = vunpack.c.h.b16 %v3368
    %v4002 = vunpack.c.l.b16 %v3369
    %v4003 = vunpack.c.h.b16 %v3369
    %v4004 = vunpack.c.l.b16 %v3370
    %v4005 = vunpack.c.h.b16 %v3370
    %v4006 = vunpack.c.l.b16 %v3371
    %v4007 = vunpack.c.h.b16 %v3371
    %v4008 = vunpack.c.l.b16 %v3372
    %v4009 = vunpack.c.h.b16 %v3372
    %v4010 = vunpack.c.l.b16 %v3373
    %v4011 = vunpack.c.h.b16 %v3373
    %v4012 = vunpack.c.l.b16 %v3374
    %v4013 = vunpack.c.h.b16 %v3374
    %v4014 = vunpack.c.l.b16 %v3375
    %v4015 = vunpack.c.h.b16 %v3375
    %v4016 = vunpack.c.l.b16 %v3376
    %v4017 = vunpack.c.h.b16 %v3376
    %v4018 = vunpack.c.l.b16 %v3377
    %v4019 = vunpack.c.h.b16 %v3377
    %v4020 = vunpack.c.l.b16 %v3378
    %v4021 = vunpack.c.h.b16 %v3378
    %v4022 = vunpack.c.l.b16 %v3379
    %v4023 = vunpack.c.h.b16 %v3379
    %v4024 = vunpack.c.l.b16 %v3380
    %v4025 = vunpack.c.h.b16 %v3380
    %v4026 = vunpack.c.l.b16 %v3381
    %v4027 = vunpack.c.h.b16 %v3381
    %v4028 = vunpack.c.l.b16 %v3382
    %v4029 = vunpack.c.h.b16 %v3382
    %v4030 = vunpack.c.l.b16 %v3383
    %v4031 = vunpack.c.h.b16 %v3383
    %v4032 = vunpack.c.l.b16 %v3384
    %v4033 = vunpack.c.h.b16 %v3384
    %v4034 = vunpack.c.l.b16 %v3385
    %v4035 = vunpack.c.h.b16 %v3385
    %v4036 = vunpack.c.l.b16 %v3386
    %v4037 = vunpack.c.h.b16 %v3386
    %v4038 = vunpack.c.l.b16 %v3387
    %v4039 = vunpack.c.h.b16 %v3387
    %v4040 = vunpack.c.l.b16 %v3388
    %v4041 = vunpack.c.h.b16 %v3388
    %v4042 = vunpack.c.l.b16 %v3389
    %v4043 = vunpack.c.h.b16 %v3389
    %v4044 = vunpack.c.l.b16 %v3390
    %v4045 = vunpack.c.h.b16 %v3390
    %v4046 = vunpack.c.l.b16 %v3391
    %v4047 = vunpack.c.h.b16 %v3391
    %v4048 = vunpack.c.l.b16 %v3392
    %v4049 = vunpack.c.h.b16 %v3392
    %v4050 = vunpack.c.l.b16 %v3393
    %v4051 = vunpack.c.h.b16 %v3393
    %v4052 = vunpack.c.l.b16 %v3394
    %v4053 = vunpack.c.h.b16 %v3394
    %v4054 = vunpack.c.l.b16 %v3395
    %v4055 = vunpack.c.h.b16 %v3395
    %v4056 = vunpack.c.l.b16 %v3396
    %v4057 = vunpack.c.h.b16 %v3396
    %v4058 = vunpack.c.l.b16 %v3397
    %v4059 = vunpack.c.h.b16 %v3397
    %v4060 = vunpack.c.l.b16 %v3398
    %v4061 = vunpack.c.h.b16 %v3398
    %v4062 = vunpack.c.l.b16 %v3399
    %v4063 = vunpack.c.h.b16 %v3399
    %v4064 = vunpack.c.l.b16 %v3400
    %v4065 = vunpack.c.h.b16 %v3400
    %v4066 = vunpack.c.l.b16 %v3401
    %v4067 = vunpack.c.h.b16 %v3401
    %v4068 = vunpack.c.l.b16 %v3402
    %v4069 = vunpack.c.h.b16 %v3402
    %v4070 = vunpack.c.l.b16 %v3403
    %v4071 = vunpack.c.h.b16 %v3403
    %v4072 = vunpack.c.l.b16 %v3404
    %v4073 = vunpack.c.h.b16 %v3404
    %v4074 = vunpack.c.l.b16 %v3405
    %v4075 = vunpack.c.h.b16 %v3405
    %v4076 = vunpack.c.l.b16 %v3406
    %v4077 = vunpack.c.h.b16 %v3406
    %v4078 = vunpack.c.l.b16 %v3407
    %v4079 = vunpack.c.h.b16 %v3407
    %v4080 = vunpack.c.l.b16 %v3408
    %v4081 = vunpack.c.h.b16 %v3408
    %v4082 = vunpack.c.l.b16 %v3409
    %v4083 = vunpack.c.h.b16 %v3409
    %v4084 = vunpack.c.l.b16 %v3410
    %v4085 = vunpack.c.h.b16 %v3410
    %v4086 = vunpack.c.l.b16 %v3411
    %v4087 = vunpack.c.h.b16 %v3411
    %v4088 = vunpack.c.l.b16 %v3412
    %v4089 = vunpack.c.h.b16 %v3412
    %v4090 = vunpack.c.l.b16 %v3413
    %v4091 = vunpack.c.h.b16 %v3413
    %v4092 = vunpack.c.l.b16 %v3414
    %v4093 = vunpack.c.h.b16 %v3414
    %v4094 = vunpack.c.l.b16 %v3415
    %v4095 = vunpack.c.h.b16 %v3415
    %v4096 = vunpack.c.l.b16 %v3416
    %v4097 = vunpack.c.h.b16 %v3416
    %v4098 = vunpack.c.l.b16 %v3417
    %v4099 = vunpack.c.h.b16 %v3417
    %v4100 = vunpack.c.l.b16 %v3418
    %v4101 = vunpack.c.h.b16 %v3418
    %v4102 = vunpack.c.l.b16 %v3419
    %v4103 = vunpack.c.h.b16 %v3419
    %v4104 = vunpack.c.l.b16 %v3420
    %v4105 = vunpack.c.h.b16 %v3420
    %v4106 = vunpack.c.l.b16 %v3421
    %v4107 = vunpack.c.h.b16 %v3421
    %v4108 = vunpack.c.l.b16 %v3422
    %v4109 = vunpack.c.h.b16 %v3422
    %v4110 = vunpack.c.l.b16 %v3423
    %v4111 = vunpack.c.h.b16 %v3423
    %v4112 = vunpack.c.l.b16 %v3424
    %v4113 = vunpack.c.h.b16 %v3424
    %v4114 = vunpack.c.l.b16 %v3425
    %v4115 = vunpack.c.h.b16 %v3425
    %v4116 = vunpack.c.l.b16 %v3426
    %v4117 = vunpack.c.h.b16 %v3426
    %v4118 = vunpack.c.l.b16 %v3427
    %v4119 = vunpack.c.h.b16 %v3427
    %v4120 = vunpack.c.l.b16 %v3428
    %v4121 = vunpack.c.h.b16 %v3428
    %v4122 = vunpack.c.l.b16 %v3429
    %v4123 = vunpack.c.h.b16 %v3429
    %v4124 = vunpack.c.l.b16 %v3430
    %v4125 = vunpack.c.h.b16 %v3430
    %v4126 = vunpack.c.l.b16 %v3431
    %v4127 = vunpack.c.h.b16 %v3431
    %v4128 = vunpack.c.l.b16 %v3432
    %v4129 = vunpack.c.h.b16 %v3432
    %v4130 = vunpack.c.l.b16 %v3433
    %v4131 = vunpack.c.h.b16 %v3433
    %v4132 = vunpack.c.l.b16 %v3434
    %v4133 = vunpack.c.h.b16 %v3434
    %v4134 = vunpack.c.l.b16 %v3435
    %v4135 = vunpack.c.h.b16 %v3435
    %v4136 = vunpack.c.l.b16 %v3436
    %v4137 = vunpack.c.h.b16 %v3436
    %v4138 = vunpack.c.l.b16 %v3437
    %v4139 = vunpack.c.h.b16 %v3437
    %v4140 = vunpack.c.l.b16 %v3438
    %v4141 = vunpack.c.h.b16 %v3438
    %v4142 = vunpack.c.l.b16 %v3439
    %v4143 = vunpack.c.h.b16 %v3439
    %v4144 = vunpack.c.l.b16 %v3440
    %v4145 = vunpack.c.h.b16 %v3440
    %v4146 = vunpack.c.l.b16 %v3441
    %v4147 = vunpack.c.h.b16 %v3441
    %v4148 = vunpack.c.l.b16 %v3442
    %v4149 = vunpack.c.h.b16 %v3442
    %v4150 = vunpack.c.l.b16 %v3443
    %v4151 = vunpack.c.h.b16 %v3443
    %v4152 = vunpack.c.l.b16 %v3444
    %v4153 = vunpack.c.h.b16 %v3444
    %v4154 = vunpack.c.l.b16 %v3445
    %v4155 = vunpack.c.h.b16 %v3445
    %v4156 = vunpack.c.l.b16 %v3446
    %v4157 = vunpack.c.h.b16 %v3446
    %v4158 = vunpack.c.l.b16 %v3447
    %v4159 = vunpack.c.h.b16 %v3447
    %v4160 = vunpack.c.l.b16 %v3448
    %v4161 = vunpack.c.h.b16 %v3448
    %v4162 = vunpack.c.l.b16 %v3449
    %v4163 = vunpack.c.h.b16 %v3449
    %v4164 = vunpack.c.l.b16 %v3450
    %v4165 = vunpack.c.h.b16 %v3450
    %v4166 = vunpack.c.l.b16 %v3451
    %v4167 = vunpack.c.h.b16 %v3451
    %v4168 = vunpack.c.l.b16 %v3452
    %v4169 = vunpack.c.h.b16 %v3452
    %v4170 = vunpack.c.l.b16 %v3453
    %v4171 = vunpack.c.h.b16 %v3453
    %v4172 = vunpack.c.l.b16 %v3454
    %v4173 = vunpack.c.h.b16 %v3454
    %v4174 = vunpack.c.l.b16 %v3455
    %v4175 = vunpack.c.h.b16 %v3455
    %v4176 = vunpack.c.l.b16 %v3456
    %v4177 = vunpack.c.h.b16 %v3456
    %v4178 = vunpack.c.l.b16 %v3457
    %v4179 = vunpack.c.h.b16 %v3457
    %v4180 = vunpack.c.l.b16 %v3458
    %v4181 = vunpack.c.h.b16 %v3458
    %v4182 = vunpack.c.l.b16 %v3459
    %v4183 = vunpack.c.h.b16 %v3459
    %v4184 = vunpack.c.l.b16 %v3460
    %v4185 = vunpack.c.h.b16 %v3460
    %v4186 = vunpack.c.l.b16 %v3461
    %v4187 = vunpack.c.h.b16 %v3461
    %v4188 = vunpack.c.l.b16 %v3462
    %v4189 = vunpack.c.h.b16 %v3462
    %v4190 = vunpack.c.l.b16 %v3463
    %v4191 = vunpack.c.h.b16 %v3463
    %v4192 = vunpack.c.l.b16 %v3464
    %v4193 = vunpack.c.h.b16 %v3464
    %v4194 = vunpack.c.l.b16 %v3465
    %v4195 = vunpack.c.h.b16 %v3465
    %v4196 = vunpack.c.l.b16 %v3466
    %v4197 = vunpack.c.h.b16 %v3466
    %v4198 = vunpack.c.l.b16 %v3467
    %v4199 = vunpack.c.h.b16 %v3467
    %v4200 = vunpack.c.l.b16 %v3468
    %v4201 = vunpack.c.h.b16 %v3468
    %v4202 = vunpack.c.l.b16 %v3469
    %v4203 = vunpack.c.h.b16 %v3469
    %v4204 = vunpack.c.l.b16 %v3470
    %v4205 = vunpack.c.h.b16 %v3470
    %v4206 = vunpack.c.l.b16 %v3471
    %v4207 = vunpack.c.h.b16 %v3471
    %v4208 = vunpack.c.l.b16 %v3472
    %v4209 = vunpack.c.h.b16 %v3472
    %v4210 = vunpack.c.l.b16 %v3473
    %v4211 = vunpack.c.h.b16 %v3473
    %v4212 = vunpack.c.l.b16 %v3474
    %v4213 = vunpack.c.h.b16 %v3474
    %v4214 = vunpack.c.l.b16 %v3475
    %v4215 = vunpack.c.h.b16 %v3475
    %v4216 = vunpack.c.l.b16 %v3476
    %v4217 = vunpack.c.h.b16 %v3476
    %v4218 = vunpack.c.l.b16 %v3477
    %v4219 = vunpack.c.h.b16 %v3477
    %v4220 = vunpack.c.l.b16 %v3478
    %v4221 = vunpack.c.h.b16 %v3478
    %v4222 = vunpack.c.l.b16 %v3479
    %v4223 = vunpack.c.h.b16 %v3479
    %v4224 = vunpack.c.l.b16 %v3480
    %v4225 = vunpack.c.h.b16 %v3480
    %v4226 = vunpack.c.l.b16 %v3481
    %v4227 = vunpack.c.h.b16 %v3481
    %v4228 = vunpack.c.l.b16 %v3482
    %v4229 = vunpack.c.h.b16 %v3482
    %v4230 = vunpack.c.l.b16 %v3483
    %v4231 = vunpack.c.h.b16 %v3483
    %v4232 = vunpack.c.l.b16 %v3484
    %v4233 = vunpack.c.h.b16 %v3484
    %v4234 = vunpack.c.l.b16 %v3485
    %v4235 = vunpack.c.h.b16 %v3485
    %v4236 = vunpack.c.l.b16 %v3486
    %v4237 = vunpack.c.h.b16 %v3486
    %v4238 = vunpack.c.l.b16 %v3487
    %v4239 = vunpack.c.h.b16 %v3487
    %v4240 = vunpack.c.l.b16 %v3488
    %v4241 = vunpack.c.h.b16 %v3488
    %v4242 = vunpack.c.l.b16 %v3489
    %v4243 = vunpack.c.h.b16 %v3489
    %v4244 = vunpack.c.l.b16 %v3490
    %v4245 = vunpack.c.h.b16 %v3490
    %v4246 = vunpack.c.l.b16 %v3491
    %v4247 = vunpack.c.h.b16 %v3491
    %v4248 = vunpack.c.l.b16 %v3492
    %v4249 = vunpack.c.h.b16 %v3492
    %v4250 = vunpack.c.l.b16 %v3493
    %v4251 = vunpack.c.h.b16 %v3493
    %v4252 = vunpack.c.l.b16 %v3494
    %v4253 = vunpack.c.h.b16 %v3494
    %v4254 = vunpack.c.l.b16 %v3495
    %v4255 = vunpack.c.h.b16 %v3495
    %v4256 = vunpack.c.l.b16 %v3496
    %v4257 = vunpack.c.h.b16 %v3496
    %v4258 = vunpack.c.l.b16 %v3497
    %v4259 = vunpack.c.h.b16 %v3497
    %v4260 = vunpack.c.l.b16 %v3498
    %v4261 = vunpack.c.h.b16 %v3498
    %v4262 = vunpack.c.l.b16 %v3499
    %v4263 = vunpack.c.h.b16 %v3499
    %v4264 = vunpack.c.l.b16 %v3500
    %v4265 = vunpack.c.h.b16 %v3500
    %v4266 = vunpack.c.l.b16 %v3501
    %v4267 = vunpack.c.h.b16 %v3501
    %v4268 = vunpack.c.l.b16 %v3502
    %v4269 = vunpack.c.h.b16 %v3502
    %v4270 = vunpack.c.l.b16 %v3503
    %v4271 = vunpack.c.h.b16 %v3503
    %v4272 = vunpack.c.l.b16 %v3504
    %v4273 = vunpack.c.h.b16 %v3504
    %v4274 = vunpack.c.l.b16 %v3505
    %v4275 = vunpack.c.h.b16 %v3505
    %v4276 = vunpack.c.l.b16 %v3506
    %v4277 = vunpack.c.h.b16 %v3506
    %v4278 = vunpack.c.l.b16 %v3507
    %v4279 = vunpack.c.h.b16 %v3507
    %v4280 = vunpack.c.l.b16 %v3508
    %v4281 = vunpack.c.h.b16 %v3508
    %v4282 = vunpack.c.l.b16 %v3509
    %v4283 = vunpack.c.h.b16 %v3509
    %v4284 = vunpack.c.l.b16 %v3510
    %v4285 = vunpack.c.h.b16 %v3510
    %v4286 = vunpack.c.l.b16 %v3511
    %v4287 = vunpack.c.h.b16 %v3511
    %v4288 = vunpack.c.l.b16 %v3512
    %v4289 = vunpack.c.h.b16 %v3512
    %v4290 = vunpack.c.l.b16 %v3513
    %v4291 = vunpack.c.h.b16 %v3513
    %v4292 = vunpack.c.l.b16 %v3514
    %v4293 = vunpack.c.h.b16 %v3514
    %v4294 = vunpack.c.l.b16 %v3515
    %v4295 = vunpack.c.h.b16 %v3515
    %v4296 = vunpack.c.l.b16 %v3516
    %v4297 = vunpack.c.h.b16 %v3516
    %v4298 = vunpack.c.l.b16 %v3517
    %v4299 = vunpack.c.h.b16 %v3517
    %v4300 = vunpack.c.l.b16 %v3518
    %v4301 = vunpack.c.h.b16 %v3518
    %v4302 = vunpack.c.l.b16 %v3519
    %v4303 = vunpack.c.h.b16 %v3519
    %v4304 = vunpack.c.l.b16 %v3520
    %v4305 = vunpack.c.h.b16 %v3520
    %v4306 = vunpack.c.l.b16 %v3521
    %v4307 = vunpack.c.h.b16 %v3521
    %v4308 = vunpack.c.l.b16 %v3522
    %v4309 = vunpack.c.h.b16 %v3522
    %v4310 = vunpack.c.l.b16 %v3523
    %v4311 = vunpack.c.h.b16 %v3523
    %v4312 = vunpack.c.l.b16 %v3524
    %v4313 = vunpack.c.h.b16 %v3524
    %v4314 = vunpack.c.l.b16 %v3525
    %v4315 = vunpack.c.h.b16 %v3525
    %v4316 = vpack.c.b16 %v3808, %v3804
    %v4317 = vpack.c.b16 %v3809, %v3805
    %v4318 = vpack.c.b16 %v3810, %v3806
    %v4319 = vpack.c.b16 %v3811, %v3807
    %v4320 = vpack.c.b16 %v3816, %v3812
    %v4321 = vpack.c.b16 %v3817, %v3813
    %v4322 = vpack.c.b16 %v3818, %v3814
    %v4323 = vpack.c.b16 %v3819, %v3815
    %v4324 = vpack.c.b16 %v3824, %v3820
    %v4325 = vpack.c.b16 %v3825, %v3821
    %v4326 = vpack.c.b16 %v3826, %v3822
    %v4327 = vpack.c.b16 %v3827, %v3823
    %v4328 = vpack.c.b16 %v3832, %v3828
    %v4329 = vpack.c.b16 %v3833, %v3829
    %v4330 = vpack.c.b16 %v3834, %v3830
    %v4331 = vpack.c.b16 %v3835, %v3831
    %v4332 = vpack.c.b16 %v3840, %v3836
    %v4333 = vpack.c.b16 %v3841, %v3837
    %v4334 = vpack.c.b16 %v3842, %v3838
    %v4335 = vpack.c.b16 %v3843, %v3839
    %v4336 = vpack.c.b16 %v3848, %v3844
    %v4337 = vpack.c.b16 %v3849, %v3845
    %v4338 = vpack.c.b16 %v3850, %v3846
    %v4339 = vpack.c.b16 %v3851, %v3847
    %v4340 = vpack.c.b16 %v3856, %v3852
    %v4341 = vpack.c.b16 %v3857, %v3853
    %v4342 = vpack.c.b16 %v3858, %v3854
    %v4343 = vpack.c.b16 %v3859, %v3855
    %v4344 = vpack.c.b16 %v3864, %v3860
    %v4345 = vpack.c.b16 %v3865, %v3861
    %v4346 = vpack.c.b16 %v3866, %v3862
    %v4347 = vpack.c.b16 %v3867, %v3863
    %v4348 = vpack.c.b16 %v3872, %v3868
    %v4349 = vpack.c.b16 %v3873, %v3869
    %v4350 = vpack.c.b16 %v3874, %v3870
    %v4351 = vpack.c.b16 %v3875, %v3871
    %v4352 = vpack.c.b16 %v3880, %v3876
    %v4353 = vpack.c.b16 %v3881, %v3877
    %v4354 = vpack.c.b16 %v3882, %v3878
    %v4355 = vpack.c.b16 %v3883, %v3879
    %v4356 = vpack.c.b16 %v3888, %v3884
    %v4357 = vpack.c.b16 %v3889, %v3885
    %v4358 = vpack.c.b16 %v3890, %v3886
    %v4359 = vpack.c.b16 %v3891, %v3887
    %v4360 = vpack.c.b16 %v3896, %v3892
    %v4361 = vpack.c.b16 %v3897, %v3893
    %v4362 = vpack.c.b16 %v3898, %v3894
    %v4363 = vpack.c.b16 %v3899, %v3895
    %v4364 = vpack.c.b16 %v3904, %v3900
    %v4365 = vpack.c.b16 %v3905, %v3901
    %v4366 = vpack.c.b16 %v3906, %v3902
    %v4367 = vpack.c.b16 %v3907, %v3903
    %v4368 = vpack.c.b16 %v3912, %v3908
    %v4369 = vpack.c.b16 %v3913, %v3909
    %v4370 = vpack.c.b16 %v3914, %v3910
    %v4371 = vpack.c.b16 %v3915, %v3911
    %v4372 = vpack.c.b16 %v3920, %v3916
    %v4373 = vpack.c.b16 %v3921, %v3917
    %v4374 = vpack.c.b16 %v3922, %v3918
    %v4375 = vpack.c.b16 %v3923, %v3919
    %v4376 = vpack.c.b16 %v3928, %v3924
    %v4377 = vpack.c.b16 %v3929, %v3925
    %v4378 = vpack.c.b16 %v3930, %v3926
    %v4379 = vpack.c.b16 %v3931, %v3927
    %v4380 = vpack.c.b16 %v3936, %v3932
    %v4381 = vpack.c.b16 %v3937, %v3933
    %v4382 = vpack.c.b16 %v3938, %v3934
    %v4383 = vpack.c.b16 %v3939, %v3935
    %v4384 = vpack.c.b16 %v3944, %v3940
    %v4385 = vpack.c.b16 %v3945, %v3941
    %v4386 = vpack.c.b16 %v3946, %v3942
    %v4387 = vpack.c.b16 %v3947, %v3943
    %v4388 = vpack.c.b16 %v3952, %v3948
    %v4389 = vpack.c.b16 %v3953, %v3949
    %v4390 = vpack.c.b16 %v3954, %v3950
    %v4391 = vpack.c.b16 %v3955, %v3951
    %v4392 = vpack.c.b16 %v3960, %v3956
    %v4393 = vpack.c.b16 %v3961, %v3957
    %v4394 = vpack.c.b16 %v3962, %v3958
    %v4395 = vpack.c.b16 %v3963, %v3959
    %v4396 = vpack.c.b16 %v3968, %v3964
    %v4397 = vpack.c.b16 %v3969, %v3965
    %v4398 = vpack.c.b16 %v3970, %v3966
    %v4399 = vpack.c.b16 %v3971, %v3967
    %v4400 = vpack.c.b16 %v3976, %v3972
    %v4401 = vpack.c.b16 %v3977, %v3973
    %v4402 = vpack.c.b16 %v3978, %v3974
    %v4403 = vpack.c.b16 %v3979, %v3975
    %v4404 = vpack.c.b16 %v3984, %v3980
    %v4405 = vpack.c.b16 %v3985, %v3981
    %v4406 = vpack.c.b16 %v3986, %v3982
    %v4407 = vpack.c.b16 %v3987, %v3983
    %v4408 = vpack.c.b16 %v3992, %v3988
    %v4409 = vpack.c.b16 %v3993, %v3989
    %v4410 = vpack.c.b16 %v3994, %v3990
    %v4411 = vpack.c.b16 %v3995, %v3991
    %v4412 = vpack.c.b16 %v4000, %v3996
    %v4413 = vpack.c.b16 %v4001, %v3997
    %v4414 = vpack.c.b16 %v4002, %v3998
    %v4415 = vpack.c.b16 %v4003, %v3999
    %v4416 = vpack.c.b16 %v4008, %v4004
    %v4417 = vpack.c.b16 %v4009, %v4005
    %v4418 = vpack.c.b16 %v4010, %v4006
    %v4419 = vpack.c.b16 %v4011, %v4007
    %v4420 = vpack.c.b16 %v4016, %v4012
    %v4421 = vpack.c.b16 %v4017, %v4013
    %v4422 = vpack.c.b16 %v4018, %v4014
    %v4423 = vpack.c.b16 %v4019, %v4015
    %v4424 = vpack.c.b16 %v4024, %v4020
    %v4425 = vpack.c.b16 %v4025, %v4021
    %v4426 = vpack.c.b16 %v4026, %v4022
    %v4427 = vpack.c.b16 %v4027, %v4023
    %v4428 = vpack.c.b16 %v4032, %v4028
    %v4429 = vpack.c.b16 %v4033, %v4029
    %v4430 = vpack.c.b16 %v4034, %v4030
    %v4431 = vpack.c.b16 %v4035, %v4031
    %v4432 = vpack.c.b16 %v4040, %v4036
    %v4433 = vpack.c.b16 %v4041, %v4037
    %v4434 = vpack.c.b16 %v4042, %v4038
    %v4435 = vpack.c.b16 %v4043, %v4039
    %v4436 = vpack.c.b16 %v4048, %v4044
    %v4437 = vpack.c.b16 %v4049, %v4045
    %v4438 = vpack.c.b16 %v4050, %v4046
    %v4439 = vpack.c.b16 %v4051, %v4047
    %v4440 = vpack.c.b16 %v4056, %v4052
    %v4441 = vpack.c.b16 %v4057, %v4053
    %v4442 = vpack.c.b16 %v4058, %v4054
    %v4443 = vpack.c.b16 %v4059, %v4055
    %v4444 = vpack.c.b16 %v4064, %v4060
    %v4445 = vpack.c.b16 %v4065, %v4061
    %v4446 = vpack.c.b16 %v4066, %v4062
    %v4447 = vpack.c.b16 %v4067, %v4063
    %v4448 = vpack.c.b16 %v4072, %v4068
    %v4449 = vpack.c.b16 %v4073, %v4069
    %v4450 = vpack.c.b16 %v4074, %v4070
    %v4451 = vpack.c.b16 %v4075, %v4071
    %v4452 = vpack.c.b16 %v4080, %v4076
    %v4453 = vpack.c.b16 %v4081, %v4077
    %v4454 = vpack.c.b16 %v4082, %v4078
    %v4455 = vpack.c.b16 %v4083, %v4079
    %v4456 = vpack.c.b16 %v4088, %v4084
    %v4457 = vpack.c.b16 %v4089, %v4085
    %v4458 = vpack.c.b16 %v4090, %v4086
    %v4459 = vpack.c.b16 %v4091, %v4087
    %v4460 = vpack.c.b16 %v4096, %v4092
    %v4461 = vpack.c.b16 %v4097, %v4093
    %v4462 = vpack.c.b16 %v4098, %v4094
    %v4463 = vpack.c.b16 %v4099, %v4095
    %v4464 = vpack.c.b16 %v4104, %v4100
    %v4465 = vpack.c.b16 %v4105, %v4101
    %v4466 = vpack.c.b16 %v4106, %v4102
    %v4467 = vpack.c.b16 %v4107, %v4103
    %v4468 = vpack.c.b16 %v4112, %v4108
    %v4469 = vpack.c.b16 %v4113, %v4109
    %v4470 = vpack.c.b16 %v4114, %v4110
    %v4471 = vpack.c.b16 %v4115, %v4111
    %v4472 = vpack.c.b16 %v4120, %v4116
    %v4473 = vpack.c.b16 %v4121, %v4117
    %v4474 = vpack.c.b16 %v4122, %v4118
    %v4475 = vpack.c.b16 %v4123, %v4119
    %v4476 = vpack.c.b16 %v4128, %v4124
    %v4477 = vpack.c.b16 %v4129, %v4125
    %v4478 = vpack.c.b16 %v4130, %v4126
    %v4479 = vpack.c.b16 %v4131, %v4127
    %v4480 = vpack.c.b16 %v4136, %v4132
    %v4481 = vpack.c.b16 %v4137, %v4133
    %v4482 = vpack.c.b16 %v4138, %v4134
    %v4483 = vpack.c.b16 %v4139, %v4135
    %v4484 = vpack.c.b16 %v4144, %v4140
    %v4485 = vpack.c.b16 %v4145, %v4141
    %v4486 = vpack.c.b16 %v4146, %v4142
    %v4487 = vpack.c.b16 %v4147, %v4143
    %v4488 = vpack.c.b16 %v4152, %v4148
    %v4489 = vpack.c.b16 %v4153, %v4149
    %v4490 = vpack.c.b16 %v4154, %v4150
    %v4491 = vpack.c.b16 %v4155, %v4151
    %v4492 = vpack.c.b16 %v4160, %v4156
    %v4493 = vpack.c.b16 %v4161, %v4157
    %v4494 = vpack.c.b16 %v4162, %v4158
    %v4495 = vpack.c.b16 %v4163, %v4159
    %v4496 = vpack.c.b16 %v4168, %v4164
    %v4497 = vpack.c.b16 %v4169, %v4165
    %v4498 = vpack.c.b16 %v4170, %v4166
    %v4499 = vpack.c.b16 %v4171, %v4167
    %v4500 = vpack.c.b16 %v4176, %v4172
    %v4501 = vpack.c.b16 %v4177, %v4173
    %v4502 = vpack.c.b16 %v4178, %v4174
    %v4503 = vpack.c.b16 %v4179, %v4175
    %v4504 = vpack.c.b16 %v4184, %v4180
    %v4505 = vpack.c.b16 %v4185, %v4181
    %v4506 = vpack.c.b16 %v4186, %v4182
    %v4507 = vpack.c.b16 %v4187, %v4183
    %v4508 = vpack.c.b16 %v4192, %v4188
    %v4509 = vpack.c.b16 %v4193, %v4189
    %v4510 = vpack.c.b16 %v4194, %v4190
    %v4511 = vpack.c.b16 %v4195, %v4191
    %v4512 = vpack.c.b16 %v4200, %v4196
    %v4513 = vpack.c.b16 %v4201, %v4197
    %v4514 = vpack.c.b16 %v4202, %v4198
    %v4515 = vpack.c.b16 %v4203, %v4199
    %v4516 = vpack.c.b16 %v4208, %v4204
    %v4517 = vpack.c.b16 %v4209, %v4205
    %v4518 = vpack.c.b16 %v4210, %v4206
    %v4519 = vpack.c.b16 %v4211, %v4207
    %v4520 = vpack.c.b16 %v4216, %v4212
    %v4521 = vpack.c.b16 %v4217, %v4213
    %v4522 = vpack.c.b16 %v4218, %v4214
    %v4523 = vpack.c.b16 %v4219, %v4215
    %v4524 = vpack.c.b16 %v4224, %v4220
    %v4525 = vpack.c.b16 %v4225, %v4221
    %v4526 = vpack.c.b16 %v4226, %v4222
    %v4527 = vpack.c.b16 %v4227, %v4223
    %v4528 = vpack.c.b16 %v4232, %v4228
    %v4529 = vpack.c.b16 %v4233, %v4229
    %v4530 = vpack.c.b16 %v4234, %v4230
    %v4531 = vpack.c.b16 %v4235, %v4231
    %v4532 = vpack.c.b16 %v4240, %v4236
    %v4533 = vpack.c.b16 %v4241, %v4237
    %v4534 = vpack.c.b16 %v4242, %v4238
    %v4535 = vpack.c.b16 %v4243, %v4239
    %v4536 = vpack.c.b16 %v4248, %v4244
    %v4537 = vpack.c.b16 %v4249, %v4245
    %v4538 = vpack.c.b16 %v4250, %v4246
    %v4539 = vpack.c.b16 %v4251, %v4247
    %v4540 = vpack.c.b16 %v4256, %v4252
    %v4541 = vpack.c.b16 %v4257, %v4253
    %v4542 = vpack.c.b16 %v4258, %v4254
    %v4543 = vpack.c.b16 %v4259, %v4255
    %v4544 = vpack.c.b16 %v4264, %v4260
    %v4545 = vpack.c.b16 %v4265, %v4261
    %v4546 = vpack.c.b16 %v4266, %v4262
    %v4547 = vpack.c.b16 %v4267, %v4263
    %v4548 = vpack.c.b16 %v4272, %v4268
    %v4549 = vpack.c.b16 %v4273, %v4269
    %v4550 = vpack.c.b16 %v4274, %v4270
    %v4551 = vpack.c.b16 %v4275, %v4271
    %v4552 = vpack.c.b16 %v4280, %v4276
    %v4553 = vpack.c.b16 %v4281, %v4277
    %v4554 = vpack.c.b16 %v4282, %v4278
    %v4555 = vpack.c.b16 %v4283, %v4279
    %v4556 = vpack.c.b16 %v4288, %v4284
    %v4557 = vpack.c.b16 %v4289, %v4285
    %v4558 = vpack.c.b16 %v4290, %v4286
    %v4559 = vpack.c.b16 %v4291, %v4287
    %v4560 = vpack.c.b16 %v4296, %v4292
    %v4561 = vpack.c.b16 %v4297, %v4293
    %v4562 = vpack.c.b16 %v4298, %v4294
    %v4563 = vpack.c.b16 %v4299, %v4295
    %v4564 = vpack.c.b16 %v4304, %v4300
    %v4565 = vpack.c.b16 %v4305, %v4301
    %v4566 = vpack.c.b16 %v4306, %v4302
    %v4567 = vpack.c.b16 %v4307, %v4303
    %v4568 = vpack.c.b16 %v4312, %v4308
    %v4569 = vpack.c.b16 %v4313, %v4309
    %v4570 = vpack.c.b16 %v4314, %v4310
    %v4571 = vpack.c.b16 %v4315, %v4311
    %4828 = vmatprep.subr.bf16.mxu0 %v4317
    %4829 = vmatpush1.bf16.msra.mxu0 %v4316
    %4830 = vmatprep.subr.bf16.mxu0 %v4321
    %4831 = vmatpush1.bf16.msra.mxu0 %v4320
    %4832 = vmatprep.subr.bf16.mxu0 %v4325
    %4833 = vmatpush1.bf16.msra.mxu0 %v4324
    %4834 = vmatprep.subr.bf16.mxu0 %v4329
    %4835 = vmatpush1.bf16.msra.mxu0 %v4328
    %4836 = vmatprep.subr.bf16.mxu0 %v4333
    %4837 = vmatpush1.bf16.msra.mxu0 %v4332
    %4838 = vmatprep.subr.bf16.mxu0 %v4337
    %4839 = vmatpush1.bf16.msra.mxu0 %v4336
    %4840 = vmatprep.subr.bf16.mxu0 %v4341
    %4841 = vmatpush1.bf16.msra.mxu0 %v4340
    %4842 = vmatprep.subr.bf16.mxu0 %v4345
    %4843 = vmatpush1.bf16.msra.mxu0 %v4344
    %4844 = vmatprep.subr.bf16.mxu0 %v4349
    %4845 = vmatpush1.bf16.msra.mxu0 %v4348
    %4846 = vmatprep.subr.bf16.mxu0 %v4353
    %4847 = vmatpush1.bf16.msra.mxu0 %v4352
    %4848 = vmatprep.subr.bf16.mxu0 %v4357
    %4849 = vmatpush1.bf16.msra.mxu0 %v4356
    %4850 = vmatprep.subr.bf16.mxu0 %v4361
    %4851 = vmatpush1.bf16.msra.mxu0 %v4360
    %4852 = vmatprep.subr.bf16.mxu0 %v4365
    %4853 = vmatpush1.bf16.msra.mxu0 %v4364
    %4854 = vmatprep.subr.bf16.mxu0 %v4369
    %4855 = vmatpush1.bf16.msra.mxu0 %v4368
    %4856 = vmatprep.subr.bf16.mxu0 %v4373
    %4857 = vmatpush1.bf16.msra.mxu0 %v4372
    %4858 = vmatprep.subr.bf16.mxu0 %v4377
    %4859 = vmatpush1.bf16.msra.mxu0 %v4376
    %4860 = vmatprep.mubr.bf16.mxu0 %v3263
    %4861 = vmatmul.mubr.bf16.gmra.mrb[0].mxu0 %v3262
    %v4862 = vpop.f32.mrb[0].mxu0
    %v4863 = vadd.f32 %v3531, %v4862
    %v4864 = vpop.f32.mrb[0].mxu0
    %v4865 = vadd.f32 %v3535, %v4864
    %v4866 = vpop.f32.mrb[0].mxu0
    %v4867 = vadd.f32 %v3531, %v4866
    %v4868 = vpop.f32.mrb[0].mxu0
    %v4869 = vadd.f32 %v3535, %v4868
    %4870 = vdwg.mxu0
    %4871 = vmatprep.subr.bf16.mxu0 %v4381
    %4872 = vmatpush1.bf16.msra.mxu0 %v4380
    %4873 = vmatprep.subr.bf16.mxu0 %v4385
    %4874 = vmatpush1.bf16.msra.mxu0 %v4384
    %4875 = vmatprep.subr.bf16.mxu0 %v4389
    %4876 = vmatpush1.bf16.msra.mxu0 %v4388
    %4877 = vmatprep.subr.bf16.mxu0 %v4393
    %4878 = vmatpush1.bf16.msra.mxu0 %v4392
    %4879 = vmatprep.subr.bf16.mxu0 %v4397
    %4880 = vmatpush1.bf16.msra.mxu0 %v4396
    %4881 = vmatprep.subr.bf16.mxu0 %v4401
    %4882 = vmatpush1.bf16.msra.mxu0 %v4400
    %4883 = vmatprep.subr.bf16.mxu0 %v4405
    %4884 = vmatpush1.bf16.msra.mxu0 %v4404
    %4885 = vmatprep.subr.bf16.mxu0 %v4409
    %4886 = vmatpush1.bf16.msra.mxu0 %v4408
    %4887 = vmatprep.subr.bf16.mxu0 %v4413
    %4888 = vmatpush1.bf16.msra.mxu0 %v4412
    %4889 = vmatprep.subr.bf16.mxu0 %v4417
    %4890 = vmatpush1.bf16.msra.mxu0 %v4416
    %4891 = vmatprep.subr.bf16.mxu0 %v4421
    %4892 = vmatpush1.bf16.msra.mxu0 %v4420
    %4893 = vmatprep.subr.bf16.mxu0 %v4425
    %4894 = vmatpush1.bf16.msra.mxu0 %v4424
    %4895 = vmatprep.subr.bf16.mxu0 %v4429
    %4896 = vmatpush1.bf16.msra.mxu0 %v4428
    %4897 = vmatprep.subr.bf16.mxu0 %v4433
    %4898 = vmatpush1.bf16.msra.mxu0 %v4432
    %4899 = vmatprep.subr.bf16.mxu0 %v4437
    %4900 = vmatpush1.bf16.msra.mxu0 %v4436
    %4901 = vmatprep.subr.bf16.mxu0 %v4441
    %4902 = vmatpush1.bf16.msra.mxu0 %v4440
    %4903 = vmatprep.mubr.bf16.mxu0 %v3265
    %4904 = vmatmul.mubr.bf16.gmra.mrb[0].mxu0 %v3264
    %v4905 = vpop.f32.mrb[0].mxu0
    %v4906 = vadd.f32 %v4863, %v4905
    %v4907 = vpop.f32.mrb[0].mxu0
    %v4908 = vadd.f32 %v4865, %v4907
    %v4909 = vpop.f32.mrb[0].mxu0
    %v4910 = vadd.f32 %v4867, %v4909
    %v4911 = vpop.f32.mrb[0].mxu0
    %v4912 = vadd.f32 %v4869, %v4911
    %4913 = vdwg.mxu0
    %4914 = vmatprep.subr.bf16.mxu0 %v4445
    %4915 = vmatpush1.bf16.msra.mxu0 %v4444
    %4916 = vmatprep.subr.bf16.mxu0 %v4449
    %4917 = vmatpush1.bf16.msra.mxu0 %v4448
    %4918 = vmatprep.subr.bf16.mxu0 %v4453
    %4919 = vmatpush1.bf16.msra.mxu0 %v4452
    %4920 = vmatprep.subr.bf16.mxu0 %v4457
    %4921 = vmatpush1.bf16.msra.mxu0 %v4456
    %4922 = vmatprep.subr.bf16.mxu0 %v4461
    %4923 = vmatpush1.bf16.msra.mxu0 %v4460
    %4924 = vmatprep.subr.bf16.mxu0 %v4465
    %4925 = vmatpush1.bf16.msra.mxu0 %v4464
    %4926 = vmatprep.subr.bf16.mxu0 %v4469
    %4927 = vmatpush1.bf16.msra.mxu0 %v4468
    %4928 = vmatprep.subr.bf16.mxu0 %v4473
    %4929 = vmatpush1.bf16.msra.mxu0 %v4472
    %4930 = vmatprep.subr.bf16.mxu0 %v4477
    %4931 = vmatpush1.bf16.msra.mxu0 %v4476
    %4932 = vmatprep.subr.bf16.mxu0 %v4481
    %4933 = vmatpush1.bf16.msra.mxu0 %v4480
    %4934 = vmatprep.subr.bf16.mxu0 %v4485
    %4935 = vmatpush1.bf16.msra.mxu0 %v4484
    %4936 = vmatprep.subr.bf16.mxu0 %v4489
    %4937 = vmatpush1.bf16.msra.mxu0 %v4488
    %4938 = vmatprep.subr.bf16.mxu0 %v4493
    %4939 = vmatpush1.bf16.msra.mxu0 %v4492
    %4940 = vmatprep.subr.bf16.mxu0 %v4497
    %4941 = vmatpush1.bf16.msra.mxu0 %v4496
    %4942 = vmatprep.subr.bf16.mxu0 %v4501
    %4943 = vmatpush1.bf16.msra.mxu0 %v4500
    %4944 = vmatprep.subr.bf16.mxu0 %v4505
    %4945 = vmatpush1.bf16.msra.mxu0 %v4504
    %4946 = vmatprep.mubr.bf16.mxu0 %v3267
    %4947 = vmatmul.mubr.bf16.gmra.mrb[0].mxu0 %v3266
    %v4948 = vpop.f32.mrb[0].mxu0
    %v4949 = vadd.f32 %v4906, %v4948
    %v4950 = vpop.f32.mrb[0].mxu0
    %v4951 = vadd.f32 %v4908, %v4950
    %v4952 = vpop.f32.mrb[0].mxu0
    %v4953 = vadd.f32 %v4910, %v4952
    %v4954 = vpop.f32.mrb[0].mxu0
    %v4955 = vadd.f32 %v4912, %v4954
    %4956 = vdwg.mxu0
    %4957 = vmatprep.subr.bf16.mxu0 %v4509
    %4958 = vmatpush1.bf16.msra.mxu0 %v4508
    %4959 = vmatprep.subr.bf16.mxu0 %v4513
    %4960 = vmatpush1.bf16.msra.mxu0 %v4512
    %4961 = vmatprep.subr.bf16.mxu0 %v4517
    %4962 = vmatpush1.bf16.msra.mxu0 %v4516
    %4963 = vmatprep.subr.bf16.mxu0 %v4521
    %4964 = vmatpush1.bf16.msra.mxu0 %v4520
    %4965 = vmatprep.subr.bf16.mxu0 %v4525
    %4966 = vmatpush1.bf16.msra.mxu0 %v4524
    %4967 = vmatprep.subr.bf16.mxu0 %v4529
    %4968 = vmatpush1.bf16.msra.mxu0 %v4528
    %4969 = vmatprep.subr.bf16.mxu0 %v4533
    %4970 = vmatpush1.bf16.msra.mxu0 %v4532
    %4971 = vmatprep.subr.bf16.mxu0 %v4537
    %4972 = vmatpush1.bf16.msra.mxu0 %v4536
    %4973 = vmatprep.subr.bf16.mxu0 %v4541
    %4974 = vmatpush1.bf16.msra.mxu0 %v4540
    %4975 = vmatprep.subr.bf16.mxu0 %v4545
    %4976 = vmatpush1.bf16.msra.mxu0 %v4544
    %4977 = vmatprep.subr.bf16.mxu0 %v4549
    %4978 = vmatpush1.bf16.msra.mxu0 %v4548
    %4979 = vmatprep.subr.bf16.mxu0 %v4553
    %4980 = vmatpush1.bf16.msra.mxu0 %v4552
    %4981 = vmatprep.subr.bf16.mxu0 %v4557
    %4982 = vmatpush1.bf16.msra.mxu0 %v4556
    %4983 = vmatprep.subr.bf16.mxu0 %v4561
    %4984 = vmatpush1.bf16.msra.mxu0 %v4560
    %4985 = vmatprep.subr.bf16.mxu0 %v4565
    %4986 = vmatpush1.bf16.msra.mxu0 %v4564
    %4987 = vmatprep.subr.bf16.mxu0 %v4569
    %4988 = vmatpush1.bf16.msra.mxu0 %v4568
    %4989 = vmatprep.mubr.bf16.mxu0 %v3269
    %4990 = vmatmul.mubr.bf16.gmra.mrb[0].mxu0 %v3268
    %v4991 = vpop.f32.mrb[0].mxu0
    %v4992 = vadd.f32 %v4949, %v4991
    %v4993 = vpop.f32.mrb[0].mxu0
    %v4994 = vadd.f32 %v4951, %v4993
    %v4995 = vpop.f32.mrb[0].mxu0
    %v4996 = vadd.f32 %v4953, %v4995
    %v4997 = vpop.f32.mrb[0].mxu0
    %v4998 = vadd.f32 %v4955, %v4997
    %4999 = vdwg.mxu0
    %5000 = vmatprep.subr.bf16.mxu0 %v4319
    %5001 = vmatpush1.bf16.msra.mxu0 %v4318
    %5002 = vmatprep.subr.bf16.mxu0 %v4323
    %5003 = vmatpush1.bf16.msra.mxu0 %v4322
    %5004 = vmatprep.subr.bf16.mxu0 %v4327
    %5005 = vmatpush1.bf16.msra.mxu0 %v4326
    %5006 = vmatprep.subr.bf16.mxu0 %v4331
    %5007 = vmatpush1.bf16.msra.mxu0 %v4330
    %5008 = vmatprep.subr.bf16.mxu0 %v4335
    %5009 = vmatpush1.bf16.msra.mxu0 %v4334
    %5010 = vmatprep.subr.bf16.mxu0 %v4339
    %5011 = vmatpush1.bf16.msra.mxu0 %v4338
    %5012 = vmatprep.subr.bf16.mxu0 %v4343
    %5013 = vmatpush1.bf16.msra.mxu0 %v4342
    %5014 = vmatprep.subr.bf16.mxu0 %v4347
    %5015 = vmatpush1.bf16.msra.mxu0 %v4346
    %5016 = vmatprep.subr.bf16.mxu0 %v4351
    %5017 = vmatpush1.bf16.msra.mxu0 %v4350
    %5018 = vmatprep.subr.bf16.mxu0 %v4355
    %5019 = vmatpush1.bf16.msra.mxu0 %v4354
    %5020 = vmatprep.subr.bf16.mxu0 %v4359
    %5021 = vmatpush1.bf16.msra.mxu0 %v4358
    %5022 = vmatprep.subr.bf16.mxu0 %v4363
    %5023 = vmatpush1.bf16.msra.mxu0 %v4362
    %5024 = vmatprep.subr.bf16.mxu0 %v4367
    %5025 = vmatpush1.bf16.msra.mxu0 %v4366
    %5026 = vmatprep.subr.bf16.mxu0 %v4371
    %5027 = vmatpush1.bf16.msra.mxu0 %v4370
    %5028 = vmatprep.subr.bf16.mxu0 %v4375
    %5029 = vmatpush1.bf16.msra.mxu0 %v4374
    %5030 = vmatprep.subr.bf16.mxu0 %v4379
    %5031 = vmatpush1.bf16.msra.mxu0 %v4378
    %5032 = vmatprep.mubr.bf16.mxu0 %v3263
    %5033 = vmatmul.mubr.bf16.gmra.mrb[0].mxu0 %v3262
    %v5034 = vpop.f32.mrb[0].mxu0
    %v5035 = vadd.f32 %v3539, %v5034
    %v5036 = vpop.f32.mrb[0].mxu0
    %v5037 = vadd.f32 %v3543, %v5036
    %v5038 = vpop.f32.mrb[0].mxu0
    %v5039 = vadd.f32 %v3539, %v5038
    %v5040 = vpop.f32.mrb[0].mxu0
    %v5041 = vadd.f32 %v3543, %v5040
    %5042 = vdwg.mxu0
    %5043 = vmatprep.subr.bf16.mxu0 %v4383
    %5044 = vmatpush1.bf16.msra.mxu0 %v4382
    %5045 = vmatprep.subr.bf16.mxu0 %v4387
    %5046 = vmatpush1.bf16.msra.mxu0 %v4386
    %5047 = vmatprep.subr.bf16.mxu0 %v4391
    %5048 = vmatpush1.bf16.msra.mxu0 %v4390
    %5049 = vmatprep.subr.bf16.mxu0 %v4395
    %5050 = vmatpush1.bf16.msra.mxu0 %v4394
    %5051 = vmatprep.subr.bf16.mxu0 %v4399
    %5052 = vmatpush1.bf16.msra.mxu0 %v4398
    %5053 = vmatprep.subr.bf16.mxu0 %v4403
    %5054 = vmatpush1.bf16.msra.mxu0 %v4402
    %5055 = vmatprep.subr.bf16.mxu0 %v4407
    %5056 = vmatpush1.bf16.msra.mxu0 %v4406
    %5057 = vmatprep.subr.bf16.mxu0 %v4411
    %5058 = vmatpush1.bf16.msra.mxu0 %v4410
    %5059 = vmatprep.subr.bf16.mxu0 %v4415
    %5060 = vmatpush1.bf16.msra.mxu0 %v4414
    %5061 = vmatprep.subr.bf16.mxu0 %v4419
    %5062 = vmatpush1.bf16.msra.mxu0 %v4418
    %5063 = vmatprep.subr.bf16.mxu0 %v4423
    %5064 = vmatpush1.bf16.msra.mxu0 %v4422
    %5065 = vmatprep.subr.bf16.mxu0 %v4427
    %5066 = vmatpush1.bf16.msra.mxu0 %v4426
    %5067 = vmatprep.subr.bf16.mxu0 %v4431
    %5068 = vmatpush1.bf16.msra.mxu0 %v4430
    %5069 = vmatprep.subr.bf16.mxu0 %v4435
    %5070 = vmatpush1.bf16.msra.mxu0 %v4434
    %5071 = vmatprep.subr.bf16.mxu0 %v4439
    %5072 = vmatpush1.bf16.msra.mxu0 %v4438
    %5073 = vmatprep.subr.bf16.mxu0 %v4443
    %5074 = vmatpush1.bf16.msra.mxu0 %v4442
    %5075 = vmatprep.mubr.bf16.mxu0 %v3265
    %5076 = vmatmul.mubr.bf16.gmra.mrb[0].mxu0 %v3264
    %v5077 = vpop.f32.mrb[0].mxu0
    %v5078 = vadd.f32 %v5035, %v5077
    %v5079 = vpop.f32.mrb[0].mxu0
    %v5080 = vadd.f32 %v5037, %v5079
    %v5081 = vpop.f32.mrb[0].mxu0
    %v5082 = vadd.f32 %v5039, %v5081
    %v5083 = vpop.f32.mrb[0].mxu0
    %v5084 = vadd.f32 %v5041, %v5083
    %5085 = vdwg.mxu0
    %5086 = vmatprep.subr.bf16.mxu0 %v4447
    %5087 = vmatpush1.bf16.msra.mxu0 %v4446
    %5088 = vmatprep.subr.bf16.mxu0 %v4451
    %5089 = vmatpush1.bf16.msra.mxu0 %v4450
    %5090 = vmatprep.subr.bf16.mxu0 %v4455
    %5091 = vmatpush1.bf16.msra.mxu0 %v4454
    %5092 = vmatprep.subr.bf16.mxu0 %v4459
    %5093 = vmatpush1.bf16.msra.mxu0 %v4458
    %5094 = vmatprep.subr.bf16.mxu0 %v4463
    %5095 = vmatpush1.bf16.msra.mxu0 %v4462
    %5096 = vmatprep.subr.bf16.mxu0 %v4467
    %5097 = vmatpush1.bf16.msra.mxu0 %v4466
    %5098 = vmatprep.subr.bf16.mxu0 %v4471
    %5099 = vmatpush1.bf16.msra.mxu0 %v4470
    %5100 = vmatprep.subr.bf16.mxu0 %v4475
    %5101 = vmatpush1.bf16.msra.mxu0 %v4474
    %5102 = vmatprep.subr.bf16.mxu0 %v4479
    %5103 = vmatpush1.bf16.msra.mxu0 %v4478
    %5104 = vmatprep.subr.bf16.mxu0 %v4483
    %5105 = vmatpush1.bf16.msra.mxu0 %v4482
    %5106 = vmatprep.subr.bf16.mxu0 %v4487
    %5107 = vmatpush1.bf16.msra.mxu0 %v4486
    %5108 = vmatprep.subr.bf16.mxu0 %v4491
    %5109 = vmatpush1.bf16.msra.mxu0 %v4490
    %5110 = vmatprep.subr.bf16.mxu0 %v4495
    %5111 = vmatpush1.bf16.msra.mxu0 %v4494
    %5112 = vmatprep.subr.bf16.mxu0 %v4499
    %5113 = vmatpush1.bf16.msra.mxu0 %v4498
    %5114 = vmatprep.subr.bf16.mxu0 %v4503
    %5115 = vmatpush1.bf16.msra.mxu0 %v4502
    %5116 = vmatprep.subr.bf16.mxu0 %v4507
    %5117 = vmatpush1.bf16.msra.mxu0 %v4506
    %5118 = vmatprep.mubr.bf16.mxu0 %v3267
    %5119 = vmatmul.mubr.bf16.gmra.mrb[0].mxu0 %v3266
    %v5120 = vpop.f32.mrb[0].mxu0
    %v5121 = vadd.f32 %v5078, %v5120
    %v5122 = vpop.f32.mrb[0].mxu0
    %v5123 = vadd.f32 %v5080, %v5122
    %v5124 = vpop.f32.mrb[0].mxu0
    %v5125 = vadd.f32 %v5082, %v5124
    %v5126 = vpop.f32.mrb[0].mxu0
    %v5127 = vadd.f32 %v5084, %v5126
    %5128 = vdwg.mxu0
    %5129 = vmatprep.subr.bf16.mxu0 %v4511
    %5130 = vmatpush1.bf16.msra.mxu0 %v4510
    %5131 = vmatprep.subr.bf16.mxu0 %v4515
    %5132 = vmatpush1.bf16.msra.mxu0 %v4514
    %5133 = vmatprep.subr.bf16.mxu0 %v4519
    %5134 = vmatpush1.bf16.msra.mxu0 %v4518
    %5135 = vmatprep.subr.bf16.mxu0 %v4523
    %5136 = vmatpush1.bf16.msra.mxu0 %v4522
    %5137 = vmatprep.subr.bf16.mxu0 %v4527
    %5138 = vmatpush1.bf16.msra.mxu0 %v4526
    %5139 = vmatprep.subr.bf16.mxu0 %v4531
    %5140 = vmatpush1.bf16.msra.mxu0 %v4530
    %5141 = vmatprep.subr.bf16.mxu0 %v4535
    %5142 = vmatpush1.bf16.msra.mxu0 %v4534
    %5143 = vmatprep.subr.bf16.mxu0 %v4539
    %5144 = vmatpush1.bf16.msra.mxu0 %v4538
    %5145 = vmatprep.subr.bf16.mxu0 %v4543
    %5146 = vmatpush1.bf16.msra.mxu0 %v4542
    %5147 = vmatprep.subr.bf16.mxu0 %v4547
    %5148 = vmatpush1.bf16.msra.mxu0 %v4546
    %5149 = vmatprep.subr.bf16.mxu0 %v4551
    %5150 = vmatpush1.bf16.msra.mxu0 %v4550
    %5151 = vmatprep.subr.bf16.mxu0 %v4555
    %5152 = vmatpush1.bf16.msra.mxu0 %v4554
    %5153 = vmatprep.subr.bf16.mxu0 %v4559
    %5154 = vmatpush1.bf16.msra.mxu0 %v4558
    %5155 = vmatprep.subr.bf16.mxu0 %v4563
    %5156 = vmatpush1.bf16.msra.mxu0 %v4562
    %5157 = vmatprep.subr.bf16.mxu0 %v4567
    %5158 = vmatpush1.bf16.msra.mxu0 %v4566
    %5159 = vmatprep.subr.bf16.mxu0 %v4571
    %5160 = vmatpush1.bf16.msra.mxu0 %v4570
    %5161 = vmatprep.mubr.bf16.mxu0 %v3269
    %5162 = vmatmul.mubr.bf16.gmra.mrb[0].mxu0 %v3268
    %v5163 = vpop.f32.mrb[0].mxu0
    %v5164 = vadd.f32 %v5121, %v5163
    %v5165 = vpop.f32.mrb[0].mxu0
    %v5166 = vadd.f32 %v5123, %v5165
    %v5167 = vpop.f32.mrb[0].mxu0
    %v5168 = vadd.f32 %v5125, %v5167
    %v5169 = vpop.f32.mrb[0].mxu0
    %v5170 = vadd.f32 %v5127, %v5169
    %5171 = vdwg.mxu0
    %v5172 = vmax.f32 %v4992, 0.0
    %v5173 = vmax.f32 %v4994, 0.0
    %v5174 = vmax.f32 %v5164, 0.0
    %v5175 = vmax.f32 %v5166, 0.0
    %v5176 = vmax.f32 %v4996, 0.0
    %v5177 = vmax.f32 %v4998, 0.0
    %v5178 = vmax.f32 %v5168, 0.0
    %v5179 = vmax.f32 %v5170, 0.0
    %v5180 = vpack.c.bf16 %v5176, %v5172
    %v5181 = vpack.c.bf16 %v5177, %v5173
    %v5182 = vpack.c.bf16 %v5178, %v5174
    %v5183 = vpack.c.bf16 %v5179, %v5175
    %v5184 = vld [vmem:[#allocation11] sm:$0xf]
    %v5185 = vld [vmem:[#allocation11 + $0x4] sm:$0xf]
    %v5186 = vld [vmem:[#allocation11 + $0x8] sm:$0xf]
    %v5187 = vld [vmem:[#allocation11 + $0xc] sm:$0xf]
    %v5188 = vld [vmem:[#allocation11 + $0x10] sm:$0xf]
    %v5189 = vld [vmem:[#allocation11 + $0x14] sm:$0xf]
    %v5190 = vld [vmem:[#allocation11 + $0x18] sm:$0xf]
    %v5191 = vld [vmem:[#allocation11 + $0x1c] sm:$0xf]
    %v5192 = vld [vmem:[#allocation11 + $0x20] sm:$0xf]
    %v5193 = vld [vmem:[#allocation11 + $0x24] sm:$0xf]
    %v5194 = vld [vmem:[#allocation11 + $0x28] sm:$0xf]
    %v5195 = vld [vmem:[#allocation11 + $0x2c] sm:$0xf]
    %v5196 = vld [vmem:[#allocation11 + $0x30] sm:$0xf]
    %v5197 = vld [vmem:[#allocation11 + $0x34] sm:$0xf]
    %v5198 = vld [vmem:[#allocation11 + $0x38] sm:$0xf]
    %v5199 = vld [vmem:[#allocation11 + $0x3c] sm:$0xf]
    %v5200 = vld [vmem:[#allocation11 + $0x40] sm:$0xf]
    %v5201 = vld [vmem:[#allocation11 + $0x44] sm:$0xf]
    %v5202 = vld [vmem:[#allocation11 + $0x48] sm:$0xf]
    %v5203 = vld [vmem:[#allocation11 + $0x4c] sm:$0xf]
    %v5204 = vld [vmem:[#allocation11 + $0x50] sm:$0xf]
    %v5205 = vld [vmem:[#allocation11 + $0x54] sm:$0xf]
    %v5206 = vld [vmem:[#allocation11 + $0x58] sm:$0xf]
    %v5207 = vld [vmem:[#allocation11 + $0x5c] sm:$0xf]
    %v5208 = vld [vmem:[#allocation11 + $0x60] sm:$0xf]
    %v5209 = vld [vmem:[#allocation11 + $0x64] sm:$0xf]
    %v5210 = vld [vmem:[#allocation11 + $0x68] sm:$0xf]
    %v5211 = vld [vmem:[#allocation11 + $0x6c] sm:$0xf]
    %v5212 = vld [vmem:[#allocation11 + $0x70] sm:$0xf]
    %v5213 = vld [vmem:[#allocation11 + $0x74] sm:$0xf]
    %v5214 = vld [vmem:[#allocation11 + $0x78] sm:$0xf]
    %v5215 = vld [vmem:[#allocation11 + $0x7c] sm:$0xf]
    %v5216 = vld [vmem:[#allocation11 + $0x80] sm:$0xf]
    %v5217 = vld [vmem:[#allocation11 + $0x84] sm:$0xf]
    %v5218 = vld [vmem:[#allocation11 + $0x88] sm:$0xf]
    %v5219 = vld [vmem:[#allocation11 + $0x8c] sm:$0xf]
    %v5220 = vld [vmem:[#allocation11 + $0x90] sm:$0xf]
    %v5221 = vld [vmem:[#allocation11 + $0x94] sm:$0xf]
    %v5222 = vld [vmem:[#allocation11 + $0x98] sm:$0xf]
    %v5223 = vld [vmem:[#allocation11 + $0x9c] sm:$0xf]
    %v5224 = vld [vmem:[#allocation11 + $0xa0] sm:$0xf]
    %v5225 = vld [vmem:[#allocation11 + $0xa4] sm:$0xf]
    %v5226 = vld [vmem:[#allocation11 + $0xa8] sm:$0xf]
    %v5227 = vld [vmem:[#allocation11 + $0xac] sm:$0xf]
    %v5228 = vld [vmem:[#allocation11 + $0xb0] sm:$0xf]
    %v5229 = vld [vmem:[#allocation11 + $0xb4] sm:$0xf]
    %v5230 = vld [vmem:[#allocation11 + $0xb8] sm:$0xf]
    %v5231 = vld [vmem:[#allocation11 + $0xbc] sm:$0xf]
    %v5232 = vld [vmem:[#allocation11 + $0xc0] sm:$0xf]
    %v5233 = vld [vmem:[#allocation11 + $0xc4] sm:$0xf]
    %v5234 = vld [vmem:[#allocation11 + $0xc8] sm:$0xf]
    %v5235 = vld [vmem:[#allocation11 + $0xcc] sm:$0xf]
    %v5236 = vld [vmem:[#allocation11 + $0xd0] sm:$0xf]
    %v5237 = vld [vmem:[#allocation11 + $0xd4] sm:$0xf]
    %v5238 = vld [vmem:[#allocation11 + $0xd8] sm:$0xf]
    %v5239 = vld [vmem:[#allocation11 + $0xdc] sm:$0xf]
    %v5240 = vld [vmem:[#allocation11 + $0xe0] sm:$0xf]
    %v5241 = vld [vmem:[#allocation11 + $0xe4] sm:$0xf]
    %v5242 = vld [vmem:[#allocation11 + $0xe8] sm:$0xf]
    %v5243 = vld [vmem:[#allocation11 + $0xec] sm:$0xf]
    %v5244 = vld [vmem:[#allocation11 + $0xf0] sm:$0xf]
    %v5245 = vld [vmem:[#allocation11 + $0xf4] sm:$0xf]
    %v5246 = vld [vmem:[#allocation11 + $0xf8] sm:$0xf]
    %v5247 = vld [vmem:[#allocation11 + $0xfc] sm:$0xf]
    %v5248 = vld [vmem:[#allocation13] sm:$0x1]
    %v5250 = vlaneseq
    %v5251 = vshrl.u32 %v5250, 7
    %v5252 = vsub.s32 0, %v5251
    %v5253 = vrot.slane %v5248, %v5252
    %v5319 = vunpack.c.l.b16 %v5184
    %v5320 = vunpack.c.l.b16 %v5185
    %v5321 = vunpack.c.l.b16 %v5186
    %v5322 = vunpack.c.l.b16 %v5187
    %v5323 = vunpack.c.l.b16 %v5188
    %v5324 = vunpack.c.l.b16 %v5189
    %v5325 = vunpack.c.l.b16 %v5190
    %v5326 = vunpack.c.l.b16 %v5191
    %v5327 = vunpack.c.l.b16 %v5192
    %v5328 = vunpack.c.l.b16 %v5193
    %v5329 = vunpack.c.l.b16 %v5194
    %v5330 = vunpack.c.l.b16 %v5195
    %v5331 = vunpack.c.l.b16 %v5196
    %v5332 = vunpack.c.l.b16 %v5197
    %v5333 = vunpack.c.l.b16 %v5198
    %v5334 = vunpack.c.l.b16 %v5199
    %v5335 = vunpack.c.l.b16 %v5200
    %v5336 = vunpack.c.l.b16 %v5201
    %v5337 = vunpack.c.l.b16 %v5202
    %v5338 = vunpack.c.l.b16 %v5203
    %v5339 = vunpack.c.l.b16 %v5204
    %v5340 = vunpack.c.l.b16 %v5205
    %v5341 = vunpack.c.l.b16 %v5206
    %v5342 = vunpack.c.l.b16 %v5207
    %v5343 = vunpack.c.l.b16 %v5208
    %v5344 = vunpack.c.l.b16 %v5209
    %v5345 = vunpack.c.l.b16 %v5210
    %v5346 = vunpack.c.l.b16 %v5211
    %v5347 = vunpack.c.l.b16 %v5212
    %v5348 = vunpack.c.l.b16 %v5213
    %v5349 = vunpack.c.l.b16 %v5214
    %v5350 = vunpack.c.l.b16 %v5215
    %v5351 = vunpack.c.l.b16 %v5216
    %v5352 = vunpack.c.l.b16 %v5217
    %v5353 = vunpack.c.l.b16 %v5218
    %v5354 = vunpack.c.l.b16 %v5219
    %v5355 = vunpack.c.l.b16 %v5220
    %v5356 = vunpack.c.l.b16 %v5221
    %v5357 = vunpack.c.l.b16 %v5222
    %v5358 = vunpack.c.l.b16 %v5223
    %v5359 = vunpack.c.l.b16 %v5224
    %v5360 = vunpack.c.l.b16 %v5225
    %v5361 = vunpack.c.l.b16 %v5226
    %v5362 = vunpack.c.l.b16 %v5227
    %v5363 = vunpack.c.l.b16 %v5228
    %v5364 = vunpack.c.l.b16 %v5229
    %v5365 = vunpack.c.l.b16 %v5230
    %v5366 = vunpack.c.l.b16 %v5231
    %v5367 = vunpack.c.l.b16 %v5232
    %v5368 = vunpack.c.l.b16 %v5233
    %v5369 = vunpack.c.l.b16 %v5234
    %v5370 = vunpack.c.l.b16 %v5235
    %v5371 = vunpack.c.l.b16 %v5236
    %v5372 = vunpack.c.l.b16 %v5237
    %v5373 = vunpack.c.l.b16 %v5238
    %v5374 = vunpack.c.l.b16 %v5239
    %v5375 = vunpack.c.l.b16 %v5240
    %v5376 = vunpack.c.l.b16 %v5241
    %v5377 = vunpack.c.l.b16 %v5242
    %v5378 = vunpack.c.l.b16 %v5243
    %v5379 = vunpack.c.l.b16 %v5244
    %v5380 = vunpack.c.l.b16 %v5245
    %v5381 = vunpack.c.l.b16 %v5246
    %v5382 = vunpack.c.l.b16 %v5247
    %v5383 = vpack.c.b16 %v5320, %v5319
    %v5384 = vpack.c.b16 %v5322, %v5321
    %v5385 = vpack.c.b16 %v5324, %v5323
    %v5386 = vpack.c.b16 %v5326, %v5325
    %v5387 = vpack.c.b16 %v5328, %v5327
    %v5388 = vpack.c.b16 %v5330, %v5329
    %v5389 = vpack.c.b16 %v5332, %v5331
    %v5390 = vpack.c.b16 %v5334, %v5333
    %v5391 = vpack.c.b16 %v5336, %v5335
    %v5392 = vpack.c.b16 %v5338, %v5337
    %v5393 = vpack.c.b16 %v5340, %v5339
    %v5394 = vpack.c.b16 %v5342, %v5341
    %v5395 = vpack.c.b16 %v5344, %v5343
    %v5396 = vpack.c.b16 %v5346, %v5345
    %v5397 = vpack.c.b16 %v5348, %v5347
    %v5398 = vpack.c.b16 %v5350, %v5349
    %v5399 = vpack.c.b16 %v5352, %v5351
    %v5400 = vpack.c.b16 %v5354, %v5353
    %v5401 = vpack.c.b16 %v5356, %v5355
    %v5402 = vpack.c.b16 %v5358, %v5357
    %v5403 = vpack.c.b16 %v5360, %v5359
    %v5404 = vpack.c.b16 %v5362, %v5361
    %v5405 = vpack.c.b16 %v5364, %v5363
    %v5406 = vpack.c.b16 %v5366, %v5365
    %v5407 = vpack.c.b16 %v5368, %v5367
    %v5408 = vpack.c.b16 %v5370, %v5369
    %v5409 = vpack.c.b16 %v5372, %v5371
    %v5410 = vpack.c.b16 %v5374, %v5373
    %v5411 = vpack.c.b16 %v5376, %v5375
    %v5412 = vpack.c.b16 %v5378, %v5377
    %v5413 = vpack.c.b16 %v5380, %v5379
    %v5414 = vpack.c.b16 %v5382, %v5381
    %5447 = vmatprep.subr.bf16.mxu0 0
    %5448 = vmatpush1.bf16.msra.mxu0 %v5383
    %5449 = vmatprep.subr.bf16.mxu0 0
    %5450 = vmatpush1.bf16.msra.mxu0 %v5384
    %5451 = vmatprep.subr.bf16.mxu0 0
    %5452 = vmatpush1.bf16.msra.mxu0 %v5385
    %5453 = vmatprep.subr.bf16.mxu0 0
    %5454 = vmatpush1.bf16.msra.mxu0 %v5386
    %5455 = vmatprep.subr.bf16.mxu0 0
    %5456 = vmatpush1.bf16.msra.mxu0 %v5387
    %5457 = vmatprep.subr.bf16.mxu0 0
    %5458 = vmatpush1.bf16.msra.mxu0 %v5388
    %5459 = vmatprep.subr.bf16.mxu0 0
    %5460 = vmatpush1.bf16.msra.mxu0 %v5389
    %5461 = vmatprep.subr.bf16.mxu0 0
    %5462 = vmatpush1.bf16.msra.mxu0 %v5390
    %5463 = vmatprep.subr.bf16.mxu0 0
    %5464 = vmatpush1.bf16.msra.mxu0 %v5391
    %5465 = vmatprep.subr.bf16.mxu0 0
    %5466 = vmatpush1.bf16.msra.mxu0 %v5392
    %5467 = vmatprep.subr.bf16.mxu0 0
    %5468 = vmatpush1.bf16.msra.mxu0 %v5393
    %5469 = vmatprep.subr.bf16.mxu0 0
    %5470 = vmatpush1.bf16.msra.mxu0 %v5394
    %5471 = vmatprep.subr.bf16.mxu0 0
    %5472 = vmatpush1.bf16.msra.mxu0 %v5395
    %5473 = vmatprep.subr.bf16.mxu0 0
    %5474 = vmatpush1.bf16.msra.mxu0 %v5396
    %5475 = vmatprep.subr.bf16.mxu0 0
    %5476 = vmatpush1.bf16.msra.mxu0 %v5397
    %5477 = vmatprep.subr.bf16.mxu0 0
    %5478 = vmatpush1.bf16.msra.mxu0 %v5398
    %5479 = vmatprep.mubr.bf16.mxu0 %v5181
    %5480 = vmatmul.mubr.bf16.gmra.mrb[0].mxu0 %v5180
    %v5481 = vpop.f32.mrb[0].mxu0
    %v5482 = vadd.f32 %v5253, %v5481
    %v5483 = vpop.f32.mrb[0].mxu0
    %v5484 = vpop.f32.mrb[0].mxu0
    %v5485 = vadd.f32 %v5253, %v5484
    %v5486 = vpop.f32.mrb[0].mxu0
    %5487 = vdwg.mxu0
    %5488 = vmatprep.subr.bf16.mxu0 0
    %5489 = vmatpush1.bf16.msra.mxu0 %v5399
    %5490 = vmatprep.subr.bf16.mxu0 0
    %5491 = vmatpush1.bf16.msra.mxu0 %v5400
    %5492 = vmatprep.subr.bf16.mxu0 0
    %5493 = vmatpush1.bf16.msra.mxu0 %v5401
    %5494 = vmatprep.subr.bf16.mxu0 0
    %5495 = vmatpush1.bf16.msra.mxu0 %v5402
    %5496 = vmatprep.subr.bf16.mxu0 0
    %5497 = vmatpush1.bf16.msra.mxu0 %v5403
    %5498 = vmatprep.subr.bf16.mxu0 0
    %5499 = vmatpush1.bf16.msra.mxu0 %v5404
    %5500 = vmatprep.subr.bf16.mxu0 0
    %5501 = vmatpush1.bf16.msra.mxu0 %v5405
    %5502 = vmatprep.subr.bf16.mxu0 0
    %5503 = vmatpush1.bf16.msra.mxu0 %v5406
    %5504 = vmatprep.subr.bf16.mxu0 0
    %5505 = vmatpush1.bf16.msra.mxu0 %v5407
    %5506 = vmatprep.subr.bf16.mxu0 0
    %5507 = vmatpush1.bf16.msra.mxu0 %v5408
    %5508 = vmatprep.subr.bf16.mxu0 0
    %5509 = vmatpush1.bf16.msra.mxu0 %v5409
    %5510 = vmatprep.subr.bf16.mxu0 0
    %5511 = vmatpush1.bf16.msra.mxu0 %v5410
    %5512 = vmatprep.subr.bf16.mxu0 0
    %5513 = vmatpush1.bf16.msra.mxu0 %v5411
    %5514 = vmatprep.subr.bf16.mxu0 0
    %5515 = vmatpush1.bf16.msra.mxu0 %v5412
    %5516 = vmatprep.subr.bf16.mxu0 0
    %5517 = vmatpush1.bf16.msra.mxu0 %v5413
    %5518 = vmatprep.subr.bf16.mxu0 0
    %5519 = vmatpush1.bf16.msra.mxu0 %v5414
    %5520 = vmatprep.mubr.bf16.mxu0 %v5183
    %5521 = vmatmul.mubr.bf16.gmra.mrb[0].mxu0 %v5182
    %v5522 = vpop.f32.mrb[0].mxu0
    %v5523 = vadd.f32 %v5482, %v5522
    %v5524 = vpop.f32.mrb[0].mxu0
    %v5525 = vpop.f32.mrb[0].mxu0
    %v5526 = vadd.f32 %v5485, %v5525
    %v5527 = vpop.f32.mrb[0].mxu0
    %5528 = vdwg.mxu0
    %5529 = vst [vmem:[#allocation14] sm:$0xff] %v5523
    %5530 = vst [vmem:[#allocation14 + $0x8] sm:$0xff] %v5526
    // Predicated region
    $region58: #{tpu_custom_call.1} parent=1 // pred_check
      _
    $region59: #{tpu_custom_call.1} parent=1 // pred_check_branch
      %5532 = sbr.rel (0) target = $region61
    $region60: #{tpu_custom_call.1} parent=1 // pred_region
      %s5534 = ssub.s32 256, 256
      %5535 = vsyncadd [#allocation4], %s5534
      %s5536 = sshll.u32 [#allocation14], 4
      %s5537 = int_to_ptr.vmem [resolvable:$true] %s5536
      %5542 = dma.vmem_to_hbm [thread:$0]  %s5537, 256, %s7, [#allocation4], 128, 128, 8
    $region61: #{tpu_custom_call.1} parent=1 // pred_fallthru
      _
    // Predicated region
    $region62: #{tpu_custom_call.1} parent=1 // pred_check
      _
    $region63: #{tpu_custom_call.1} parent=1 // pred_check_branch
      %5544 = sbr.rel (0) target = $region65
    $region64: #{tpu_custom_call.1} parent=1 // pred_region
      %5545 = dma.done [#allocation4], 256
    $region65: #{tpu_custom_call.1} parent=1 // pred_fallthru
      _
    %5546 = vsyncpa [#allocation3], 1
    %5547 = vsyncpa [#allocation6], 1
    %5548 = vsyncpa [#allocation9], 1
    %5549 = vsyncpa [#allocation12], 1
    %5550 = vsyncpa [#allocation4], 1

</llo_original>
